<compile_context>
chip_gen: v5e
topology: v5e:2x2
jax: 0.10.0
libtpu: 0.0.40
codegen_flags: <defaults>
</compile_context>

<pallas_src>
import functools

import jax
import jax.numpy as jnp
from jax.experimental import pallas as pl
from jax.experimental.pallas import tpu as pltpu

OBS = 544          # obs_size / conv length L
N_ACTIONS = 181
HIDDEN = 544
C = 8              # conv channels
CBLK = 2           # channels of wfc1 streamed per grid step (C % CBLK == 0)
EPS = 1e-5         # BatchNorm1d eps


def mlp_kernel(x_ref, w1_ref, convw_ref, bnp_ref,
               wfc1_ref, bfc1_ref, wfc2_ref, bfc2_ref,
               o_ref, act_ref, acc_ref, *, batch, length):
    L = length
    BL = batch * L
    step = pl.program_id(0)

    # ---- step 0: full conv/BN/ReLU stack; stash per-channel (B, L) rows ----
    @pl.when(step == 0)
    def _():
        # Hoisted shift masks (computed once, reused by all 4 conv layers).
        j = jax.lax.broadcasted_iota(jnp.int32, (1, BL), 1)
        first_col = (j % L) == 0          # l == 0     in each batch segment
        last_col = (j % L) == (L - 1)     # l == L - 1 in each batch segment

        def shifts(v):
            xm1 = jnp.where(first_col, 0.0, pltpu.roll(v, 1, 1))       # x[l-1]
            xp1 = jnp.where(last_col, 0.0, pltpu.roll(v, BL - 1, 1))   # x[l+1]
            return xm1, xp1

        inv_n = 1.0 / float(BL)

        def bn_relu(y, layer):
            # Conv bias + BatchNorm1d training-mode batch stats + ReLU.
            col = 3 * layer
            y = y + bnp_ref[:, col:col + 1]                            # bias
            mean = jnp.sum(y, axis=1, keepdims=True) * inv_n
            ex2 = jnp.sum(y * y, axis=1, keepdims=True) * inv_n
            var = ex2 - mean * mean                                    # one pass
            y = (y - mean) * jax.lax.rsqrt(var + EPS)
            y = y * bnp_ref[:, col + 1:col + 2] + bnp_ref[:, col + 2:col + 3]
            return jnp.maximum(y, 0.0)

        # conv1: Ci == 1 -> pure broadcast multiply on the VPU.
        x = x_ref[...]                                                 # (1, BL)
        xm1, xp1 = shifts(x)
        y = w1_ref[0] * xm1 + w1_ref[1] * x + w1_ref[2] * xp1          # (C, BL)
        a = bn_relu(y, 0)

        # conv2-4: three taps fused into one (C, 3C) @ (3C, BL) MXU matmul.
        for i in range(3):
            xm1, xp1 = shifts(a)
            a_st = jnp.concatenate([xm1, a, xp1], axis=0)              # (3C, BL)
            y = jnp.dot(convw_ref[i], a_st, preferred_element_type=jnp.float32)
            a = bn_relu(y, i + 1)

        # Stash channel-major (B, L) rows (bf16) for the streamed FC1 matmuls.
        for ch in range(C):
            rows = jnp.concatenate(
                [a[ch:ch + 1, b * L:(b + 1) * L] for b in range(batch)], axis=0)
            act_ref[ch] = rows.astype(jnp.bfloat16)

        acc_ref[...] = jnp.zeros_like(acc_ref)

    # ---- every step: FC1 partial sums for this step's streamed channels ----
    part = jnp.zeros((batch, HIDDEN), jnp.float32)
    for cb in range(CBLK):
        ch = step * CBLK + cb
        part = part + jnp.dot(act_ref[ch], wfc1_ref[cb],
                              preferred_element_type=jnp.float32)
    acc_ref[...] += part

    # ---- last step: fc1 bias + ReLU, then the fc2 head ----
    @pl.when(step == pl.num_programs(0) - 1)
    def _():
        h = jnp.maximum(acc_ref[...] + bfc1_ref[...], 0.0)
        o_ref[...] = (jnp.dot(h.astype(jnp.bfloat16), wfc2_ref[...],
                              preferred_element_type=jnp.float32)
                      + bfc2_ref[...])


@jax.jit
def mlp_forward(x, params):
    """x: (B, 544) -> logits (B, 181).  Mirrors MLP.forward (no softmax)."""
    B = x.shape[0]
    x2d = x.astype(jnp.float32).reshape(1, B * OBS)                # (Ci=1, B*L)

    # conv1 weight as (3, C, 1): tap-major, broadcast-multiplied in-kernel.
    w1 = jnp.transpose(params['w1'], (2, 0, 1)).astype(jnp.float32)
    # conv2-4 weights stacked along taps: (3, C, 3*C); [l][co, k*C + ci].
    convw = jnp.stack(
        [jnp.transpose(params[f'w{i}'], (0, 2, 1)).reshape(C, 3 * C)
         for i in (2, 3, 4)], axis=0).astype(jnp.float32)
    # Per-layer (bias, gamma, beta) packed into one (C, 12) slab.
    bnp = jnp.concatenate(
        [jnp.stack([params[f'b{i}'], params[f'g{i}'], params[f'be{i}']], axis=1)
         for i in (1, 2, 3, 4)], axis=1).astype(jnp.float32)
    # fc1 weight laid out channel-major (C, L, HIDDEN), bf16 (halves the DMA).
    wfc1 = (params['wfc1'].reshape(HIDDEN, C, OBS)
            .transpose(1, 2, 0).astype(jnp.bfloat16))
    bfc1 = params['bfc1'].reshape(1, HIDDEN).astype(jnp.float32)
    wfc2 = params['wfc2'].T.astype(jnp.bfloat16)                   # (H, A)
    bfc2 = params['bfc2'].reshape(1, N_ACTIONS).astype(jnp.float32)

    kernel = functools.partial(mlp_kernel, batch=B, length=OBS)
    n_steps = C // CBLK
    return pl.pallas_call(
        kernel,
        out_shape=jax.ShapeDtypeStruct((B, N_ACTIONS), jnp.float32),
        grid=(n_steps,),
        in_specs=[
            pl.BlockSpec((1, B * OBS), lambda s: (0, 0)),              # x
            pl.BlockSpec((3, C, 1), lambda s: (0, 0, 0)),              # conv1 w
            pl.BlockSpec((3, C, 3 * C), lambda s: (0, 0, 0)),          # conv2-4 w
            pl.BlockSpec((C, 12), lambda s: (0, 0)),                   # bias/BN
            pl.BlockSpec((CBLK, OBS, HIDDEN), lambda s: (s, 0, 0)),    # wfc1 (streamed)
            pl.BlockSpec((1, HIDDEN), lambda s: (0, 0)),               # bfc1
            pl.BlockSpec((HIDDEN, N_ACTIONS), lambda s: (0, 0)),       # wfc2
            pl.BlockSpec((1, N_ACTIONS), lambda s: (0, 0)),            # bfc2
        ],
        out_specs=pl.BlockSpec((B, N_ACTIONS), lambda s: (0, 0)),
        scratch_shapes=[
            pltpu.VMEM((C, B, OBS), jnp.bfloat16),    # conv output rows per ch
            pltpu.VMEM((B, HIDDEN), jnp.float32),     # FC1 accumulator
        ],
        compiler_params=pltpu.CompilerParams(
            dimension_semantics=("arbitrary",),
            vmem_limit_bytes=32 * 1024 * 1024),
    )(x2d, w1, convw, bnp, wfc1, bfc1, wfc2, bfc2)


def make_params(key):
    ks = iter(jax.random.split(key, 24))

    def uni(shape, fan_in):
        b = 1.0 / float(fan_in) ** 0.5
        return jax.random.uniform(next(ks), shape, jnp.float32, -b, b)

    def nrm(shape, scale):
        return scale * jax.random.normal(next(ks), shape, jnp.float32)

    p = {}
    p['w1'] = uni((C, 1, 3), 1 * 3)
    p['b1'] = uni((C,), 1 * 3)
    for i in (2, 3, 4):
        p[f'w{i}'] = uni((C, C, 3), C * 3)
        p[f'b{i}'] = uni((C,), C * 3)
    for i in (1, 2, 3, 4):
        p[f'g{i}'] = 1.0 + nrm((C,), 0.1)     # BN gamma
        p[f'be{i}'] = nrm((C,), 0.1)          # BN beta
    p['wfc1'] = uni((HIDDEN, C * OBS), C * OBS)
    p['bfc1'] = uni((HIDDEN,), C * OBS)
    p['wfc2'] = uni((N_ACTIONS, HIDDEN), HIDDEN)
    p['bfc2'] = uni((N_ACTIONS,), HIDDEN)
    return p


def reference_forward(x, p):
    """Pure-JAX reference of MLP.forward (NCL conv, train-mode BN)."""
    a = x.astype(jnp.float32)[:, None, :]                 # (B, 1, L)
    for i in (1, 2, 3, 4):
        w, b = p[f'w{i}'], p[f'b{i}']
        g, be = p[f'g{i}'], p[f'be{i}']
        L = a.shape[2]
        xp = jnp.pad(a, ((0, 0), (0, 0), (1, 1)))
        y = sum(jnp.einsum('bcl,oc->bol', xp[:, :, k:k + L], w[:, :, k])
                for k in range(3))
        y = y + b[None, :, None]
        mean = jnp.mean(y, axis=(0, 2), keepdims=True)
        var = jnp.mean((y - mean) ** 2, axis=(0, 2), keepdims=True)
        y = (y - mean) / jnp.sqrt(var + EPS) * g[None, :, None] + be[None, :, None]
        a = jnp.maximum(y, 0.0)
    flat = a.reshape(a.shape[0], -1)                      # (B, C*L) channel-major
    h = jnp.maximum(flat @ p['wfc1'].T + p['bfc1'], 0.0)
    return h @ p['wfc2'].T + p['bfc2']


if __name__ == "__main__":
    key = jax.random.PRNGKey(0)
    kx, kp = jax.random.split(key)
    B = 2
    x = jax.random.normal(kx, (B, OBS), jnp.float32)
    params = make_params(kp)

    out = mlp_forward(x, params)
    out = jax.block_until_ready(out)
    assert out.shape == (B, N_ACTIONS) and out.dtype == jnp.float32
    assert bool(jnp.all(jnp.isfinite(out)))

    ref = reference_forward(x, params)
    err = float(jnp.max(jnp.abs(out - ref)))
    scale = float(jnp.max(jnp.abs(ref)))
    assert err <= 0.05 * max(1.0, scale), f"max abs err {err} (ref scale {scale})"

    print("KERNEL_OK")
</pallas_src>

<mosaic_0001>
module attributes {stable_mosaic.version = 11 : i64} {
  func.func @mlp_kernel(%arg0: i32, %arg1: memref<1x1088xf32, #tpu.memory_space<vmem>>, %arg2: memref<3x8x1xf32, #tpu.memory_space<vmem>>, %arg3: memref<3x8x24xf32, #tpu.memory_space<vmem>>, %arg4: memref<8x12xf32, #tpu.memory_space<vmem>>, %arg5: memref<2x544x544xbf16, #tpu.memory_space<vmem>>, %arg6: memref<1x544xf32, #tpu.memory_space<vmem>>, %arg7: memref<544x181xbf16, #tpu.memory_space<vmem>>, %arg8: memref<1x181xf32, #tpu.memory_space<vmem>>, %arg9: memref<2x181xf32, #tpu.memory_space<vmem>>, %arg10: memref<8x2x544xbf16, #tpu.memory_space<vmem>>, %arg11: memref<2x544xf32, #tpu.memory_space<vmem>>) attributes {dimension_semantics = [#tpu.dimension_semantics<arbitrary>], iteration_bounds = array<i64: 4>, scalar_prefetch = 0 : i64, scratch_operands = 2 : i64, tpu.core_type = #tpu.core_type<tc>, window_params = [{pipeline_mode = #tpu.pipeline_mode<synchronous>, transform_indices = @transform_0, window_bounds = array<i64: 1, 1088>}, {pipeline_mode = #tpu.pipeline_mode<synchronous>, transform_indices = @transform_1, window_bounds = array<i64: 3, 8, 1>}, {pipeline_mode = #tpu.pipeline_mode<synchronous>, transform_indices = @transform_2, window_bounds = array<i64: 3, 8, 24>}, {pipeline_mode = #tpu.pipeline_mode<synchronous>, transform_indices = @transform_3, window_bounds = array<i64: 8, 12>}, {transform_indices = @transform_4, window_bounds = array<i64: 2, 544, 544>}, {pipeline_mode = #tpu.pipeline_mode<synchronous>, transform_indices = @transform_5, window_bounds = array<i64: 1, 544>}, {pipeline_mode = #tpu.pipeline_mode<synchronous>, transform_indices = @transform_6, window_bounds = array<i64: 544, 181>}, {pipeline_mode = #tpu.pipeline_mode<synchronous>, transform_indices = @transform_7, window_bounds = array<i64: 1, 181>}, {pipeline_mode = #tpu.pipeline_mode<synchronous>, transform_indices = @transform_8, window_bounds = array<i64: 2, 181>}]} {
    %c0_i32 = arith.constant 0 : i32
    %0 = arith.cmpi eq, %arg0, %c0_i32 : i32
    %1 = arith.extui %0 : i1 to i32
    %c0_i32_0 = arith.constant 0 : i32
    %2 = arith.cmpi ne, %1, %c0_i32_0 : i32
    scf.if %2 {
      %28 = tpu.iota {dimensions = array<i32: 1>} : vector<1x1088xi32>
      %c544_i32 = arith.constant 544 : i32
      %c0_i32_18 = arith.constant 0 : i32
      %29 = arith.cmpi eq, %c544_i32, %c0_i32_18 : i32
      %c1_i32_19 = arith.constant 1 : i32
      %30 = arith.select %29, %c1_i32_19, %c544_i32 : i32
      %31 = vector.broadcast %30 : i32 to vector<1x1088xi32>
      %32 = arith.remsi %28, %31 : vector<1x1088xi32>
      %c0_i32_20 = arith.constant 0 : i32
      %33 = vector.broadcast %c0_i32_20 : i32 to vector<1x1088xi32>
      %34 = arith.cmpi ne, %32, %33 : vector<1x1088xi32>
      %c0_i32_21 = arith.constant 0 : i32
      %35 = vector.broadcast %c0_i32_21 : i32 to vector<1x1088xi32>
      %36 = arith.cmpi slt, %32, %35 : vector<1x1088xi32>
      %c0_i32_22 = arith.constant 0 : i32
      %37 = arith.cmpi slt, %30, %c0_i32_22 : i32
      %38 = vector.broadcast %37 : i1 to vector<1x1088xi1>
      %39 = vector.broadcast %38 : vector<1x1088xi1> to vector<1x1088xi1>
      %40 = arith.xori %36, %39 : vector<1x1088xi1>
      %41 = arith.andi %40, %34 : vector<1x1088xi1>
      %42 = vector.broadcast %30 : i32 to vector<1x1088xi32>
      %43 = arith.addi %32, %42 : vector<1x1088xi32>
      %44 = arith.select %41, %43, %32 : vector<1x1088xi1>, vector<1x1088xi32>
      %c0_i32_23 = arith.constant 0 : i32
      %45 = vector.broadcast %c0_i32_23 : i32 to vector<1x1088xi32>
      %46 = arith.cmpi eq, %44, %45 : vector<1x1088xi32>
      %c544_i32_24 = arith.constant 544 : i32
      %c0_i32_25 = arith.constant 0 : i32
      %47 = arith.cmpi eq, %c544_i32_24, %c0_i32_25 : i32
      %c1_i32_26 = arith.constant 1 : i32
      %48 = arith.select %47, %c1_i32_26, %c544_i32_24 : i32
      %49 = vector.broadcast %48 : i32 to vector<1x1088xi32>
      %50 = arith.remsi %28, %49 : vector<1x1088xi32>
      %c0_i32_27 = arith.constant 0 : i32
      %51 = vector.broadcast %c0_i32_27 : i32 to vector<1x1088xi32>
      %52 = arith.cmpi ne, %50, %51 : vector<1x1088xi32>
      %c0_i32_28 = arith.constant 0 : i32
      %53 = vector.broadcast %c0_i32_28 : i32 to vector<1x1088xi32>
      %54 = arith.cmpi slt, %50, %53 : vector<1x1088xi32>
      %c0_i32_29 = arith.constant 0 : i32
      %55 = arith.cmpi slt, %48, %c0_i32_29 : i32
      %56 = vector.broadcast %55 : i1 to vector<1x1088xi1>
      %57 = vector.broadcast %56 : vector<1x1088xi1> to vector<1x1088xi1>
      %58 = arith.xori %54, %57 : vector<1x1088xi1>
      %59 = arith.andi %58, %52 : vector<1x1088xi1>
      %60 = vector.broadcast %48 : i32 to vector<1x1088xi32>
      %61 = arith.addi %50, %60 : vector<1x1088xi32>
      %62 = arith.select %59, %61, %50 : vector<1x1088xi1>, vector<1x1088xi32>
      %c543_i32 = arith.constant 543 : i32
      %63 = vector.broadcast %c543_i32 : i32 to vector<1x1088xi32>
      %64 = arith.cmpi eq, %62, %63 : vector<1x1088xi32>
      %c0_30 = arith.constant 0 : index
      %c0_31 = arith.constant 0 : index
      %65 = vector.load %arg1[%c0_30, %c0_31] : memref<1x1088xf32, #tpu.memory_space<vmem>>, vector<1x1088xf32>
      %c1_i32_32 = arith.constant 1 : i32
      %66 = tpu.dynamic_rotate %65 by %c1_i32_32 dim 1 : vector<1x1088xf32>, i32 -> vector<1x1088xf32>
      %cst_33 = arith.constant 0.000000e+00 : f32
      %67 = vector.broadcast %cst_33 : f32 to vector<1x1088xf32>
      %68 = arith.select %46, %67, %66 : vector<1x1088xi1>, vector<1x1088xf32>
      %c1087_i32 = arith.constant 1087 : i32
      %69 = tpu.dynamic_rotate %65 by %c1087_i32 dim 1 : vector<1x1088xf32>, i32 -> vector<1x1088xf32>
      %cst_34 = arith.constant 0.000000e+00 : f32
      %70 = vector.broadcast %cst_34 : f32 to vector<1x1088xf32>
      %71 = arith.select %64, %70, %69 : vector<1x1088xi1>, vector<1x1088xf32>
      %c0_35 = arith.constant 0 : index
      %c0_36 = arith.constant 0 : index
      %c0_37 = arith.constant 0 : index
      %72 = vector.load %arg2[%c0_35, %c0_36, %c0_37] : memref<3x8x1xf32, #tpu.memory_space<vmem>>, vector<1x8x1xf32>
      %73 = vector.shape_cast %72 : vector<1x8x1xf32> to vector<8x1xf32>
      %74 = vector.broadcast %73 : vector<8x1xf32> to vector<8x1088xf32>
      %75 = vector.broadcast %68 : vector<1x1088xf32> to vector<8x1088xf32>
      %76 = arith.mulf %74, %75 : vector<8x1088xf32>
      %c1_38 = arith.constant 1 : index
      %c0_39 = arith.constant 0 : index
      %c0_40 = arith.constant 0 : index
      %77 = vector.load %arg2[%c1_38, %c0_39, %c0_40] : memref<3x8x1xf32, #tpu.memory_space<vmem>>, vector<1x8x1xf32>
      %78 = vector.shape_cast %77 : vector<1x8x1xf32> to vector<8x1xf32>
      %79 = vector.broadcast %78 : vector<8x1xf32> to vector<8x1088xf32>
      %80 = vector.broadcast %65 : vector<1x1088xf32> to vector<8x1088xf32>
      %81 = arith.mulf %79, %80 : vector<8x1088xf32>
      %82 = arith.addf %76, %81 : vector<8x1088xf32>
      %c2 = arith.constant 2 : index
      %c0_41 = arith.constant 0 : index
      %c0_42 = arith.constant 0 : index
      %83 = vector.load %arg2[%c2, %c0_41, %c0_42] : memref<3x8x1xf32, #tpu.memory_space<vmem>>, vector<1x8x1xf32>
      %84 = vector.shape_cast %83 : vector<1x8x1xf32> to vector<8x1xf32>
      %85 = vector.broadcast %84 : vector<8x1xf32> to vector<8x1088xf32>
      %86 = vector.broadcast %71 : vector<1x1088xf32> to vector<8x1088xf32>
      %87 = arith.mulf %85, %86 : vector<8x1088xf32>
      %88 = arith.addf %82, %87 : vector<8x1088xf32>
      %c0_43 = arith.constant 0 : index
      %c0_44 = arith.constant 0 : index
      %89 = vector.load %arg4[%c0_43, %c0_44] : memref<8x12xf32, #tpu.memory_space<vmem>>, vector<8x1xf32>
      %90 = vector.broadcast %89 : vector<8x1xf32> to vector<8x1088xf32>
      %91 = arith.addf %88, %90 : vector<8x1088xf32>
      %cst_45 = arith.constant dense<0.000000e+00> : vector<8xf32>
      %92 = vector.multi_reduction <add>, %91, %cst_45 [1] : vector<8x1088xf32> to vector<8xf32>
      %93 = vector.shape_cast %92 : vector<8xf32> to vector<8x1xf32>
      %cst_46 = arith.constant 9.1911765E-4 : f32
      %94 = vector.broadcast %cst_46 : f32 to vector<8x1xf32>
      %95 = arith.mulf %93, %94 : vector<8x1xf32>
      %96 = arith.mulf %91, %91 : vector<8x1088xf32>
      %cst_47 = arith.constant dense<0.000000e+00> : vector<8xf32>
      %97 = vector.multi_reduction <add>, %96, %cst_47 [1] : vector<8x1088xf32> to vector<8xf32>
      %98 = vector.shape_cast %97 : vector<8xf32> to vector<8x1xf32>
      %cst_48 = arith.constant 9.1911765E-4 : f32
      %99 = vector.broadcast %cst_48 : f32 to vector<8x1xf32>
      %100 = arith.mulf %98, %99 : vector<8x1xf32>
      %101 = arith.mulf %95, %95 : vector<8x1xf32>
      %102 = arith.subf %100, %101 : vector<8x1xf32>
      %103 = vector.broadcast %95 : vector<8x1xf32> to vector<8x1088xf32>
      %104 = arith.subf %91, %103 : vector<8x1088xf32>
      %cst_49 = arith.constant 9.99999974E-6 : f32
      %105 = vector.broadcast %cst_49 : f32 to vector<8x1xf32>
      %106 = arith.addf %102, %105 : vector<8x1xf32>
      %107 = math.rsqrt %106 : vector<8x1xf32>
      %108 = vector.broadcast %107 : vector<8x1xf32> to vector<8x1088xf32>
      %109 = arith.mulf %104, %108 : vector<8x1088xf32>
      %c0_50 = arith.constant 0 : index
      %c1_51 = arith.constant 1 : index
      %110 = vector.load %arg4[%c0_50, %c1_51] : memref<8x12xf32, #tpu.memory_space<vmem>>, vector<8x1xf32>
      %111 = vector.broadcast %110 : vector<8x1xf32> to vector<8x1088xf32>
      %112 = arith.mulf %109, %111 : vector<8x1088xf32>
      %c0_52 = arith.constant 0 : index
      %c2_53 = arith.constant 2 : index
      %113 = vector.load %arg4[%c0_52, %c2_53] : memref<8x12xf32, #tpu.memory_space<vmem>>, vector<8x1xf32>
      %114 = vector.broadcast %113 : vector<8x1xf32> to vector<8x1088xf32>
      %115 = arith.addf %112, %114 : vector<8x1088xf32>
      %cst_54 = arith.constant 0.000000e+00 : f32
      %116 = vector.broadcast %cst_54 : f32 to vector<8x1088xf32>
      %117 = arith.maximumf %115, %116 : vector<8x1088xf32>
      %c1_i32_55 = arith.constant 1 : i32
      %118 = tpu.dynamic_rotate %117 by %c1_i32_55 dim 1 : vector<8x1088xf32>, i32 -> vector<8x1088xf32>
      %cst_56 = arith.constant 0.000000e+00 : f32
      %119 = vector.shape_cast %46 : vector<1x1088xi1> to vector<1x1088xi1>
      %120 = vector.broadcast %119 : vector<1x1088xi1> to vector<8x1088xi1>
      %121 = vector.broadcast %cst_56 : f32 to vector<8x1088xf32>
      %122 = arith.select %120, %121, %118 : vector<8x1088xi1>, vector<8x1088xf32>
      %c1087_i32_57 = arith.constant 1087 : i32
      %123 = tpu.dynamic_rotate %117 by %c1087_i32_57 dim 1 : vector<8x1088xf32>, i32 -> vector<8x1088xf32>
      %cst_58 = arith.constant 0.000000e+00 : f32
      %124 = vector.shape_cast %64 : vector<1x1088xi1> to vector<1x1088xi1>
      %125 = vector.broadcast %124 : vector<1x1088xi1> to vector<8x1088xi1>
      %126 = vector.broadcast %cst_58 : f32 to vector<8x1088xf32>
      %127 = arith.select %125, %126, %123 : vector<8x1088xi1>, vector<8x1088xf32>
      %128 = tpu.concatenate %122, %117, %127 in 0 : vector<8x1088xf32>, vector<8x1088xf32>, vector<8x1088xf32> -> vector<24x1088xf32>
      %c0_59 = arith.constant 0 : index
      %c0_60 = arith.constant 0 : index
      %c0_61 = arith.constant 0 : index
      %129 = vector.load %arg3[%c0_59, %c0_60, %c0_61] : memref<3x8x24xf32, #tpu.memory_space<vmem>>, vector<1x8x24xf32>
      %130 = vector.shape_cast %129 : vector<1x8x24xf32> to vector<8x24xf32>
      %cst_62 = arith.constant dense<0.000000e+00> : vector<8x1088xf32>
      %131 = tpu.matmul %130, %128, %cst_62 {dimension_numbers = #tpu.dot_dimension_numbers<[1], [0], [0], [1], [0, 0, 1, 1], [], []>} : vector<8x24xf32>, vector<24x1088xf32>, vector<8x1088xf32> -> vector<8x1088xf32>
      %c0_63 = arith.constant 0 : index
      %c3 = arith.constant 3 : index
      %132 = vector.load %arg4[%c0_63, %c3] : memref<8x12xf32, #tpu.memory_space<vmem>>, vector<8x1xf32>
      %133 = vector.broadcast %132 : vector<8x1xf32> to vector<8x1088xf32>
      %134 = arith.addf %131, %133 : vector<8x1088xf32>
      %cst_64 = arith.constant dense<0.000000e+00> : vector<8xf32>
      %135 = vector.multi_reduction <add>, %134, %cst_64 [1] : vector<8x1088xf32> to vector<8xf32>
      %136 = vector.shape_cast %135 : vector<8xf32> to vector<8x1xf32>
      %cst_65 = arith.constant 9.1911765E-4 : f32
      %137 = vector.broadcast %cst_65 : f32 to vector<8x1xf32>
      %138 = arith.mulf %136, %137 : vector<8x1xf32>
      %139 = arith.mulf %134, %134 : vector<8x1088xf32>
      %cst_66 = arith.constant dense<0.000000e+00> : vector<8xf32>
      %140 = vector.multi_reduction <add>, %139, %cst_66 [1] : vector<8x1088xf32> to vector<8xf32>
      %141 = vector.shape_cast %140 : vector<8xf32> to vector<8x1xf32>
      %cst_67 = arith.constant 9.1911765E-4 : f32
      %142 = vector.broadcast %cst_67 : f32 to vector<8x1xf32>
      %143 = arith.mulf %141, %142 : vector<8x1xf32>
      %144 = arith.mulf %138, %138 : vector<8x1xf32>
      %145 = arith.subf %143, %144 : vector<8x1xf32>
      %146 = vector.broadcast %138 : vector<8x1xf32> to vector<8x1088xf32>
      %147 = arith.subf %134, %146 : vector<8x1088xf32>
      %cst_68 = arith.constant 9.99999974E-6 : f32
      %148 = vector.broadcast %cst_68 : f32 to vector<8x1xf32>
      %149 = arith.addf %145, %148 : vector<8x1xf32>
      %150 = math.rsqrt %149 : vector<8x1xf32>
      %151 = vector.broadcast %150 : vector<8x1xf32> to vector<8x1088xf32>
      %152 = arith.mulf %147, %151 : vector<8x1088xf32>
      %c0_69 = arith.constant 0 : index
      %c4 = arith.constant 4 : index
      %153 = vector.load %arg4[%c0_69, %c4] : memref<8x12xf32, #tpu.memory_space<vmem>>, vector<8x1xf32>
      %154 = vector.broadcast %153 : vector<8x1xf32> to vector<8x1088xf32>
      %155 = arith.mulf %152, %154 : vector<8x1088xf32>
      %c0_70 = arith.constant 0 : index
      %c5 = arith.constant 5 : index
      %156 = vector.load %arg4[%c0_70, %c5] : memref<8x12xf32, #tpu.memory_space<vmem>>, vector<8x1xf32>
      %157 = vector.broadcast %156 : vector<8x1xf32> to vector<8x1088xf32>
      %158 = arith.addf %155, %157 : vector<8x1088xf32>
      %cst_71 = arith.constant 0.000000e+00 : f32
      %159 = vector.broadcast %cst_71 : f32 to vector<8x1088xf32>
      %160 = arith.maximumf %158, %159 : vector<8x1088xf32>
      %c1_i32_72 = arith.constant 1 : i32
      %161 = tpu.dynamic_rotate %160 by %c1_i32_72 dim 1 : vector<8x1088xf32>, i32 -> vector<8x1088xf32>
      %cst_73 = arith.constant 0.000000e+00 : f32
      %162 = vector.shape_cast %46 : vector<1x1088xi1> to vector<1x1088xi1>
      %163 = vector.broadcast %162 : vector<1x1088xi1> to vector<8x1088xi1>
      %164 = vector.broadcast %cst_73 : f32 to vector<8x1088xf32>
      %165 = arith.select %163, %164, %161 : vector<8x1088xi1>, vector<8x1088xf32>
      %c1087_i32_74 = arith.constant 1087 : i32
      %166 = tpu.dynamic_rotate %160 by %c1087_i32_74 dim 1 : vector<8x1088xf32>, i32 -> vector<8x1088xf32>
      %cst_75 = arith.constant 0.000000e+00 : f32
      %167 = vector.shape_cast %64 : vector<1x1088xi1> to vector<1x1088xi1>
      %168 = vector.broadcast %167 : vector<1x1088xi1> to vector<8x1088xi1>
      %169 = vector.broadcast %cst_75 : f32 to vector<8x1088xf32>
      %170 = arith.select %168, %169, %166 : vector<8x1088xi1>, vector<8x1088xf32>
      %171 = tpu.concatenate %165, %160, %170 in 0 : vector<8x1088xf32>, vector<8x1088xf32>, vector<8x1088xf32> -> vector<24x1088xf32>
      %c1_76 = arith.constant 1 : index
      %c0_77 = arith.constant 0 : index
      %c0_78 = arith.constant 0 : index
      %172 = vector.load %arg3[%c1_76, %c0_77, %c0_78] : memref<3x8x24xf32, #tpu.memory_space<vmem>>, vector<1x8x24xf32>
      %173 = vector.shape_cast %172 : vector<1x8x24xf32> to vector<8x24xf32>
      %cst_79 = arith.constant dense<0.000000e+00> : vector<8x1088xf32>
      %174 = tpu.matmul %173, %171, %cst_79 {dimension_numbers = #tpu.dot_dimension_numbers<[1], [0], [0], [1], [0, 0, 1, 1], [], []>} : vector<8x24xf32>, vector<24x1088xf32>, vector<8x1088xf32> -> vector<8x1088xf32>
      %c0_80 = arith.constant 0 : index
      %c6 = arith.constant 6 : index
      %175 = vector.load %arg4[%c0_80, %c6] : memref<8x12xf32, #tpu.memory_space<vmem>>, vector<8x1xf32>
      %176 = vector.broadcast %175 : vector<8x1xf32> to vector<8x1088xf32>
      %177 = arith.addf %174, %176 : vector<8x1088xf32>
      %cst_81 = arith.constant dense<0.000000e+00> : vector<8xf32>
      %178 = vector.multi_reduction <add>, %177, %cst_81 [1] : vector<8x1088xf32> to vector<8xf32>
      %179 = vector.shape_cast %178 : vector<8xf32> to vector<8x1xf32>
      %cst_82 = arith.constant 9.1911765E-4 : f32
      %180 = vector.broadcast %cst_82 : f32 to vector<8x1xf32>
      %181 = arith.mulf %179, %180 : vector<8x1xf32>
      %182 = arith.mulf %177, %177 : vector<8x1088xf32>
      %cst_83 = arith.constant dense<0.000000e+00> : vector<8xf32>
      %183 = vector.multi_reduction <add>, %182, %cst_83 [1] : vector<8x1088xf32> to vector<8xf32>
      %184 = vector.shape_cast %183 : vector<8xf32> to vector<8x1xf32>
      %cst_84 = arith.constant 9.1911765E-4 : f32
      %185 = vector.broadcast %cst_84 : f32 to vector<8x1xf32>
      %186 = arith.mulf %184, %185 : vector<8x1xf32>
      %187 = arith.mulf %181, %181 : vector<8x1xf32>
      %188 = arith.subf %186, %187 : vector<8x1xf32>
      %189 = vector.broadcast %181 : vector<8x1xf32> to vector<8x1088xf32>
      %190 = arith.subf %177, %189 : vector<8x1088xf32>
      %cst_85 = arith.constant 9.99999974E-6 : f32
      %191 = vector.broadcast %cst_85 : f32 to vector<8x1xf32>
      %192 = arith.addf %188, %191 : vector<8x1xf32>
      %193 = math.rsqrt %192 : vector<8x1xf32>
      %194 = vector.broadcast %193 : vector<8x1xf32> to vector<8x1088xf32>
      %195 = arith.mulf %190, %194 : vector<8x1088xf32>
      %c0_86 = arith.constant 0 : index
      %c7 = arith.constant 7 : index
      %196 = vector.load %arg4[%c0_86, %c7] : memref<8x12xf32, #tpu.memory_space<vmem>>, vector<8x1xf32>
      %197 = vector.broadcast %196 : vector<8x1xf32> to vector<8x1088xf32>
      %198 = arith.mulf %195, %197 : vector<8x1088xf32>
      %c0_87 = arith.constant 0 : index
      %c8 = arith.constant 8 : index
      %199 = vector.load %arg4[%c0_87, %c8] : memref<8x12xf32, #tpu.memory_space<vmem>>, vector<8x1xf32>
      %200 = vector.broadcast %199 : vector<8x1xf32> to vector<8x1088xf32>
      %201 = arith.addf %198, %200 : vector<8x1088xf32>
      %cst_88 = arith.constant 0.000000e+00 : f32
      %202 = vector.broadcast %cst_88 : f32 to vector<8x1088xf32>
      %203 = arith.maximumf %201, %202 : vector<8x1088xf32>
      %c1_i32_89 = arith.constant 1 : i32
      %204 = tpu.dynamic_rotate %203 by %c1_i32_89 dim 1 : vector<8x1088xf32>, i32 -> vector<8x1088xf32>
      %cst_90 = arith.constant 0.000000e+00 : f32
      %205 = vector.shape_cast %46 : vector<1x1088xi1> to vector<1x1088xi1>
      %206 = vector.broadcast %205 : vector<1x1088xi1> to vector<8x1088xi1>
      %207 = vector.broadcast %cst_90 : f32 to vector<8x1088xf32>
      %208 = arith.select %206, %207, %204 : vector<8x1088xi1>, vector<8x1088xf32>
      %c1087_i32_91 = arith.constant 1087 : i32
      %209 = tpu.dynamic_rotate %203 by %c1087_i32_91 dim 1 : vector<8x1088xf32>, i32 -> vector<8x1088xf32>
      %cst_92 = arith.constant 0.000000e+00 : f32
      %210 = vector.shape_cast %64 : vector<1x1088xi1> to vector<1x1088xi1>
      %211 = vector.broadcast %210 : vector<1x1088xi1> to vector<8x1088xi1>
      %212 = vector.broadcast %cst_92 : f32 to vector<8x1088xf32>
      %213 = arith.select %211, %212, %209 : vector<8x1088xi1>, vector<8x1088xf32>
      %214 = tpu.concatenate %208, %203, %213 in 0 : vector<8x1088xf32>, vector<8x1088xf32>, vector<8x1088xf32> -> vector<24x1088xf32>
      %c2_93 = arith.constant 2 : index
      %c0_94 = arith.constant 0 : index
      %c0_95 = arith.constant 0 : index
      %215 = vector.load %arg3[%c2_93, %c0_94, %c0_95] : memref<3x8x24xf32, #tpu.memory_space<vmem>>, vector<1x8x24xf32>
      %216 = vector.shape_cast %215 : vector<1x8x24xf32> to vector<8x24xf32>
      %cst_96 = arith.constant dense<0.000000e+00> : vector<8x1088xf32>
      %217 = tpu.matmul %216, %214, %cst_96 {dimension_numbers = #tpu.dot_dimension_numbers<[1], [0], [0], [1], [0, 0, 1, 1], [], []>} : vector<8x24xf32>, vector<24x1088xf32>, vector<8x1088xf32> -> vector<8x1088xf32>
      %c0_97 = arith.constant 0 : index
      %c9 = arith.constant 9 : index
      %218 = vector.load %arg4[%c0_97, %c9] : memref<8x12xf32, #tpu.memory_space<vmem>>, vector<8x1xf32>
      %219 = vector.broadcast %218 : vector<8x1xf32> to vector<8x1088xf32>
      %220 = arith.addf %217, %219 : vector<8x1088xf32>
      %cst_98 = arith.constant dense<0.000000e+00> : vector<8xf32>
      %221 = vector.multi_reduction <add>, %220, %cst_98 [1] : vector<8x1088xf32> to vector<8xf32>
      %222 = vector.shape_cast %221 : vector<8xf32> to vector<8x1xf32>
      %cst_99 = arith.constant 9.1911765E-4 : f32
      %223 = vector.broadcast %cst_99 : f32 to vector<8x1xf32>
      %224 = arith.mulf %222, %223 : vector<8x1xf32>
      %225 = arith.mulf %220, %220 : vector<8x1088xf32>
      %cst_100 = arith.constant dense<0.000000e+00> : vector<8xf32>
      %226 = vector.multi_reduction <add>, %225, %cst_100 [1] : vector<8x1088xf32> to vector<8xf32>
      %227 = vector.shape_cast %226 : vector<8xf32> to vector<8x1xf32>
      %cst_101 = arith.constant 9.1911765E-4 : f32
      %228 = vector.broadcast %cst_101 : f32 to vector<8x1xf32>
      %229 = arith.mulf %227, %228 : vector<8x1xf32>
      %230 = arith.mulf %224, %224 : vector<8x1xf32>
      %231 = arith.subf %229, %230 : vector<8x1xf32>
      %232 = vector.broadcast %224 : vector<8x1xf32> to vector<8x1088xf32>
      %233 = arith.subf %220, %232 : vector<8x1088xf32>
      %cst_102 = arith.constant 9.99999974E-6 : f32
      %234 = vector.broadcast %cst_102 : f32 to vector<8x1xf32>
      %235 = arith.addf %231, %234 : vector<8x1xf32>
      %236 = math.rsqrt %235 : vector<8x1xf32>
      %237 = vector.broadcast %236 : vector<8x1xf32> to vector<8x1088xf32>
      %238 = arith.mulf %233, %237 : vector<8x1088xf32>
      %c0_103 = arith.constant 0 : index
      %c10 = arith.constant 10 : index
      %239 = vector.load %arg4[%c0_103, %c10] : memref<8x12xf32, #tpu.memory_space<vmem>>, vector<8x1xf32>
      %240 = vector.broadcast %239 : vector<8x1xf32> to vector<8x1088xf32>
      %241 = arith.mulf %238, %240 : vector<8x1088xf32>
      %c0_104 = arith.constant 0 : index
      %c11 = arith.constant 11 : index
      %242 = vector.load %arg4[%c0_104, %c11] : memref<8x12xf32, #tpu.memory_space<vmem>>, vector<8x1xf32>
      %243 = vector.broadcast %242 : vector<8x1xf32> to vector<8x1088xf32>
      %244 = arith.addf %241, %243 : vector<8x1088xf32>
      %cst_105 = arith.constant 0.000000e+00 : f32
      %245 = vector.broadcast %cst_105 : f32 to vector<8x1088xf32>
      %246 = arith.maximumf %244, %245 : vector<8x1088xf32>
      %247 = vector.extract_strided_slice %246 {offsets = [0, 0], sizes = [1, 544], strides = [1, 1]} : vector<8x1088xf32> to vector<1x544xf32>
      %248 = vector.extract_strided_slice %246 {offsets = [0, 544], sizes = [1, 544], strides = [1, 1]} : vector<8x1088xf32> to vector<1x544xf32>
      %249 = tpu.concatenate %247, %248 in 0 : vector<1x544xf32>, vector<1x544xf32> -> vector<2x544xf32>
      %250 = arith.truncf %249 : vector<2x544xf32> to vector<2x544xbf16>
      %c0_106 = arith.constant 0 : index
      %c0_107 = arith.constant 0 : index
      %c0_108 = arith.constant 0 : index
      %251 = vector.load %arg10[%c0_106, %c0_107, %c0_108] : memref<8x2x544xbf16, #tpu.memory_space<vmem>>, vector<1x2x544xbf16>
      %252 = vector.shape_cast %251 : vector<1x2x544xbf16> to vector<2x544xbf16>
      %253 = vector.shape_cast %250 : vector<2x544xbf16> to vector<1x2x544xbf16>
      tpu.vector_store %arg10[%c0_106, %c0_107, %c0_108], %253 {strides = array<i32>} : memref<8x2x544xbf16, #tpu.memory_space<vmem>>, vector<1x2x544xbf16>,
      %254 = vector.extract_strided_slice %246 {offsets = [1, 0], sizes = [1, 544], strides = [1, 1]} : vector<8x1088xf32> to vector<1x544xf32>
      %255 = vector.extract_strided_slice %246 {offsets = [1, 544], sizes = [1, 544], strides = [1, 1]} : vector<8x1088xf32> to vector<1x544xf32>
      %256 = tpu.concatenate %254, %255 in 0 : vector<1x544xf32>, vector<1x544xf32> -> vector<2x544xf32>
      %257 = arith.truncf %256 : vector<2x544xf32> to vector<2x544xbf16>
      %c1_109 = arith.constant 1 : index
      %c0_110 = arith.constant 0 : index
      %c0_111 = arith.constant 0 : index
      %258 = vector.load %arg10[%c1_109, %c0_110, %c0_111] : memref<8x2x544xbf16, #tpu.memory_space<vmem>>, vector<1x2x544xbf16>
      %259 = vector.shape_cast %258 : vector<1x2x544xbf16> to vector<2x544xbf16>
      %260 = vector.shape_cast %257 : vector<2x544xbf16> to vector<1x2x544xbf16>
      tpu.vector_store %arg10[%c1_109, %c0_110, %c0_111], %260 {strides = array<i32>} : memref<8x2x544xbf16, #tpu.memory_space<vmem>>, vector<1x2x544xbf16>,
      %261 = vector.extract_strided_slice %246 {offsets = [2, 0], sizes = [1, 544], strides = [1, 1]} : vector<8x1088xf32> to vector<1x544xf32>
      %262 = vector.extract_strided_slice %246 {offsets = [2, 544], sizes = [1, 544], strides = [1, 1]} : vector<8x1088xf32> to vector<1x544xf32>
      %263 = tpu.concatenate %261, %262 in 0 : vector<1x544xf32>, vector<1x544xf32> -> vector<2x544xf32>
      %264 = arith.truncf %263 : vector<2x544xf32> to vector<2x544xbf16>
      %c2_112 = arith.constant 2 : index
      %c0_113 = arith.constant 0 : index
      %c0_114 = arith.constant 0 : index
      %265 = vector.load %arg10[%c2_112, %c0_113, %c0_114] : memref<8x2x544xbf16, #tpu.memory_space<vmem>>, vector<1x2x544xbf16>
      %266 = vector.shape_cast %265 : vector<1x2x544xbf16> to vector<2x544xbf16>
      %267 = vector.shape_cast %264 : vector<2x544xbf16> to vector<1x2x544xbf16>
      tpu.vector_store %arg10[%c2_112, %c0_113, %c0_114], %267 {strides = array<i32>} : memref<8x2x544xbf16, #tpu.memory_space<vmem>>, vector<1x2x544xbf16>,
      %268 = vector.extract_strided_slice %246 {offsets = [3, 0], sizes = [1, 544], strides = [1, 1]} : vector<8x1088xf32> to vector<1x544xf32>
      %269 = vector.extract_strided_slice %246 {offsets = [3, 544], sizes = [1, 544], strides = [1, 1]} : vector<8x1088xf32> to vector<1x544xf32>
      %270 = tpu.concatenate %268, %269 in 0 : vector<1x544xf32>, vector<1x544xf32> -> vector<2x544xf32>
      %271 = arith.truncf %270 : vector<2x544xf32> to vector<2x544xbf16>
      %c3_115 = arith.constant 3 : index
      %c0_116 = arith.constant 0 : index
      %c0_117 = arith.constant 0 : index
      %272 = vector.load %arg10[%c3_115, %c0_116, %c0_117] : memref<8x2x544xbf16, #tpu.memory_space<vmem>>, vector<1x2x544xbf16>
      %273 = vector.shape_cast %272 : vector<1x2x544xbf16> to vector<2x544xbf16>
      %274 = vector.shape_cast %271 : vector<2x544xbf16> to vector<1x2x544xbf16>
      tpu.vector_store %arg10[%c3_115, %c0_116, %c0_117], %274 {strides = array<i32>} : memref<8x2x544xbf16, #tpu.memory_space<vmem>>, vector<1x2x544xbf16>,
      %275 = vector.extract_strided_slice %246 {offsets = [4, 0], sizes = [1, 544], strides = [1, 1]} : vector<8x1088xf32> to vector<1x544xf32>
      %276 = vector.extract_strided_slice %246 {offsets = [4, 544], sizes = [1, 544], strides = [1, 1]} : vector<8x1088xf32> to vector<1x544xf32>
      %277 = tpu.concatenate %275, %276 in 0 : vector<1x544xf32>, vector<1x544xf32> -> vector<2x544xf32>
      %278 = arith.truncf %277 : vector<2x544xf32> to vector<2x544xbf16>
      %c4_118 = arith.constant 4 : index
      %c0_119 = arith.constant 0 : index
      %c0_120 = arith.constant 0 : index
      %279 = vector.load %arg10[%c4_118, %c0_119, %c0_120] : memref<8x2x544xbf16, #tpu.memory_space<vmem>>, vector<1x2x544xbf16>
      %280 = vector.shape_cast %279 : vector<1x2x544xbf16> to vector<2x544xbf16>
      %281 = vector.shape_cast %278 : vector<2x544xbf16> to vector<1x2x544xbf16>
      tpu.vector_store %arg10[%c4_118, %c0_119, %c0_120], %281 {strides = array<i32>} : memref<8x2x544xbf16, #tpu.memory_space<vmem>>, vector<1x2x544xbf16>,
      %282 = vector.extract_strided_slice %246 {offsets = [5, 0], sizes = [1, 544], strides = [1, 1]} : vector<8x1088xf32> to vector<1x544xf32>
      %283 = vector.extract_strided_slice %246 {offsets = [5, 544], sizes = [1, 544], strides = [1, 1]} : vector<8x1088xf32> to vector<1x544xf32>
      %284 = tpu.concatenate %282, %283 in 0 : vector<1x544xf32>, vector<1x544xf32> -> vector<2x544xf32>
      %285 = arith.truncf %284 : vector<2x544xf32> to vector<2x544xbf16>
      %c5_121 = arith.constant 5 : index
      %c0_122 = arith.constant 0 : index
      %c0_123 = arith.constant 0 : index
      %286 = vector.load %arg10[%c5_121, %c0_122, %c0_123] : memref<8x2x544xbf16, #tpu.memory_space<vmem>>, vector<1x2x544xbf16>
      %287 = vector.shape_cast %286 : vector<1x2x544xbf16> to vector<2x544xbf16>
      %288 = vector.shape_cast %285 : vector<2x544xbf16> to vector<1x2x544xbf16>
      tpu.vector_store %arg10[%c5_121, %c0_122, %c0_123], %288 {strides = array<i32>} : memref<8x2x544xbf16, #tpu.memory_space<vmem>>, vector<1x2x544xbf16>,
      %289 = vector.extract_strided_slice %246 {offsets = [6, 0], sizes = [1, 544], strides = [1, 1]} : vector<8x1088xf32> to vector<1x544xf32>
      %290 = vector.extract_strided_slice %246 {offsets = [6, 544], sizes = [1, 544], strides = [1, 1]} : vector<8x1088xf32> to vector<1x544xf32>
      %291 = tpu.concatenate %289, %290 in 0 : vector<1x544xf32>, vector<1x544xf32> -> vector<2x544xf32>
      %292 = arith.truncf %291 : vector<2x544xf32> to vector<2x544xbf16>
      %c6_124 = arith.constant 6 : index
      %c0_125 = arith.constant 0 : index
      %c0_126 = arith.constant 0 : index
      %293 = vector.load %arg10[%c6_124, %c0_125, %c0_126] : memref<8x2x544xbf16, #tpu.memory_space<vmem>>, vector<1x2x544xbf16>
      %294 = vector.shape_cast %293 : vector<1x2x544xbf16> to vector<2x544xbf16>
      %295 = vector.shape_cast %292 : vector<2x544xbf16> to vector<1x2x544xbf16>
      tpu.vector_store %arg10[%c6_124, %c0_125, %c0_126], %295 {strides = array<i32>} : memref<8x2x544xbf16, #tpu.memory_space<vmem>>, vector<1x2x544xbf16>,
      %296 = vector.extract_strided_slice %246 {offsets = [7, 0], sizes = [1, 544], strides = [1, 1]} : vector<8x1088xf32> to vector<1x544xf32>
      %297 = vector.extract_strided_slice %246 {offsets = [7, 544], sizes = [1, 544], strides = [1, 1]} : vector<8x1088xf32> to vector<1x544xf32>
      %298 = tpu.concatenate %296, %297 in 0 : vector<1x544xf32>, vector<1x544xf32> -> vector<2x544xf32>
      %299 = arith.truncf %298 : vector<2x544xf32> to vector<2x544xbf16>
      %c7_127 = arith.constant 7 : index
      %c0_128 = arith.constant 0 : index
      %c0_129 = arith.constant 0 : index
      %300 = vector.load %arg10[%c7_127, %c0_128, %c0_129] : memref<8x2x544xbf16, #tpu.memory_space<vmem>>, vector<1x2x544xbf16>
      %301 = vector.shape_cast %300 : vector<1x2x544xbf16> to vector<2x544xbf16>
      %302 = vector.shape_cast %299 : vector<2x544xbf16> to vector<1x2x544xbf16>
      tpu.vector_store %arg10[%c7_127, %c0_128, %c0_129], %302 {strides = array<i32>} : memref<8x2x544xbf16, #tpu.memory_space<vmem>>, vector<1x2x544xbf16>,
      %cst_130 = arith.constant 0.000000e+00 : f32
      %303 = vector.broadcast %cst_130 : f32 to vector<2x544xf32>
      %c0_131 = arith.constant 0 : index
      %c0_132 = arith.constant 0 : index
      %304 = vector.load %arg11[%c0_131, %c0_132] : memref<2x544xf32, #tpu.memory_space<vmem>>, vector<2x544xf32>
      tpu.vector_store %arg11[%c0_131, %c0_132], %303 {strides = array<i32>} : memref<2x544xf32, #tpu.memory_space<vmem>>, vector<2x544xf32>,
    } else {
    }
    %cst = arith.constant 0.000000e+00 : f32
    %3 = vector.broadcast %cst : f32 to vector<2x544xf32>
    %c2_i32 = arith.constant 2 : i32
    %4 = arith.muli %arg0, %c2_i32 : i32
    %c0_i32_1 = arith.constant 0 : i32
    %5 = arith.addi %4, %c0_i32_1 : i32
    %6 = arith.index_cast %5 : i32 to index
    %c0 = arith.constant 0 : index
    %c0_2 = arith.constant 0 : index
    %7 = vector.load %arg10[%6, %c0, %c0_2] : memref<8x2x544xbf16, #tpu.memory_space<vmem>>, vector<1x2x544xbf16>
    %8 = vector.shape_cast %7 : vector<1x2x544xbf16> to vector<2x544xbf16>
    %c0_3 = arith.constant 0 : index
    %c0_4 = arith.constant 0 : index
    %c0_5 = arith.constant 0 : index
    %9 = vector.load %arg5[%c0_3, %c0_4, %c0_5] : memref<2x544x544xbf16, #tpu.memory_space<vmem>>, vector<1x544x544xbf16>
    %10 = vector.shape_cast %9 : vector<1x544x544xbf16> to vector<544x544xbf16>
    %cst_6 = arith.constant dense<0.000000e+00> : vector<2x544xf32>
    %11 = tpu.matmul %8, %10, %cst_6 {dimension_numbers = #tpu.dot_dimension_numbers<[1], [0], [0], [1], [0, 0, 1, 1], [], []>} : vector<2x544xbf16>, vector<544x544xbf16>, vector<2x544xf32> -> vector<2x544xf32>
    %12 = arith.addf %3, %11 : vector<2x544xf32>
    %c2_i32_7 = arith.constant 2 : i32
    %13 = arith.muli %arg0, %c2_i32_7 : i32
    %c1_i32 = arith.constant 1 : i32
    %14 = arith.addi %13, %c1_i32 : i32
    %15 = arith.index_cast %14 : i32 to index
    %c0_8 = arith.constant 0 : index
    %c0_9 = arith.constant 0 : index
    %16 = vector.load %arg10[%15, %c0_8, %c0_9] : memref<8x2x544xbf16, #tpu.memory_space<vmem>>, vector<1x2x544xbf16>
    %17 = vector.shape_cast %16 : vector<1x2x544xbf16> to vector<2x544xbf16>
    %c1 = arith.constant 1 : index
    %c0_10 = arith.constant 0 : index
    %c0_11 = arith.constant 0 : index
    %18 = vector.load %arg5[%c1, %c0_10, %c0_11] : memref<2x544x544xbf16, #tpu.memory_space<vmem>>, vector<1x544x544xbf16>
    %19 = vector.shape_cast %18 : vector<1x544x544xbf16> to vector<544x544xbf16>
    %cst_12 = arith.constant dense<0.000000e+00> : vector<2x544xf32>
    %20 = tpu.matmul %17, %19, %cst_12 {dimension_numbers = #tpu.dot_dimension_numbers<[1], [0], [0], [1], [0, 0, 1, 1], [], []>} : vector<2x544xbf16>, vector<544x544xbf16>, vector<2x544xf32> -> vector<2x544xf32>
    %21 = arith.addf %12, %20 : vector<2x544xf32>
    %c0_13 = arith.constant 0 : index
    %c0_14 = arith.constant 0 : index
    %22 = vector.load %arg11[%c0_13, %c0_14] : memref<2x544xf32, #tpu.memory_space<vmem>>, vector<2x544xf32>
    %23 = arith.addf %22, %21 : vector<2x544xf32>
    %c0_15 = arith.constant 0 : index
    %c0_16 = arith.constant 0 : index
    %24 = vector.load %arg11[%c0_15, %c0_16] : memref<2x544xf32, #tpu.memory_space<vmem>>, vector<2x544xf32>
    tpu.vector_store %arg11[%c0_15, %c0_16], %23 {strides = array<i32>} : memref<2x544xf32, #tpu.memory_space<vmem>>, vector<2x544xf32>,
    %c3_i32 = arith.constant 3 : i32
    %25 = arith.cmpi eq, %arg0, %c3_i32 : i32
    %26 = arith.extui %25 : i1 to i32
    %c0_i32_17 = arith.constant 0 : i32
    %27 = arith.cmpi ne, %26, %c0_i32_17 : i32
    scf.if %27 {
      %c0_18 = arith.constant 0 : index
      %c0_19 = arith.constant 0 : index
      %28 = vector.load %arg11[%c0_18, %c0_19] : memref<2x544xf32, #tpu.memory_space<vmem>>, vector<2x544xf32>
      %c0_20 = arith.constant 0 : index
      %c0_21 = arith.constant 0 : index
      %29 = vector.load %arg6[%c0_20, %c0_21] : memref<1x544xf32, #tpu.memory_space<vmem>>, vector<1x544xf32>
      %30 = vector.broadcast %29 : vector<1x544xf32> to vector<2x544xf32>
      %31 = arith.addf %28, %30 : vector<2x544xf32>
      %cst_22 = arith.constant 0.000000e+00 : f32
      %32 = vector.broadcast %cst_22 : f32 to vector<2x544xf32>
      %33 = arith.maximumf %31, %32 : vector<2x544xf32>
      %34 = arith.truncf %33 : vector<2x544xf32> to vector<2x544xbf16>
      %c0_23 = arith.constant 0 : index
      %c0_24 = arith.constant 0 : index
      %35 = vector.load %arg7[%c0_23, %c0_24] : memref<544x181xbf16, #tpu.memory_space<vmem>>, vector<544x181xbf16>
      %cst_25 = arith.constant dense<0.000000e+00> : vector<2x181xf32>
      %36 = tpu.matmul %34, %35, %cst_25 {dimension_numbers = #tpu.dot_dimension_numbers<[1], [0], [0], [1], [0, 0, 1, 1], [], []>} : vector<2x544xbf16>, vector<544x181xbf16>, vector<2x181xf32> -> vector<2x181xf32>
      %c0_26 = arith.constant 0 : index
      %c0_27 = arith.constant 0 : index
      %37 = vector.load %arg8[%c0_26, %c0_27] : memref<1x181xf32, #tpu.memory_space<vmem>>, vector<1x181xf32>
      %38 = vector.broadcast %37 : vector<1x181xf32> to vector<2x181xf32>
      %39 = arith.addf %36, %38 : vector<2x181xf32>
      %c0_28 = arith.constant 0 : index
      %c0_29 = arith.constant 0 : index
      %40 = vector.load %arg9[%c0_28, %c0_29] : memref<2x181xf32, #tpu.memory_space<vmem>>, vector<2x181xf32>
      tpu.vector_store %arg9[%c0_28, %c0_29], %39 {strides = array<i32>} : memref<2x181xf32, #tpu.memory_space<vmem>>, vector<2x181xf32>,
    } else {
    }
    return
  }
  func.func @transform_0(%arg0: i32) -> (i32, i32) {
    %c0_i32 = arith.constant 0 : i32
    %c0_i32_0 = arith.constant 0 : i32
    %c0_i32_1 = arith.constant 0 : i32
    return %c0_i32, %c0_i32_0 : i32, i32
  }
  func.func @transform_1(%arg0: i32) -> (i32, i32, i32) {
    %c0_i32 = arith.constant 0 : i32
    %c0_i32_0 = arith.constant 0 : i32
    %c0_i32_1 = arith.constant 0 : i32
    %c0_i32_2 = arith.constant 0 : i32
    return %c0_i32, %c0_i32_0, %c0_i32_1 : i32, i32, i32
  }
  func.func @transform_2(%arg0: i32) -> (i32, i32, i32) {
    %c0_i32 = arith.constant 0 : i32
    %c0_i32_0 = arith.constant 0 : i32
    %c0_i32_1 = arith.constant 0 : i32
    %c0_i32_2 = arith.constant 0 : i32
    return %c0_i32, %c0_i32_0, %c0_i32_1 : i32, i32, i32
  }
  func.func @transform_3(%arg0: i32) -> (i32, i32) {
    %c0_i32 = arith.constant 0 : i32
    %c0_i32_0 = arith.constant 0 : i32
    %c0_i32_1 = arith.constant 0 : i32
    return %c0_i32, %c0_i32_0 : i32, i32
  }
  func.func @transform_4(%arg0: i32) -> (i32, i32, i32) {
    %c0_i32 = arith.constant 0 : i32
    %c0_i32_0 = arith.constant 0 : i32
    %c0_i32_1 = arith.constant 0 : i32
    return %arg0, %c0_i32, %c0_i32_0 : i32, i32, i32
  }
  func.func @transform_5(%arg0: i32) -> (i32, i32) {
    %c0_i32 = arith.constant 0 : i32
    %c0_i32_0 = arith.constant 0 : i32
    %c0_i32_1 = arith.constant 0 : i32
    return %c0_i32, %c0_i32_0 : i32, i32
  }
  func.func @transform_6(%arg0: i32) -> (i32, i32) {
    %c0_i32 = arith.constant 0 : i32
    %c0_i32_0 = arith.constant 0 : i32
    %c0_i32_1 = arith.constant 0 : i32
    return %c0_i32, %c0_i32_0 : i32, i32
  }
  func.func @transform_7(%arg0: i32) -> (i32, i32) {
    %c0_i32 = arith.constant 0 : i32
    %c0_i32_0 = arith.constant 0 : i32
    %c0_i32_1 = arith.constant 0 : i32
    return %c0_i32, %c0_i32_0 : i32, i32
  }
  func.func @transform_8(%arg0: i32) -> (i32, i32) {
    %c0_i32 = arith.constant 0 : i32
    %c0_i32_0 = arith.constant 0 : i32
    %c0_i32_1 = arith.constant 0 : i32
    return %c0_i32, %c0_i32_0 : i32, i32
  }
}

</mosaic_0001>

<llo_original>
// kernel: mlp_forward.1
$region0: #{mlp_forward.1}
  #allocation0 [shape = 'u32[]', space=smem, size = 0x4, offset = 0x4, fixed_abs, tag = 'smem constant byte address 0x4 - core index']
  #allocation1 [shape = 'u32[72,128]{1,0:T(1,128)}', space=vmem, size = 0x9000, scoped, tag = 'internal scratch']
  #allocation2 [shape = 'bf16[8,2,544]{2,1,0:T(2,128)(2,1)}', space=vmem, size = 0x5000, scoped, tag = 'scratch operand']
  #allocation3 [shape = 'f32[2,544]{1,0:T(2,128)}', space=vmem, size = 0x1400, scoped, tag = 'scratch operand']
  %s0 = inlined_call_operand.vmem [shape: f32[1,1088], index: 0, kind: input, shape index: {}]
  %s1 = inlined_call_operand.vmem [shape: f32[3,8,1], index: 1, kind: input, shape index: {}]
  %s2 = inlined_call_operand.vmem [shape: f32[3,8,24], index: 2, kind: input, shape index: {}]
  %s3 = inlined_call_operand.vmem [shape: f32[8,12], index: 3, kind: input, shape index: {}]
  %s4 = inlined_call_operand.vmem [shape: bf16[8,544,544], index: 4, kind: input, shape index: {}]
  %s5 = inlined_call_operand.vmem [shape: f32[1,544], index: 5, kind: input, shape index: {}]
  %s6 = inlined_call_operand.vmem [shape: bf16[544,181], index: 6, kind: input, shape index: {}]
  %s7 = inlined_call_operand.vmem [shape: f32[1,181], index: 7, kind: input, shape index: {}]
  %s8 = inlined_call_operand.hbm [shape: f32[2,181], index: 8, kind: output, shape index: {}]
  %s9 = sld [smem:[#allocation0]]
  $region73: #{mlp_forward.1} parent=0
    _
  %s11 = ssub.s32 1, %s9
  %s12 = scalar_select 0, %s11, %s9
  $region1: #{mlp_forward.1} parent=0
    #allocation4 [shape = 'u8[2048]{0}', space=vmem, size = 0x800, scoped, tag = 'output window, operand 0, single buffered']
    #allocation5 [shape = 's32[2]{0}', space=sflag, size = 0x8, scoped, tag = 'scoped memory for mlp_forward.1']
    %13 = vsyncpa [#allocation5], 0
    loop: start=0, step=1, limit=6
    $region2: #{mlp_forward.1} parent=1 // loop_pre_header
      _
    $region3: #{mlp_forward.1} parent=1 // loop_header
      %s15 = sphi 0, %s19
      %p16 = scmp.ge.s32.totalorder %s15, 6
      %s23 = sphi 0, %s23
      %s25 = sphi 0, %s23
      %s26 = sphi 0, %s25
      %s40 = sphi 0, %s26
      %s44 = sphi 0, %s44
      %s46 = sphi 0, %s44
      %s47 = sphi 0, %s46
      %s61 = sphi 0, %s47
      %s65 = sphi 0, %s65
      %s67 = sphi 0, %s65
      %s68 = sphi 0, %s67
      %s82 = sphi 0, %s68
      %s86 = sphi 0, %s86
      %s88 = sphi 0, %s86
      %s89 = sphi 0, %s88
      %s103 = sphi 0, %s89
      %s109 = sphi 0, %s111
      %s112 = sphi 0, %s109
      %s113 = sphi 0, %s112
      %s129 = sphi 0, %s113
      %s133 = sphi 0, %s133
      %s135 = sphi 0, %s133
      %s136 = sphi 0, %s135
      %s150 = sphi 0, %s136
      %s154 = sphi 0, %s154
      %s156 = sphi 0, %s154
      %s157 = sphi 0, %s156
      %s171 = sphi 0, %s157
      %s175 = sphi 0, %s175
      %s177 = sphi 0, %s175
      %s178 = sphi 0, %s177
      %s192 = sphi 0, %s178
      %s196 = sphi 0, %s196
      %s198 = sphi 0, %s196
      %s199 = sphi 0, %s198
      %s213 = sphi 0, %s199
    $region4: #{mlp_forward.1} parent=1 // loop_header_branch
      %18 = sbr.rel (%p16) target = $region8
    $region5: #{mlp_forward.1} parent=1 // loop_body
      %s20 = ssub.s32 %s15, 1
      %s21 = ssub.s32 %s15, 2
      %s22 = sadd.s32 %s15, 1
      %s24 = sadd.s32 %s23, 1
      %p27 = scmp.eq.s32.totalorder %s15, 3
      %p28 = scmp.ne.s32.totalorder %s23, %s25
      %p29 = scmp.eq.s32.totalorder %s15, 0
      %p30 = por %p28, %p29
      %p31 = scmp.ne.s32.totalorder %s23, %s25
      %p32 = scmp.eq.s32.totalorder %s20, 3
      %p33 = por %p31, %p32
      %p34 = scmp.ne.s32.totalorder %s25, %s26
      %p35 = scmp.eq.s32.totalorder %s20, 0
      %p36 = por %p34, %p35
      %p37 = scmp.ne.s32.totalorder %s25, %s26
      %p38 = scmp.eq.s32.totalorder %s21, 3
      %p39 = por %p37, %p38
      %p41 = scmp.ne.s32.totalorder %s26, %s40
      %p42 = scmp.eq.s32.totalorder %s21, 0
      %p43 = por %p41, %p42
      %s45 = sadd.s32 %s44, 1
      %p48 = scmp.eq.s32.totalorder %s15, 3
      %p49 = scmp.ne.s32.totalorder %s44, %s46
      %p50 = scmp.eq.s32.totalorder %s15, 0
      %p51 = por %p49, %p50
      %p52 = scmp.ne.s32.totalorder %s44, %s46
      %p53 = scmp.eq.s32.totalorder %s20, 3
      %p54 = por %p52, %p53
      %p55 = scmp.ne.s32.totalorder %s46, %s47
      %p56 = scmp.eq.s32.totalorder %s20, 0
      %p57 = por %p55, %p56
      %p58 = scmp.ne.s32.totalorder %s46, %s47
      %p59 = scmp.eq.s32.totalorder %s21, 3
      %p60 = por %p58, %p59
      %p62 = scmp.ne.s32.totalorder %s47, %s61
      %p63 = scmp.eq.s32.totalorder %s21, 0
      %p64 = por %p62, %p63
      %s66 = sadd.s32 %s65, 1
      %p69 = scmp.eq.s32.totalorder %s15, 3
      %p70 = scmp.ne.s32.totalorder %s65, %s67
      %p71 = scmp.eq.s32.totalorder %s15, 0
      %p72 = por %p70, %p71
      %p73 = scmp.ne.s32.totalorder %s65, %s67
      %p74 = scmp.eq.s32.totalorder %s20, 3
      %p75 = por %p73, %p74
      %p76 = scmp.ne.s32.totalorder %s67, %s68
      %p77 = scmp.eq.s32.totalorder %s20, 0
      %p78 = por %p76, %p77
      %p79 = scmp.ne.s32.totalorder %s67, %s68
      %p80 = scmp.eq.s32.totalorder %s21, 3
      %p81 = por %p79, %p80
      %p83 = scmp.ne.s32.totalorder %s68, %s82
      %p84 = scmp.eq.s32.totalorder %s21, 0
      %p85 = por %p83, %p84
      %s87 = sadd.s32 %s86, 1
      %p90 = scmp.eq.s32.totalorder %s15, 3
      %p91 = scmp.ne.s32.totalorder %s86, %s88
      %p92 = scmp.eq.s32.totalorder %s15, 0
      %p93 = por %p91, %p92
      %p94 = scmp.ne.s32.totalorder %s86, %s88
      %p95 = scmp.eq.s32.totalorder %s20, 3
      %p96 = por %p94, %p95
      %p97 = scmp.ne.s32.totalorder %s88, %s89
      %p98 = scmp.eq.s32.totalorder %s20, 0
      %p99 = por %p97, %p98
      %p100 = scmp.ne.s32.totalorder %s88, %s89
      %p101 = scmp.eq.s32.totalorder %s21, 3
      %p102 = por %p100, %p101
      %p104 = scmp.ne.s32.totalorder %s89, %s103
      %p105 = scmp.eq.s32.totalorder %s21, 0
      %p106 = por %p104, %p105
      %s107 = ssub.s32 %s15, %s22
      %p108 = scmp.eq.s32.totalorder %s107, 0
      %s110 = sadd.s32 %s109, 1
      %s111 = scalar_select %p108, %s109, %s110
      %p114 = pneg %p108
      %p115 = scmp.eq.s32.totalorder %s15, 3
      %p116 = por %p114, %p115
      %p117 = scmp.ne.s32.totalorder %s109, %s112
      %p118 = scmp.eq.s32.totalorder %s15, 0
      %p119 = por %p117, %p118
      %p120 = scmp.ne.s32.totalorder %s109, %s112
      %p121 = scmp.eq.s32.totalorder %s20, 3
      %p122 = por %p120, %p121
      %p123 = scmp.ne.s32.totalorder %s112, %s113
      %p124 = scmp.eq.s32.totalorder %s20, 0
      %p125 = por %p123, %p124
      %p126 = scmp.ne.s32.totalorder %s112, %s113
      %p127 = scmp.eq.s32.totalorder %s21, 3
      %p128 = por %p126, %p127
      %p130 = scmp.ne.s32.totalorder %s113, %s129
      %p131 = scmp.eq.s32.totalorder %s21, 0
      %p132 = por %p130, %p131
      %s134 = sadd.s32 %s133, 1
      %p137 = scmp.eq.s32.totalorder %s15, 3
      %p138 = scmp.ne.s32.totalorder %s133, %s135
      %p139 = scmp.eq.s32.totalorder %s15, 0
      %p140 = por %p138, %p139
      %p141 = scmp.ne.s32.totalorder %s133, %s135
      %p142 = scmp.eq.s32.totalorder %s20, 3
      %p143 = por %p141, %p142
      %p144 = scmp.ne.s32.totalorder %s135, %s136
      %p145 = scmp.eq.s32.totalorder %s20, 0
      %p146 = por %p144, %p145
      %p147 = scmp.ne.s32.totalorder %s135, %s136
      %p148 = scmp.eq.s32.totalorder %s21, 3
      %p149 = por %p147, %p148
      %p151 = scmp.ne.s32.totalorder %s136, %s150
      %p152 = scmp.eq.s32.totalorder %s21, 0
      %p153 = por %p151, %p152
      %s155 = sadd.s32 %s154, 1
      %p158 = scmp.eq.s32.totalorder %s15, 3
      %p159 = scmp.ne.s32.totalorder %s154, %s156
      %p160 = scmp.eq.s32.totalorder %s15, 0
      %p161 = por %p159, %p160
      %p162 = scmp.ne.s32.totalorder %s154, %s156
      %p163 = scmp.eq.s32.totalorder %s20, 3
      %p164 = por %p162, %p163
      %p165 = scmp.ne.s32.totalorder %s156, %s157
      %p166 = scmp.eq.s32.totalorder %s20, 0
      %p167 = por %p165, %p166
      %p168 = scmp.ne.s32.totalorder %s156, %s157
      %p169 = scmp.eq.s32.totalorder %s21, 3
      %p170 = por %p168, %p169
      %p172 = scmp.ne.s32.totalorder %s157, %s171
      %p173 = scmp.eq.s32.totalorder %s21, 0
      %p174 = por %p172, %p173
      %s176 = sadd.s32 %s175, 1
      %p179 = scmp.eq.s32.totalorder %s15, 3
      %p180 = scmp.ne.s32.totalorder %s175, %s177
      %p181 = scmp.eq.s32.totalorder %s15, 0
      %p182 = por %p180, %p181
      %p183 = scmp.ne.s32.totalorder %s175, %s177
      %p184 = scmp.eq.s32.totalorder %s20, 3
      %p185 = por %p183, %p184
      %p186 = scmp.ne.s32.totalorder %s177, %s178
      %p187 = scmp.eq.s32.totalorder %s20, 0
      %p188 = por %p186, %p187
      %p189 = scmp.ne.s32.totalorder %s177, %s178
      %p190 = scmp.eq.s32.totalorder %s21, 3
      %p191 = por %p189, %p190
      %p193 = scmp.ne.s32.totalorder %s178, %s192
      %p194 = scmp.eq.s32.totalorder %s21, 0
      %p195 = por %p193, %p194
      %s197 = sadd.s32 %s196, 1
      %p200 = scmp.eq.s32.totalorder %s15, 3
      %p201 = scmp.ne.s32.totalorder %s196, %s198
      %p202 = scmp.eq.s32.totalorder %s15, 0
      %p203 = por %p201, %p202
      %p204 = scmp.ne.s32.totalorder %s196, %s198
      %p205 = scmp.eq.s32.totalorder %s20, 3
      %p206 = por %p204, %p205
      %p207 = scmp.ne.s32.totalorder %s198, %s199
      %p208 = scmp.eq.s32.totalorder %s20, 0
      %p209 = por %p207, %p208
      %p210 = scmp.ne.s32.totalorder %s198, %s199
      %p211 = scmp.eq.s32.totalorder %s21, 3
      %p212 = por %p210, %p211
      %p214 = scmp.ne.s32.totalorder %s199, %s213
      %p215 = scmp.eq.s32.totalorder %s21, 0
      %p216 = por %p214, %p215
      %p217 = scmp.le.s32.totalorder 1, %s15
      %p218 = scmp.lt.s32.totalorder %s15, 5
      %p219 = pnand %p217, %p218
      %p220 = pneg %p219
      // Predicated region
      $region9: #{mlp_forward.1} parent=5 // pred_check
        _
      $region10: #{mlp_forward.1} parent=5 // pred_check_branch
        %222 = sbr.rel (%p219) target = $region12
      $region11: #{mlp_forward.1} parent=5 // pred_region
        %s223 = ssub.s32 %s15, 1
        // Predicated region
        $region13: #{mlp_forward.1} parent=11 // pred_check
          %p224 = pneg %p36
        $region14: #{mlp_forward.1} parent=11 // pred_check_branch
          %226 = sbr.rel (%p224) target = $region16
        $region15: #{mlp_forward.1} parent=11 // pred_region
          _
        $region16: #{mlp_forward.1} parent=11 // pred_fallthru
          _
        // Predicated region
        $region17: #{mlp_forward.1} parent=11 // pred_check
          %p227 = pneg %p57
        $region18: #{mlp_forward.1} parent=11 // pred_check_branch
          %229 = sbr.rel (%p227) target = $region20
        $region19: #{mlp_forward.1} parent=11 // pred_region
          _
        $region20: #{mlp_forward.1} parent=11 // pred_fallthru
          _
        // Predicated region
        $region21: #{mlp_forward.1} parent=11 // pred_check
          %p230 = pneg %p78
        $region22: #{mlp_forward.1} parent=11 // pred_check_branch
          %232 = sbr.rel (%p230) target = $region24
        $region23: #{mlp_forward.1} parent=11 // pred_region
          _
        $region24: #{mlp_forward.1} parent=11 // pred_fallthru
          _
        // Predicated region
        $region25: #{mlp_forward.1} parent=11 // pred_check
          %p233 = pneg %p99
        $region26: #{mlp_forward.1} parent=11 // pred_check_branch
          %235 = sbr.rel (%p233) target = $region28
        $region27: #{mlp_forward.1} parent=11 // pred_region
          _
        $region28: #{mlp_forward.1} parent=11 // pred_fallthru
          _
        // Predicated region
        $region29: #{mlp_forward.1} parent=11 // pred_check
          %p236 = pneg %p146
        $region30: #{mlp_forward.1} parent=11 // pred_check_branch
          %238 = sbr.rel (%p236) target = $region32
        $region31: #{mlp_forward.1} parent=11 // pred_region
          _
        $region32: #{mlp_forward.1} parent=11 // pred_fallthru
          _
        // Predicated region
        $region33: #{mlp_forward.1} parent=11 // pred_check
          %p239 = pneg %p167
        $region34: #{mlp_forward.1} parent=11 // pred_check_branch
          %241 = sbr.rel (%p239) target = $region36
        $region35: #{mlp_forward.1} parent=11 // pred_region
          _
        $region36: #{mlp_forward.1} parent=11 // pred_fallthru
          _
        // Predicated region
        $region37: #{mlp_forward.1} parent=11 // pred_check
          %p242 = pneg %p188
        $region38: #{mlp_forward.1} parent=11 // pred_check_branch
          %244 = sbr.rel (%p242) target = $region40
        $region39: #{mlp_forward.1} parent=11 // pred_region
          _
        $region40: #{mlp_forward.1} parent=11 // pred_fallthru
          _
      $region12: #{mlp_forward.1} parent=5 // pred_fallthru
        _
      %p245 = scmp.lt.s32.totalorder %s15, 4
      // Predicated region
      $region41: #{mlp_forward.1} parent=5 // pred_check
        %p246 = pneg %p245
      $region42: #{mlp_forward.1} parent=5 // pred_check_branch
        %248 = sbr.rel (%p246) target = $region44
      $region43: #{mlp_forward.1} parent=5 // pred_region
        // Predicated region
        $region45: #{mlp_forward.1} parent=43 // pred_check
          %p249 = pneg %p119
        $region46: #{mlp_forward.1} parent=43 // pred_check_branch
          %251 = sbr.rel (%p249) target = $region48
        $region47: #{mlp_forward.1} parent=43 // pred_region
          %s252 = smul.u32 2, %s15
          %p253 = scmp.lt.s32.totalorder %s252, 7
          %s254 = scalar_select %p253, %s252, 7
          %s255 = smul.addr %s254, 340
          %s256 = smul.addr %s255, 4
          %s257 = scalar_lea.vmem %s4, %s256
          %s258 = smul.u32 2, %s15
        $region48: #{mlp_forward.1} parent=43 // pred_fallthru
          _
      $region44: #{mlp_forward.1} parent=5 // pred_fallthru
        _
      %p259 = scmp.le.s32.totalorder 1, %s15
      %p260 = scmp.lt.s32.totalorder %s15, 5
      %p261 = pnand %p259, %p260
      %p262 = pneg %p261
      // Predicated region
      $region49: #{mlp_forward.1} parent=5 // pred_check
        _
      $region50: #{mlp_forward.1} parent=5 // pred_check_branch
        %264 = sbr.rel (%p261) target = $region52
      $region51: #{mlp_forward.1} parent=5 // pred_region
        %s265 = ssub.s32 %s15, 1
        %p266 = pneg %p36
        %p267 = pneg %p33
        %p268 = pneg %p57
        %p269 = pneg %p54
        %p270 = pneg %p78
        %p271 = pneg %p75
        %p272 = pneg %p99
        %p273 = pneg %p96
        %s274 = smul.u32 2, %s20
        %p275 = scmp.lt.s32.totalorder %s274, 7
        %s276 = scalar_select %p275, %s274, 7
        %s277 = smul.addr %s276, 340
        %s278 = smul.addr %s277, 4
        %s279 = scalar_lea.vmem %s4, %s278
        %p280 = pneg %p125
        %p281 = pneg %p122
        %p282 = pneg %p146
        %p283 = pneg %p143
        %p284 = pneg %p167
        %p285 = pneg %p164
        %p286 = pneg %p188
        %p287 = pneg %p185
        %p288 = pneg %p209
        %p289 = pneg %p206
        %s290 = smul.u32 2, %s20
        %p291 = scmp.lt.s32.totalorder %s290, 7
        %s292 = scalar_select %p291, %s290, 7
        %s293 = smul.addr %s292, 340
        %s294 = smul.addr %s293, 4
        %s295 = scalar_lea.vmem %s4, %s294
        %s296 = smul.u32 2, %s20
        %p298 = scmp.eq.s32.totalorder %s20, 0
        // Predicated region
        $region53: #{mlp_forward.1} parent=51 // pred_check
          %p299 = pneg %p298
        $region54: #{mlp_forward.1} parent=51 // pred_check_branch
          %301 = sbr.rel (%p299) target = $region56
        $region55: #{mlp_forward.1} parent=51 // pred_region
          %v302 = vlaneseq
          %v303 = vand.u32 %v302, 127
          %v304 = vadd.s32 %v303, 128
          %v305 = vadd.s32 %v303, 256
          %v306 = vadd.s32 %v303, 384
          %v307 = vadd.s32 %v303, 512
          %v308 = vadd.s32 %v303, 640
          %v309 = vadd.s32 %v303, 768
          %v310 = vadd.s32 %v303, 896
          %v311 = vadd.s32 %v303, 1024
          %vm312 = vcmp.lt.s32.totalorder %v303, 0
          %v313 = vsub.s32 0, %v303
          %v314 = vsel %vm312, %v313, %v303
          %v315 = vand.u32 %v314, 65535
          %v316 = vshrl.u32 %v314, 16
          %v318 = vmul.u32 %v315, 61681
          %v319 = vmul.u32 %v315, 61680
          %v320 = vmul.u32 %v316, 61681
          %v321 = vmul.u32 %v316, 61680
          %v322 = vshll.u32 %v319, 16
          %v323 = vshrl.u32 %v319, 16
          %v324 = vshll.u32 %v320, 16
          %v325 = vshrl.u32 %v320, 16
          %vm326 = vc.u32 %v318, %v322
          %v327 = vsel %vm326, 1, 0
          %v328 = vadd.s32 %v318, %v322
          %v329 = vadd.s32 %v321, %v327
          %vm330 = vc.u32 %v328, %v324
          %v331 = vsel %vm330, 1, 0
          %v332 = vadd.s32 %v328, %v324
          %v333 = vadd.s32 %v329, %v331
          %v334 = vadd.s32 %v333, %v323
          %v335 = vadd.s32 %v334, %v325
          %v336 = vshrl.u32 %v335, 9
          %v337 = vmul.u32 %v336, 544
          %v338 = vsub.s32 %v314, %v337
          %v339 = vsub.s32 0, %v338
          %v340 = vsel %vm312, %v339, %v338
          %vm341 = vcmp.lt.s32.totalorder %v304, 0
          %v342 = vsub.s32 0, %v304
          %v343 = vsel %vm341, %v342, %v304
          %v344 = vand.u32 %v343, 65535
          %v345 = vshrl.u32 %v343, 16
          %v347 = vmul.u32 %v344, 61681
          %v348 = vmul.u32 %v344, 61680
          %v349 = vmul.u32 %v345, 61681
          %v350 = vmul.u32 %v345, 61680
          %v351 = vshll.u32 %v348, 16
          %v352 = vshrl.u32 %v348, 16
          %v353 = vshll.u32 %v349, 16
          %v354 = vshrl.u32 %v349, 16
          %vm355 = vc.u32 %v347, %v351
          %v356 = vsel %vm355, 1, 0
          %v357 = vadd.s32 %v347, %v351
          %v358 = vadd.s32 %v350, %v356
          %vm359 = vc.u32 %v357, %v353
          %v360 = vsel %vm359, 1, 0
          %v361 = vadd.s32 %v357, %v353
          %v362 = vadd.s32 %v358, %v360
          %v363 = vadd.s32 %v362, %v352
          %v364 = vadd.s32 %v363, %v354
          %v365 = vshrl.u32 %v364, 9
          %v366 = vmul.u32 %v365, 544
          %v367 = vsub.s32 %v343, %v366
          %v368 = vsub.s32 0, %v367
          %v369 = vsel %vm341, %v368, %v367
          %vm370 = vcmp.lt.s32.totalorder %v305, 0
          %v371 = vsub.s32 0, %v305
          %v372 = vsel %vm370, %v371, %v305
          %v373 = vand.u32 %v372, 65535
          %v374 = vshrl.u32 %v372, 16
          %v376 = vmul.u32 %v373, 61681
          %v377 = vmul.u32 %v373, 61680
          %v378 = vmul.u32 %v374, 61681
          %v379 = vmul.u32 %v374, 61680
          %v380 = vshll.u32 %v377, 16
          %v381 = vshrl.u32 %v377, 16
          %v382 = vshll.u32 %v378, 16
          %v383 = vshrl.u32 %v378, 16
          %vm384 = vc.u32 %v376, %v380
          %v385 = vsel %vm384, 1, 0
          %v386 = vadd.s32 %v376, %v380
          %v387 = vadd.s32 %v379, %v385
          %vm388 = vc.u32 %v386, %v382
          %v389 = vsel %vm388, 1, 0
          %v390 = vadd.s32 %v386, %v382
          %v391 = vadd.s32 %v387, %v389
          %v392 = vadd.s32 %v391, %v381
          %v393 = vadd.s32 %v392, %v383
          %v394 = vshrl.u32 %v393, 9
          %v395 = vmul.u32 %v394, 544
          %v396 = vsub.s32 %v372, %v395
          %v397 = vsub.s32 0, %v396
          %v398 = vsel %vm370, %v397, %v396
          %vm399 = vcmp.lt.s32.totalorder %v306, 0
          %v400 = vsub.s32 0, %v306
          %v401 = vsel %vm399, %v400, %v306
          %v402 = vand.u32 %v401, 65535
          %v403 = vshrl.u32 %v401, 16
          %v405 = vmul.u32 %v402, 61681
          %v406 = vmul.u32 %v402, 61680
          %v407 = vmul.u32 %v403, 61681
          %v408 = vmul.u32 %v403, 61680
          %v409 = vshll.u32 %v406, 16
          %v410 = vshrl.u32 %v406, 16
          %v411 = vshll.u32 %v407, 16
          %v412 = vshrl.u32 %v407, 16
          %vm413 = vc.u32 %v405, %v409
          %v414 = vsel %vm413, 1, 0
          %v415 = vadd.s32 %v405, %v409
          %v416 = vadd.s32 %v408, %v414
          %vm417 = vc.u32 %v415, %v411
          %v418 = vsel %vm417, 1, 0
          %v419 = vadd.s32 %v415, %v411
          %v420 = vadd.s32 %v416, %v418
          %v421 = vadd.s32 %v420, %v410
          %v422 = vadd.s32 %v421, %v412
          %v423 = vshrl.u32 %v422, 9
          %v424 = vmul.u32 %v423, 544
          %v425 = vsub.s32 %v401, %v424
          %v426 = vsub.s32 0, %v425
          %v427 = vsel %vm399, %v426, %v425
          %vm428 = vcmp.lt.s32.totalorder %v307, 0
          %v429 = vsub.s32 0, %v307
          %v430 = vsel %vm428, %v429, %v307
          %v431 = vand.u32 %v430, 65535
          %v432 = vshrl.u32 %v430, 16
          %v434 = vmul.u32 %v431, 61681
          %v435 = vmul.u32 %v431, 61680
          %v436 = vmul.u32 %v432, 61681
          %v437 = vmul.u32 %v432, 61680
          %v438 = vshll.u32 %v435, 16
          %v439 = vshrl.u32 %v435, 16
          %v440 = vshll.u32 %v436, 16
          %v441 = vshrl.u32 %v436, 16
          %vm442 = vc.u32 %v434, %v438
          %v443 = vsel %vm442, 1, 0
          %v444 = vadd.s32 %v434, %v438
          %v445 = vadd.s32 %v437, %v443
          %vm446 = vc.u32 %v444, %v440
          %v447 = vsel %vm446, 1, 0
          %v448 = vadd.s32 %v444, %v440
          %v449 = vadd.s32 %v445, %v447
          %v450 = vadd.s32 %v449, %v439
          %v451 = vadd.s32 %v450, %v441
          %v452 = vshrl.u32 %v451, 9
          %v453 = vmul.u32 %v452, 544
          %v454 = vsub.s32 %v430, %v453
          %v455 = vsub.s32 0, %v454
          %v456 = vsel %vm428, %v455, %v454
          %vm457 = vcmp.lt.s32.totalorder %v308, 0
          %v458 = vsub.s32 0, %v308
          %v459 = vsel %vm457, %v458, %v308
          %v460 = vand.u32 %v459, 65535
          %v461 = vshrl.u32 %v459, 16
          %v463 = vmul.u32 %v460, 61681
          %v464 = vmul.u32 %v460, 61680
          %v465 = vmul.u32 %v461, 61681
          %v466 = vmul.u32 %v461, 61680
          %v467 = vshll.u32 %v464, 16
          %v468 = vshrl.u32 %v464, 16
          %v469 = vshll.u32 %v465, 16
          %v470 = vshrl.u32 %v465, 16
          %vm471 = vc.u32 %v463, %v467
          %v472 = vsel %vm471, 1, 0
          %v473 = vadd.s32 %v463, %v467
          %v474 = vadd.s32 %v466, %v472
          %vm475 = vc.u32 %v473, %v469
          %v476 = vsel %vm475, 1, 0
          %v477 = vadd.s32 %v473, %v469
          %v478 = vadd.s32 %v474, %v476
          %v479 = vadd.s32 %v478, %v468
          %v480 = vadd.s32 %v479, %v470
          %v481 = vshrl.u32 %v480, 9
          %v482 = vmul.u32 %v481, 544
          %v483 = vsub.s32 %v459, %v482
          %v484 = vsub.s32 0, %v483
          %v485 = vsel %vm457, %v484, %v483
          %vm486 = vcmp.lt.s32.totalorder %v309, 0
          %v487 = vsub.s32 0, %v309
          %v488 = vsel %vm486, %v487, %v309
          %v489 = vand.u32 %v488, 65535
          %v490 = vshrl.u32 %v488, 16
          %v492 = vmul.u32 %v489, 61681
          %v493 = vmul.u32 %v489, 61680
          %v494 = vmul.u32 %v490, 61681
          %v495 = vmul.u32 %v490, 61680
          %v496 = vshll.u32 %v493, 16
          %v497 = vshrl.u32 %v493, 16
          %v498 = vshll.u32 %v494, 16
          %v499 = vshrl.u32 %v494, 16
          %vm500 = vc.u32 %v492, %v496
          %v501 = vsel %vm500, 1, 0
          %v502 = vadd.s32 %v492, %v496
          %v503 = vadd.s32 %v495, %v501
          %vm504 = vc.u32 %v502, %v498
          %v505 = vsel %vm504, 1, 0
          %v506 = vadd.s32 %v502, %v498
          %v507 = vadd.s32 %v503, %v505
          %v508 = vadd.s32 %v507, %v497
          %v509 = vadd.s32 %v508, %v499
          %v510 = vshrl.u32 %v509, 9
          %v511 = vmul.u32 %v510, 544
          %v512 = vsub.s32 %v488, %v511
          %v513 = vsub.s32 0, %v512
          %v514 = vsel %vm486, %v513, %v512
          %vm515 = vcmp.lt.s32.totalorder %v310, 0
          %v516 = vsub.s32 0, %v310
          %v517 = vsel %vm515, %v516, %v310
          %v518 = vand.u32 %v517, 65535
          %v519 = vshrl.u32 %v517, 16
          %v521 = vmul.u32 %v518, 61681
          %v522 = vmul.u32 %v518, 61680
          %v523 = vmul.u32 %v519, 61681
          %v524 = vmul.u32 %v519, 61680
          %v525 = vshll.u32 %v522, 16
          %v526 = vshrl.u32 %v522, 16
          %v527 = vshll.u32 %v523, 16
          %v528 = vshrl.u32 %v523, 16
          %vm529 = vc.u32 %v521, %v525
          %v530 = vsel %vm529, 1, 0
          %v531 = vadd.s32 %v521, %v525
          %v532 = vadd.s32 %v524, %v530
          %vm533 = vc.u32 %v531, %v527
          %v534 = vsel %vm533, 1, 0
          %v535 = vadd.s32 %v531, %v527
          %v536 = vadd.s32 %v532, %v534
          %v537 = vadd.s32 %v536, %v526
          %v538 = vadd.s32 %v537, %v528
          %v539 = vshrl.u32 %v538, 9
          %v540 = vmul.u32 %v539, 544
          %v541 = vsub.s32 %v517, %v540
          %v542 = vsub.s32 0, %v541
          %v543 = vsel %vm515, %v542, %v541
          %vm544 = vcmp.lt.s32.totalorder %v311, 0
          %v545 = vsub.s32 0, %v311
          %v546 = vsel %vm544, %v545, %v311
          %v547 = vand.u32 %v546, 65535
          %v548 = vshrl.u32 %v546, 16
          %v550 = vmul.u32 %v547, 61681
          %v551 = vmul.u32 %v547, 61680
          %v552 = vmul.u32 %v548, 61681
          %v553 = vmul.u32 %v548, 61680
          %v554 = vshll.u32 %v551, 16
          %v555 = vshrl.u32 %v551, 16
          %v556 = vshll.u32 %v552, 16
          %v557 = vshrl.u32 %v552, 16
          %vm558 = vc.u32 %v550, %v554
          %v559 = vsel %vm558, 1, 0
          %v560 = vadd.s32 %v550, %v554
          %v561 = vadd.s32 %v553, %v559
          %vm562 = vc.u32 %v560, %v556
          %v563 = vsel %vm562, 1, 0
          %v564 = vadd.s32 %v560, %v556
          %v565 = vadd.s32 %v561, %v563
          %v566 = vadd.s32 %v565, %v555
          %v567 = vadd.s32 %v566, %v557
          %v568 = vshrl.u32 %v567, 9
          %v569 = vmul.u32 %v568, 544
          %v570 = vsub.s32 %v546, %v569
          %v571 = vsub.s32 0, %v570
          %v572 = vsel %vm544, %v571, %v570
          %vm573 = vcmp.ne.s32.totalorder %v340, 0
          %vm574 = vcmp.ne.s32.totalorder %v369, 0
          %vm575 = vcmp.ne.s32.totalorder %v398, 0
          %vm576 = vcmp.ne.s32.totalorder %v427, 0
          %vm577 = vcmp.ne.s32.totalorder %v456, 0
          %vm578 = vcmp.ne.s32.totalorder %v485, 0
          %vm579 = vcmp.ne.s32.totalorder %v514, 0
          %vm580 = vcmp.ne.s32.totalorder %v543, 0
          %vm581 = vcmp.ne.s32.totalorder %v572, 0
          %vm582 = vcmp.lt.s32.totalorder %v340, 0
          %vm583 = vcmp.lt.s32.totalorder %v369, 0
          %vm584 = vcmp.lt.s32.totalorder %v398, 0
          %vm585 = vcmp.lt.s32.totalorder %v427, 0
          %vm586 = vcmp.lt.s32.totalorder %v456, 0
          %vm587 = vcmp.lt.s32.totalorder %v485, 0
          %vm588 = vcmp.lt.s32.totalorder %v514, 0
          %vm589 = vcmp.lt.s32.totalorder %v543, 0
          %vm590 = vcmp.lt.s32.totalorder %v572, 0
          %vm591 = vmand %vm582, %vm573
          %vm592 = vmand %vm583, %vm574
          %vm593 = vmand %vm584, %vm575
          %vm594 = vmand %vm585, %vm576
          %vm595 = vmand %vm586, %vm577
          %vm596 = vmand %vm587, %vm578
          %vm597 = vmand %vm588, %vm579
          %vm598 = vmand %vm589, %vm580
          %vm599 = vmand %vm590, %vm581
          %v600 = vadd.s32 %v340, 544
          %v601 = vadd.s32 %v369, 544
          %v602 = vadd.s32 %v398, 544
          %v603 = vadd.s32 %v427, 544
          %v604 = vadd.s32 %v456, 544
          %v605 = vadd.s32 %v485, 544
          %v606 = vadd.s32 %v514, 544
          %v607 = vadd.s32 %v543, 544
          %v608 = vadd.s32 %v572, 544
          %v609 = vsel %vm591, %v600, %v340
          %v610 = vsel %vm592, %v601, %v369
          %v611 = vsel %vm593, %v602, %v398
          %v612 = vsel %vm594, %v603, %v427
          %v613 = vsel %vm595, %v604, %v456
          %v614 = vsel %vm596, %v605, %v485
          %v615 = vsel %vm597, %v606, %v514
          %v616 = vsel %vm598, %v607, %v543
          %v617 = vsel %vm599, %v608, %v572
          %vm618 = vcmp.eq.s32.totalorder %v609, 0
          %vm619 = vcmp.eq.s32.totalorder %v610, 0
          %vm620 = vcmp.eq.s32.totalorder %v611, 0
          %vm621 = vcmp.eq.s32.totalorder %v612, 0
          %vm622 = vcmp.eq.s32.totalorder %v613, 0
          %vm623 = vcmp.eq.s32.totalorder %v614, 0
          %vm624 = vcmp.eq.s32.totalorder %v615, 0
          %vm625 = vcmp.eq.s32.totalorder %v616, 0
          %vm626 = vcmp.eq.s32.totalorder %v617, 0
          %vm627 = vcmp.eq.s32.totalorder %v609, 543
          %vm628 = vcmp.eq.s32.totalorder %v610, 543
          %vm629 = vcmp.eq.s32.totalorder %v611, 543
          %vm630 = vcmp.eq.s32.totalorder %v612, 543
          %vm631 = vcmp.eq.s32.totalorder %v613, 543
          %vm632 = vcmp.eq.s32.totalorder %v614, 543
          %vm633 = vcmp.eq.s32.totalorder %v615, 543
          %vm634 = vcmp.eq.s32.totalorder %v616, 543
          %vm635 = vcmp.eq.s32.totalorder %v617, 543
          %v636 = vld [vmem:[%s0] sm:$0xff]
          %v637 = vld [vmem:[%s0 + $0x8] sm:$0x1]
          %v640 = vperm.slane %v636, 0
          %v641 = vperm.slane %v636, 1
          %v642 = vperm.slane %v636, 2
          %v643 = vperm.slane %v636, 3
          %v644 = vperm.slane %v636, 4
          %v645 = vperm.slane %v636, 5
          %v646 = vperm.slane %v636, 6
          %v647 = vperm.slane %v636, 7
          %v648 = vperm.slane %v637, 0
          %vm658 = vcmask 1048064
          %659 = vrot.lane.b32.xlu0 %v640, 64
          %v660 = vpop.permute.xlu0 %659
          %v661 = vsel %vm658, %v660, %v648
          %662 = vrot.lane.b32.xlu0 %v641, 64
          %v663 = vpop.permute.xlu0 %662
          %664 = vrot.lane.b32.xlu0 %v642, 64
          %v665 = vpop.permute.xlu0 %664
          %666 = vrot.lane.b32.xlu0 %v643, 64
          %v667 = vpop.permute.xlu0 %666
          %668 = vrot.lane.b32.xlu0 %v644, 64
          %v669 = vpop.permute.xlu0 %668
          %670 = vrot.lane.b32.xlu0 %v645, 64
          %v671 = vpop.permute.xlu0 %670
          %672 = vrot.lane.b32.xlu0 %v646, 64
          %v673 = vpop.permute.xlu0 %672
          %674 = vrot.lane.b32.xlu0 %v647, 64
          %v675 = vpop.permute.xlu0 %674
          %676 = vrot.lane.b32.xlu0 %v661, 64
          %v677 = vpop.permute.xlu0 %676
          %v678 = vsel %vm658, %v663, %v660
          %v679 = vsel %vm658, %v665, %v663
          %v680 = vsel %vm658, %v667, %v665
          %v681 = vsel %vm658, %v669, %v667
          %v682 = vsel %vm658, %v671, %v669
          %v683 = vsel %vm658, %v673, %v671
          %v684 = vsel %vm658, %v675, %v673
          %v685 = vsel %vm658, %v677, %v675
          %695 = vrot.lane.b32.xlu0 %v661, 65
          %v696 = vpop.permute.xlu0 %695
          %697 = vrot.lane.b32.xlu0 %v678, 65
          %v698 = vpop.permute.xlu0 %697
          %699 = vrot.lane.b32.xlu0 %v679, 65
          %v700 = vpop.permute.xlu0 %699
          %701 = vrot.lane.b32.xlu0 %v680, 65
          %v702 = vpop.permute.xlu0 %701
          %703 = vrot.lane.b32.xlu0 %v681, 65
          %v704 = vpop.permute.xlu0 %703
          %705 = vrot.lane.b32.xlu0 %v682, 65
          %v706 = vpop.permute.xlu0 %705
          %707 = vrot.lane.b32.xlu0 %v683, 65
          %v708 = vpop.permute.xlu0 %707
          %709 = vrot.lane.b32.xlu0 %v684, 65
          %v710 = vpop.permute.xlu0 %709
          %711 = vrot.lane.b32.xlu0 %v685, 65
          %v712 = vpop.permute.xlu0 %711
          %vm713 = vcmask 531456
          %v714 = vsel %vm713, %v696, %v698
          %v715 = vsel %vm713, %v698, %v700
          %v716 = vsel %vm713, %v700, %v702
          %v717 = vsel %vm713, %v702, %v704
          %v718 = vsel %vm713, %v704, %v706
          %v719 = vsel %vm713, %v706, %v708
          %v720 = vsel %vm713, %v708, %v710
          %v721 = vsel %vm713, %v710, %v712
          %v731 = vsel %vm618, 0.0, %v714
          %v732 = vsel %vm619, 0.0, %v715
          %v733 = vsel %vm620, 0.0, %v716
          %v734 = vsel %vm621, 0.0, %v717
          %v735 = vsel %vm622, 0.0, %v718
          %v736 = vsel %vm623, 0.0, %v719
          %v737 = vsel %vm624, 0.0, %v720
          %v738 = vsel %vm625, 0.0, %v721
          %v739 = vsel %vm626, 0.0, %v712
          %740 = vrot.lane.b32.xlu0 %v640, 127
          %v741 = vpop.permute.xlu0 %740
          %742 = vrot.lane.b32.xlu0 %v641, 127
          %v743 = vpop.permute.xlu0 %742
          %744 = vrot.lane.b32.xlu0 %v642, 127
          %v745 = vpop.permute.xlu0 %744
          %746 = vrot.lane.b32.xlu0 %v643, 127
          %v747 = vpop.permute.xlu0 %746
          %748 = vrot.lane.b32.xlu0 %v644, 127
          %v749 = vpop.permute.xlu0 %748
          %750 = vrot.lane.b32.xlu0 %v645, 127
          %v751 = vpop.permute.xlu0 %750
          %752 = vrot.lane.b32.xlu0 %v646, 127
          %v753 = vpop.permute.xlu0 %752
          %754 = vrot.lane.b32.xlu0 %v647, 127
          %v755 = vpop.permute.xlu0 %754
          %756 = vrot.lane.b32.xlu0 %v661, 127
          %v757 = vpop.permute.xlu0 %756
          %vm758 = vcmask 1039360
          %v759 = vsel %vm758, %v741, %v743
          %v760 = vsel %vm758, %v743, %v745
          %v761 = vsel %vm758, %v745, %v747
          %v762 = vsel %vm758, %v747, %v749
          %v763 = vsel %vm758, %v749, %v751
          %v764 = vsel %vm758, %v751, %v753
          %v765 = vsel %vm758, %v753, %v755
          %v766 = vsel %vm758, %v755, %v757
          %v776 = vsel %vm627, 0.0, %v759
          %v777 = vsel %vm628, 0.0, %v760
          %v778 = vsel %vm629, 0.0, %v761
          %v779 = vsel %vm630, 0.0, %v762
          %v780 = vsel %vm631, 0.0, %v763
          %v781 = vsel %vm632, 0.0, %v764
          %v782 = vsel %vm633, 0.0, %v765
          %v783 = vsel %vm634, 0.0, %v766
          %v784 = vsel %vm635, 0.0, %v757
          %v785 = vld [vmem:[%s1] sm:$0xff]
          %787 = vset.pattern.permute.xlu0 0
          %788 = vperm.xlu0 %787, %v785
          %v789 = vpop.permute.xlu0 %788
          %v791 = vperm.slane %v731, 0
          %v792 = vperm.slane %v732, 0
          %v793 = vperm.slane %v733, 0
          %v794 = vperm.slane %v734, 0
          %v795 = vperm.slane %v735, 0
          %v796 = vperm.slane %v736, 0
          %v797 = vperm.slane %v737, 0
          %v798 = vperm.slane %v738, 0
          %v799 = vperm.slane %v739, 0
          %v800 = vmul.f32 %v789, %v791
          %v801 = vmul.f32 %v789, %v792
          %v802 = vmul.f32 %v789, %v793
          %v803 = vmul.f32 %v789, %v794
          %v804 = vmul.f32 %v789, %v795
          %v805 = vmul.f32 %v789, %v796
          %v806 = vmul.f32 %v789, %v797
          %v807 = vmul.f32 %v789, %v798
          %v808 = vmul.f32 %v789, %v799
          %s809 = scalar_lea.vmem %s1, 8
          %v810 = vld [vmem:[%s809] sm:$0xff]
          %812 = vset.pattern.permute.xlu0 0
          %813 = vperm.xlu0 %812, %v810
          %v814 = vpop.permute.xlu0 %813
          %v816 = vmul.f32 %v814, %v640
          %v817 = vmul.f32 %v814, %v641
          %v818 = vmul.f32 %v814, %v642
          %v819 = vmul.f32 %v814, %v643
          %v820 = vmul.f32 %v814, %v644
          %v821 = vmul.f32 %v814, %v645
          %v822 = vmul.f32 %v814, %v646
          %v823 = vmul.f32 %v814, %v647
          %v824 = vmul.f32 %v814, %v648
          %v825 = vadd.f32 %v800, %v816
          %v826 = vadd.f32 %v801, %v817
          %v827 = vadd.f32 %v802, %v818
          %v828 = vadd.f32 %v803, %v819
          %v829 = vadd.f32 %v804, %v820
          %v830 = vadd.f32 %v805, %v821
          %v831 = vadd.f32 %v806, %v822
          %v832 = vadd.f32 %v807, %v823
          %v833 = vadd.f32 %v808, %v824
          %s834 = scalar_lea.vmem %s1, 16
          %v835 = vld [vmem:[%s834] sm:$0xff]
          %837 = vset.pattern.permute.xlu0 0
          %838 = vperm.xlu0 %837, %v835
          %v839 = vpop.permute.xlu0 %838
          %v841 = vperm.slane %v776, 0
          %v842 = vperm.slane %v777, 0
          %v843 = vperm.slane %v778, 0
          %v844 = vperm.slane %v779, 0
          %v845 = vperm.slane %v780, 0
          %v846 = vperm.slane %v781, 0
          %v847 = vperm.slane %v782, 0
          %v848 = vperm.slane %v783, 0
          %v849 = vperm.slane %v784, 0
          %v850 = vmul.f32 %v839, %v841
          %v851 = vmul.f32 %v839, %v842
          %v852 = vmul.f32 %v839, %v843
          %v853 = vmul.f32 %v839, %v844
          %v854 = vmul.f32 %v839, %v845
          %v855 = vmul.f32 %v839, %v846
          %v856 = vmul.f32 %v839, %v847
          %v857 = vmul.f32 %v839, %v848
          %v858 = vmul.f32 %v839, %v849
          %v859 = vadd.f32 %v825, %v850
          %v860 = vadd.f32 %v826, %v851
          %v861 = vadd.f32 %v827, %v852
          %v862 = vadd.f32 %v828, %v853
          %v863 = vadd.f32 %v829, %v854
          %v864 = vadd.f32 %v830, %v855
          %v865 = vadd.f32 %v831, %v856
          %v866 = vadd.f32 %v832, %v857
          %v867 = vadd.f32 %v833, %v858
          %v868 = vld [vmem:[%s3] sm:$0xff]
          %870 = vset.pattern.permute.xlu0 0
          %871 = vperm.xlu0 %870, %v868
          %v872 = vpop.permute.xlu0 %871
          %v874 = vadd.f32 %v859, %v872
          %v875 = vadd.f32 %v860, %v872
          %v876 = vadd.f32 %v861, %v872
          %v877 = vadd.f32 %v862, %v872
          %v878 = vadd.f32 %v863, %v872
          %v879 = vadd.f32 %v864, %v872
          %v880 = vadd.f32 %v865, %v872
          %v881 = vadd.f32 %v866, %v872
          %v882 = vadd.f32 %v867, %v872
          %v883 = vadd.f32 %v874, %v875
          %v884 = vadd.f32 %v883, %v876
          %v885 = vadd.f32 %v884, %v877
          %v886 = vadd.f32 %v885, %v878
          %v887 = vadd.f32 %v886, %v879
          %v888 = vadd.f32 %v887, %v880
          %v889 = vadd.f32 %v888, %v881
          %vm890 = vcmask 523264
          %v891 = vsel %vm890, %v882, 0.0
          %v892 = vadd.f32 %v889, %v891
          %893 = vadd.xlane.f32.xlu0 %v892
          %v894 = vpop.xlane.xlu0 %893
          %v895 = vmul.f32 %v894, 0.00091911765
          %v896 = vmul.f32 %v874, %v874
          %v897 = vmul.f32 %v875, %v875
          %v898 = vmul.f32 %v876, %v876
          %v899 = vmul.f32 %v877, %v877
          %v900 = vmul.f32 %v878, %v878
          %v901 = vmul.f32 %v879, %v879
          %v902 = vmul.f32 %v880, %v880
          %v903 = vmul.f32 %v881, %v881
          %v904 = vmul.f32 %v882, %v882
          %v905 = vadd.f32 %v896, %v897
          %v906 = vadd.f32 %v905, %v898
          %v907 = vadd.f32 %v906, %v899
          %v908 = vadd.f32 %v907, %v900
          %v909 = vadd.f32 %v908, %v901
          %v910 = vadd.f32 %v909, %v902
          %v911 = vadd.f32 %v910, %v903
          %v912 = vsel %vm890, %v904, 0.0
          %v913 = vadd.f32 %v911, %v912
          %914 = vadd.xlane.f32.xlu0 %v913
          %v915 = vpop.xlane.xlu0 %914
          %v916 = vmul.f32 %v915, 0.00091911765
          %v917 = vmul.f32 %v895, %v895
          %v918 = vsub.f32 %v916, %v917
          %v919 = vsub.f32 %v874, %v895
          %v920 = vsub.f32 %v875, %v895
          %v921 = vsub.f32 %v876, %v895
          %v922 = vsub.f32 %v877, %v895
          %v923 = vsub.f32 %v878, %v895
          %v924 = vsub.f32 %v879, %v895
          %v925 = vsub.f32 %v880, %v895
          %v926 = vsub.f32 %v881, %v895
          %v927 = vsub.f32 %v882, %v895
          %v928 = vadd.f32 %v918, 1e-05
          %v929 = vrsqrt.pop %v928
          %v930 = vmul.f32 %v929, %v928
          %v931 = vmul.f32 %v930, %v929
          %v932 = vmul.f32 0.5, %v931
          %v933 = vsub.f32 1.5, %v932
          %v934 = vmul.f32 %v929, %v933
          %vm935 = vweird.f32 %v928
          %vm936 = vweird.f32 %v929
          %vm937 = vmor %vm935, %vm936
          %v938 = vsel %vm937, %v929, %v934
          %v939 = vmul.f32 %v919, %v938
          %v940 = vmul.f32 %v920, %v938
          %v941 = vmul.f32 %v921, %v938
          %v942 = vmul.f32 %v922, %v938
          %v943 = vmul.f32 %v923, %v938
          %v944 = vmul.f32 %v924, %v938
          %v945 = vmul.f32 %v925, %v938
          %v946 = vmul.f32 %v926, %v938
          %v947 = vmul.f32 %v927, %v938
          %948 = vset.pattern.permute.xlu0 1
          %949 = vperm.xlu0 %948, %v868
          %v950 = vpop.permute.xlu0 %949
          %v952 = vmul.f32 %v939, %v950
          %v953 = vmul.f32 %v940, %v950
          %v954 = vmul.f32 %v941, %v950
          %v955 = vmul.f32 %v942, %v950
          %v956 = vmul.f32 %v943, %v950
          %v957 = vmul.f32 %v944, %v950
          %v958 = vmul.f32 %v945, %v950
          %v959 = vmul.f32 %v946, %v950
          %v960 = vmul.f32 %v947, %v950
          %961 = vset.pattern.permute.xlu0 2
          %962 = vperm.xlu0 %961, %v868
          %v963 = vpop.permute.xlu0 %962
          %v965 = vadd.f32 %v952, %v963
          %v966 = vadd.f32 %v953, %v963
          %v967 = vadd.f32 %v954, %v963
          %v968 = vadd.f32 %v955, %v963
          %v969 = vadd.f32 %v956, %v963
          %v970 = vadd.f32 %v957, %v963
          %v971 = vadd.f32 %v958, %v963
          %v972 = vadd.f32 %v959, %v963
          %v973 = vadd.f32 %v960, %v963
          %v974 = vmax.f32 %v965, 0.0
          %v975 = vmax.f32 %v966, 0.0
          %v976 = vmax.f32 %v967, 0.0
          %v977 = vmax.f32 %v968, 0.0
          %v978 = vmax.f32 %v969, 0.0
          %v979 = vmax.f32 %v970, 0.0
          %v980 = vmax.f32 %v971, 0.0
          %v981 = vmax.f32 %v972, 0.0
          %v982 = vmax.f32 %v973, 0.0
          %983 = vrot.lane.b32.xlu0 %v974, 64
          %v984 = vpop.permute.xlu0 %983
          %v985 = vsel %vm658, %v984, %v982
          %986 = vrot.lane.b32.xlu0 %v975, 64
          %v987 = vpop.permute.xlu0 %986
          %988 = vrot.lane.b32.xlu0 %v976, 64
          %v989 = vpop.permute.xlu0 %988
          %990 = vrot.lane.b32.xlu0 %v977, 64
          %v991 = vpop.permute.xlu0 %990
          %992 = vrot.lane.b32.xlu0 %v978, 64
          %v993 = vpop.permute.xlu0 %992
          %994 = vrot.lane.b32.xlu0 %v979, 64
          %v995 = vpop.permute.xlu0 %994
          %996 = vrot.lane.b32.xlu0 %v980, 64
          %v997 = vpop.permute.xlu0 %996
          %998 = vrot.lane.b32.xlu0 %v981, 64
          %v999 = vpop.permute.xlu0 %998
          %1000 = vrot.lane.b32.xlu0 %v985, 64
          %v1001 = vpop.permute.xlu0 %1000
          %v1002 = vsel %vm658, %v987, %v984
          %v1003 = vsel %vm658, %v989, %v987
          %v1004 = vsel %vm658, %v991, %v989
          %v1005 = vsel %vm658, %v993, %v991
          %v1006 = vsel %vm658, %v995, %v993
          %v1007 = vsel %vm658, %v997, %v995
          %v1008 = vsel %vm658, %v999, %v997
          %v1009 = vsel %vm658, %v1001, %v999
          %v1010 = vsel %vm618, 1, 0
          %v1011 = vsel %vm619, 1, 0
          %v1012 = vsel %vm620, 1, 0
          %v1013 = vsel %vm621, 1, 0
          %v1014 = vsel %vm622, 1, 0
          %v1015 = vsel %vm623, 1, 0
          %v1016 = vsel %vm624, 1, 0
          %v1017 = vsel %vm625, 1, 0
          %v1018 = vsel %vm626, 1, 0
          %vm1019 = vcmp.eq.s32.totalorder %v1010, 1
          %vm1020 = vcmp.eq.s32.totalorder %v1011, 1
          %vm1021 = vcmp.eq.s32.totalorder %v1012, 1
          %vm1022 = vcmp.eq.s32.totalorder %v1013, 1
          %vm1023 = vcmp.eq.s32.totalorder %v1014, 1
          %vm1024 = vcmp.eq.s32.totalorder %v1015, 1
          %vm1025 = vcmp.eq.s32.totalorder %v1016, 1
          %vm1026 = vcmp.eq.s32.totalorder %v1017, 1
          %vm1027 = vcmp.eq.s32.totalorder %v1018, 1
          %1037 = vrot.lane.b32.xlu0 %v985, 65
          %v1038 = vpop.permute.xlu0 %1037
          %1039 = vrot.lane.b32.xlu0 %v1002, 65
          %v1040 = vpop.permute.xlu0 %1039
          %1041 = vrot.lane.b32.xlu0 %v1003, 65
          %v1042 = vpop.permute.xlu0 %1041
          %1043 = vrot.lane.b32.xlu0 %v1004, 65
          %v1044 = vpop.permute.xlu0 %1043
          %1045 = vrot.lane.b32.xlu0 %v1005, 65
          %v1046 = vpop.permute.xlu0 %1045
          %1047 = vrot.lane.b32.xlu0 %v1006, 65
          %v1048 = vpop.permute.xlu0 %1047
          %1049 = vrot.lane.b32.xlu0 %v1007, 65
          %v1050 = vpop.permute.xlu0 %1049
          %1051 = vrot.lane.b32.xlu0 %v1008, 65
          %v1052 = vpop.permute.xlu0 %1051
          %1053 = vrot.lane.b32.xlu0 %v1009, 65
          %v1054 = vpop.permute.xlu0 %1053
          %v1055 = vsel %vm713, %v1038, %v1040
          %v1056 = vsel %vm713, %v1040, %v1042
          %v1057 = vsel %vm713, %v1042, %v1044
          %v1058 = vsel %vm713, %v1044, %v1046
          %v1059 = vsel %vm713, %v1046, %v1048
          %v1060 = vsel %vm713, %v1048, %v1050
          %v1061 = vsel %vm713, %v1050, %v1052
          %v1062 = vsel %vm713, %v1052, %v1054
          %v1072 = vsel %vm1019, 0.0, %v1055
          %v1073 = vsel %vm1020, 0.0, %v1056
          %v1074 = vsel %vm1021, 0.0, %v1057
          %v1075 = vsel %vm1022, 0.0, %v1058
          %v1076 = vsel %vm1023, 0.0, %v1059
          %v1077 = vsel %vm1024, 0.0, %v1060
          %v1078 = vsel %vm1025, 0.0, %v1061
          %v1079 = vsel %vm1026, 0.0, %v1062
          %v1080 = vsel %vm1027, 0.0, %v1054
          %v1081 = vsel %vm627, 1, 0
          %v1082 = vsel %vm628, 1, 0
          %v1083 = vsel %vm629, 1, 0
          %v1084 = vsel %vm630, 1, 0
          %v1085 = vsel %vm631, 1, 0
          %v1086 = vsel %vm632, 1, 0
          %v1087 = vsel %vm633, 1, 0
          %v1088 = vsel %vm634, 1, 0
          %v1089 = vsel %vm635, 1, 0
          %vm1090 = vcmp.eq.s32.totalorder %v1081, 1
          %vm1091 = vcmp.eq.s32.totalorder %v1082, 1
          %vm1092 = vcmp.eq.s32.totalorder %v1083, 1
          %vm1093 = vcmp.eq.s32.totalorder %v1084, 1
          %vm1094 = vcmp.eq.s32.totalorder %v1085, 1
          %vm1095 = vcmp.eq.s32.totalorder %v1086, 1
          %vm1096 = vcmp.eq.s32.totalorder %v1087, 1
          %vm1097 = vcmp.eq.s32.totalorder %v1088, 1
          %vm1098 = vcmp.eq.s32.totalorder %v1089, 1
          %1107 = vrot.lane.b32.xlu0 %v974, 127
          %v1108 = vpop.permute.xlu0 %1107
          %1109 = vrot.lane.b32.xlu0 %v975, 127
          %v1110 = vpop.permute.xlu0 %1109
          %1111 = vrot.lane.b32.xlu0 %v976, 127
          %v1112 = vpop.permute.xlu0 %1111
          %1113 = vrot.lane.b32.xlu0 %v977, 127
          %v1114 = vpop.permute.xlu0 %1113
          %1115 = vrot.lane.b32.xlu0 %v978, 127
          %v1116 = vpop.permute.xlu0 %1115
          %1117 = vrot.lane.b32.xlu0 %v979, 127
          %v1118 = vpop.permute.xlu0 %1117
          %1119 = vrot.lane.b32.xlu0 %v980, 127
          %v1120 = vpop.permute.xlu0 %1119
          %1121 = vrot.lane.b32.xlu0 %v981, 127
          %v1122 = vpop.permute.xlu0 %1121
          %1123 = vrot.lane.b32.xlu0 %v985, 127
          %v1124 = vpop.permute.xlu0 %1123
          %v1125 = vsel %vm758, %v1108, %v1110
          %v1126 = vsel %vm758, %v1110, %v1112
          %v1127 = vsel %vm758, %v1112, %v1114
          %v1128 = vsel %vm758, %v1114, %v1116
          %v1129 = vsel %vm758, %v1116, %v1118
          %v1130 = vsel %vm758, %v1118, %v1120
          %v1131 = vsel %vm758, %v1120, %v1122
          %v1132 = vsel %vm758, %v1122, %v1124
          %v1142 = vsel %vm1090, 0.0, %v1125
          %v1143 = vsel %vm1091, 0.0, %v1126
          %v1144 = vsel %vm1092, 0.0, %v1127
          %v1145 = vsel %vm1093, 0.0, %v1128
          %v1146 = vsel %vm1094, 0.0, %v1129
          %v1147 = vsel %vm1095, 0.0, %v1130
          %v1148 = vsel %vm1096, 0.0, %v1131
          %v1149 = vsel %vm1097, 0.0, %v1132
          %v1150 = vsel %vm1098, 0.0, %v1124
          %v1151 = vld [vmem:[%s2] sm:$0xff]
          %1152 = vset.pattern.permute.xlu0 3
          %1153 = vperm.xlu0 %1152, %v868
          %v1154 = vpop.permute.xlu0 %1153
          %vm1156 = vcmask 195584
          %v1158 = vsel %vm1156, %v1151, 0
          %1160 = vmatpush.msra.mxu0 0.0
          %1161 = vmatpush.msra.mxu0 0.0
          %1162 = vmatpush.msra.mxu0 0.0
          %1163 = vmatpush.msra.mxu0 0.0
          %1164 = vmatpush.msra.mxu0 0.0
          %1165 = vmatpush.msra.mxu0 0.0
          %1166 = vmatpush.msra.mxu0 0.0
          %1167 = vmatpush.msra.mxu0 0.0
          %1168 = vmatpush.msra.mxu0 0.0
          %1169 = vmatpush.msra.mxu0 0.0
          %1170 = vmatpush.msra.mxu0 0.0
          %1171 = vmatpush.msra.mxu0 0.0
          %1172 = vmatpush.msra.mxu0 0.0
          %1173 = vmatpush.msra.mxu0 %v1142
          %1174 = vmatpush.msra.mxu0 %v974
          %1175 = vmatpush.msra.mxu0 %v1072
          %1176 = vmatmul.f32.gmra.mxu0 %v1158
          %v1177 = vpop.f32.mrf.mxu0
          %v1178 = vadd.f32 %v1154, %v1177
          %1179 = vdwg.mxu0
          %1180 = vmatpush.msra.mxu0 0.0
          %1181 = vmatpush.msra.mxu0 0.0
          %1182 = vmatpush.msra.mxu0 0.0
          %1183 = vmatpush.msra.mxu0 0.0
          %1184 = vmatpush.msra.mxu0 0.0
          %1185 = vmatpush.msra.mxu0 0.0
          %1186 = vmatpush.msra.mxu0 0.0
          %1187 = vmatpush.msra.mxu0 0.0
          %1188 = vmatpush.msra.mxu0 0.0
          %1189 = vmatpush.msra.mxu0 0.0
          %1190 = vmatpush.msra.mxu0 0.0
          %1191 = vmatpush.msra.mxu0 0.0
          %1192 = vmatpush.msra.mxu0 0.0
          %1193 = vmatpush.msra.mxu0 %v1143
          %1194 = vmatpush.msra.mxu0 %v975
          %1195 = vmatpush.msra.mxu0 %v1073
          %1196 = vmatmul.f32.gmra.mxu0 %v1158
          %v1197 = vpop.f32.mrf.mxu0
          %v1198 = vadd.f32 %v1154, %v1197
          %1199 = vdwg.mxu0
          %1200 = vmatpush.msra.mxu0 0.0
          %1201 = vmatpush.msra.mxu0 0.0
          %1202 = vmatpush.msra.mxu0 0.0
          %1203 = vmatpush.msra.mxu0 0.0
          %1204 = vmatpush.msra.mxu0 0.0
          %1205 = vmatpush.msra.mxu0 0.0
          %1206 = vmatpush.msra.mxu0 0.0
          %1207 = vmatpush.msra.mxu0 0.0
          %1208 = vmatpush.msra.mxu0 0.0
          %1209 = vmatpush.msra.mxu0 0.0
          %1210 = vmatpush.msra.mxu0 0.0
          %1211 = vmatpush.msra.mxu0 0.0
          %1212 = vmatpush.msra.mxu0 0.0
          %1213 = vmatpush.msra.mxu0 %v1144
          %1214 = vmatpush.msra.mxu0 %v976
          %1215 = vmatpush.msra.mxu0 %v1074
          %1216 = vmatmul.f32.gmra.mxu0 %v1158
          %v1217 = vpop.f32.mrf.mxu0
          %v1218 = vadd.f32 %v1154, %v1217
          %1219 = vdwg.mxu0
          %1220 = vmatpush.msra.mxu0 0.0
          %1221 = vmatpush.msra.mxu0 0.0
          %1222 = vmatpush.msra.mxu0 0.0
          %1223 = vmatpush.msra.mxu0 0.0
          %1224 = vmatpush.msra.mxu0 0.0
          %1225 = vmatpush.msra.mxu0 0.0
          %1226 = vmatpush.msra.mxu0 0.0
          %1227 = vmatpush.msra.mxu0 0.0
          %1228 = vmatpush.msra.mxu0 0.0
          %1229 = vmatpush.msra.mxu0 0.0
          %1230 = vmatpush.msra.mxu0 0.0
          %1231 = vmatpush.msra.mxu0 0.0
          %1232 = vmatpush.msra.mxu0 0.0
          %1233 = vmatpush.msra.mxu0 %v1145
          %1234 = vmatpush.msra.mxu0 %v977
          %1235 = vmatpush.msra.mxu0 %v1075
          %1236 = vmatmul.f32.gmra.mxu0 %v1158
          %v1237 = vpop.f32.mrf.mxu0
          %v1238 = vadd.f32 %v1154, %v1237
          %1239 = vdwg.mxu0
          %1240 = vmatpush.msra.mxu0 0.0
          %1241 = vmatpush.msra.mxu0 0.0
          %1242 = vmatpush.msra.mxu0 0.0
          %1243 = vmatpush.msra.mxu0 0.0
          %1244 = vmatpush.msra.mxu0 0.0
          %1245 = vmatpush.msra.mxu0 0.0
          %1246 = vmatpush.msra.mxu0 0.0
          %1247 = vmatpush.msra.mxu0 0.0
          %1248 = vmatpush.msra.mxu0 0.0
          %1249 = vmatpush.msra.mxu0 0.0
          %1250 = vmatpush.msra.mxu0 0.0
          %1251 = vmatpush.msra.mxu0 0.0
          %1252 = vmatpush.msra.mxu0 0.0
          %1253 = vmatpush.msra.mxu0 %v1146
          %1254 = vmatpush.msra.mxu0 %v978
          %1255 = vmatpush.msra.mxu0 %v1076
          %1256 = vmatmul.f32.gmra.mxu0 %v1158
          %v1257 = vpop.f32.mrf.mxu0
          %v1258 = vadd.f32 %v1154, %v1257
          %1259 = vdwg.mxu0
          %1260 = vmatpush.msra.mxu0 0.0
          %1261 = vmatpush.msra.mxu0 0.0
          %1262 = vmatpush.msra.mxu0 0.0
          %1263 = vmatpush.msra.mxu0 0.0
          %1264 = vmatpush.msra.mxu0 0.0
          %1265 = vmatpush.msra.mxu0 0.0
          %1266 = vmatpush.msra.mxu0 0.0
          %1267 = vmatpush.msra.mxu0 0.0
          %1268 = vmatpush.msra.mxu0 0.0
          %1269 = vmatpush.msra.mxu0 0.0
          %1270 = vmatpush.msra.mxu0 0.0
          %1271 = vmatpush.msra.mxu0 0.0
          %1272 = vmatpush.msra.mxu0 0.0
          %1273 = vmatpush.msra.mxu0 %v1147
          %1274 = vmatpush.msra.mxu0 %v979
          %1275 = vmatpush.msra.mxu0 %v1077
          %1276 = vmatmul.f32.gmra.mxu0 %v1158
          %v1277 = vpop.f32.mrf.mxu0
          %v1278 = vadd.f32 %v1154, %v1277
          %1279 = vdwg.mxu0
          %1280 = vmatpush.msra.mxu0 0.0
          %1281 = vmatpush.msra.mxu0 0.0
          %1282 = vmatpush.msra.mxu0 0.0
          %1283 = vmatpush.msra.mxu0 0.0
          %1284 = vmatpush.msra.mxu0 0.0
          %1285 = vmatpush.msra.mxu0 0.0
          %1286 = vmatpush.msra.mxu0 0.0
          %1287 = vmatpush.msra.mxu0 0.0
          %1288 = vmatpush.msra.mxu0 0.0
          %1289 = vmatpush.msra.mxu0 0.0
          %1290 = vmatpush.msra.mxu0 0.0
          %1291 = vmatpush.msra.mxu0 0.0
          %1292 = vmatpush.msra.mxu0 0.0
          %1293 = vmatpush.msra.mxu0 %v1148
          %1294 = vmatpush.msra.mxu0 %v980
          %1295 = vmatpush.msra.mxu0 %v1078
          %1296 = vmatmul.f32.gmra.mxu0 %v1158
          %v1297 = vpop.f32.mrf.mxu0
          %v1298 = vadd.f32 %v1154, %v1297
          %1299 = vdwg.mxu0
          %1300 = vmatpush.msra.mxu0 0.0
          %1301 = vmatpush.msra.mxu0 0.0
          %1302 = vmatpush.msra.mxu0 0.0
          %1303 = vmatpush.msra.mxu0 0.0
          %1304 = vmatpush.msra.mxu0 0.0
          %1305 = vmatpush.msra.mxu0 0.0
          %1306 = vmatpush.msra.mxu0 0.0
          %1307 = vmatpush.msra.mxu0 0.0
          %1308 = vmatpush.msra.mxu0 0.0
          %1309 = vmatpush.msra.mxu0 0.0
          %1310 = vmatpush.msra.mxu0 0.0
          %1311 = vmatpush.msra.mxu0 0.0
          %1312 = vmatpush.msra.mxu0 0.0
          %1313 = vmatpush.msra.mxu0 %v1149
          %1314 = vmatpush.msra.mxu0 %v981
          %1315 = vmatpush.msra.mxu0 %v1079
          %1316 = vmatmul.f32.gmra.mxu0 %v1158
          %v1317 = vpop.f32.mrf.mxu0
          %v1318 = vadd.f32 %v1154, %v1317
          %1319 = vdwg.mxu0
          %1320 = vmatpush.msra.mxu0 0.0
          %1321 = vmatpush.msra.mxu0 0.0
          %1322 = vmatpush.msra.mxu0 0.0
          %1323 = vmatpush.msra.mxu0 0.0
          %1324 = vmatpush.msra.mxu0 0.0
          %1325 = vmatpush.msra.mxu0 0.0
          %1326 = vmatpush.msra.mxu0 0.0
          %1327 = vmatpush.msra.mxu0 0.0
          %1328 = vmatpush.msra.mxu0 0.0
          %1329 = vmatpush.msra.mxu0 0.0
          %1330 = vmatpush.msra.mxu0 0.0
          %1331 = vmatpush.msra.mxu0 0.0
          %1332 = vmatpush.msra.mxu0 0.0
          %1333 = vmatpush.msra.mxu0 %v1150
          %1334 = vmatpush.msra.mxu0 %v982
          %1335 = vmatpush.msra.mxu0 %v1080
          %1336 = vmatmul.f32.gmra.mxu0 %v1158
          %v1337 = vpop.f32.mrf.mxu0
          %v1338 = vadd.f32 %v1154, %v1337
          %1339 = vdwg.mxu0
          %v1340 = vadd.f32 %v1178, %v1198
          %v1341 = vadd.f32 %v1340, %v1218
          %v1342 = vadd.f32 %v1341, %v1238
          %v1343 = vadd.f32 %v1342, %v1258
          %v1344 = vadd.f32 %v1343, %v1278
          %v1345 = vadd.f32 %v1344, %v1298
          %v1346 = vadd.f32 %v1345, %v1318
          %v1347 = vsel %vm890, %v1338, 0.0
          %v1348 = vadd.f32 %v1346, %v1347
          %1349 = vadd.xlane.f32.xlu0 %v1348
          %v1350 = vpop.xlane.xlu0 %1349
          %v1351 = vmul.f32 %v1350, 0.00091911765
          %v1352 = vmul.f32 %v1178, %v1178
          %v1353 = vmul.f32 %v1198, %v1198
          %v1354 = vmul.f32 %v1218, %v1218
          %v1355 = vmul.f32 %v1238, %v1238
          %v1356 = vmul.f32 %v1258, %v1258
          %v1357 = vmul.f32 %v1278, %v1278
          %v1358 = vmul.f32 %v1298, %v1298
          %v1359 = vmul.f32 %v1318, %v1318
          %v1360 = vmul.f32 %v1338, %v1338
          %v1361 = vadd.f32 %v1352, %v1353
          %v1362 = vadd.f32 %v1361, %v1354
          %v1363 = vadd.f32 %v1362, %v1355
          %v1364 = vadd.f32 %v1363, %v1356
          %v1365 = vadd.f32 %v1364, %v1357
          %v1366 = vadd.f32 %v1365, %v1358
          %v1367 = vadd.f32 %v1366, %v1359
          %v1368 = vsel %vm890, %v1360, 0.0
          %v1369 = vadd.f32 %v1367, %v1368
          %1370 = vadd.xlane.f32.xlu0 %v1369
          %v1371 = vpop.xlane.xlu0 %1370
          %v1372 = vmul.f32 %v1371, 0.00091911765
          %v1373 = vmul.f32 %v1351, %v1351
          %v1374 = vsub.f32 %v1372, %v1373
          %v1375 = vsub.f32 %v1178, %v1351
          %v1376 = vsub.f32 %v1198, %v1351
          %v1377 = vsub.f32 %v1218, %v1351
          %v1378 = vsub.f32 %v1238, %v1351
          %v1379 = vsub.f32 %v1258, %v1351
          %v1380 = vsub.f32 %v1278, %v1351
          %v1381 = vsub.f32 %v1298, %v1351
          %v1382 = vsub.f32 %v1318, %v1351
          %v1383 = vsub.f32 %v1338, %v1351
          %v1384 = vadd.f32 %v1374, 1e-05
          %v1385 = vrsqrt.pop %v1384
          %v1386 = vmul.f32 %v1385, %v1384
          %v1387 = vmul.f32 %v1386, %v1385
          %v1388 = vmul.f32 0.5, %v1387
          %v1389 = vsub.f32 1.5, %v1388
          %v1390 = vmul.f32 %v1385, %v1389
          %vm1391 = vweird.f32 %v1384
          %vm1392 = vweird.f32 %v1385
          %vm1393 = vmor %vm1391, %vm1392
          %v1394 = vsel %vm1393, %v1385, %v1390
          %v1395 = vmul.f32 %v1375, %v1394
          %v1396 = vmul.f32 %v1376, %v1394
          %v1397 = vmul.f32 %v1377, %v1394
          %v1398 = vmul.f32 %v1378, %v1394
          %v1399 = vmul.f32 %v1379, %v1394
          %v1400 = vmul.f32 %v1380, %v1394
          %v1401 = vmul.f32 %v1381, %v1394
          %v1402 = vmul.f32 %v1382, %v1394
          %v1403 = vmul.f32 %v1383, %v1394
          %1404 = vset.pattern.permute.xlu0 4
          %1405 = vperm.xlu0 %1404, %v868
          %v1406 = vpop.permute.xlu0 %1405
          %v1408 = vmul.f32 %v1395, %v1406
          %v1409 = vmul.f32 %v1396, %v1406
          %v1410 = vmul.f32 %v1397, %v1406
          %v1411 = vmul.f32 %v1398, %v1406
          %v1412 = vmul.f32 %v1399, %v1406
          %v1413 = vmul.f32 %v1400, %v1406
          %v1414 = vmul.f32 %v1401, %v1406
          %v1415 = vmul.f32 %v1402, %v1406
          %v1416 = vmul.f32 %v1403, %v1406
          %1417 = vset.pattern.permute.xlu0 5
          %1418 = vperm.xlu0 %1417, %v868
          %v1419 = vpop.permute.xlu0 %1418
          %v1421 = vadd.f32 %v1408, %v1419
          %v1422 = vadd.f32 %v1409, %v1419
          %v1423 = vadd.f32 %v1410, %v1419
          %v1424 = vadd.f32 %v1411, %v1419
          %v1425 = vadd.f32 %v1412, %v1419
          %v1426 = vadd.f32 %v1413, %v1419
          %v1427 = vadd.f32 %v1414, %v1419
          %v1428 = vadd.f32 %v1415, %v1419
          %v1429 = vadd.f32 %v1416, %v1419
          %v1430 = vmax.f32 %v1421, 0.0
          %v1431 = vmax.f32 %v1422, 0.0
          %v1432 = vmax.f32 %v1423, 0.0
          %v1433 = vmax.f32 %v1424, 0.0
          %v1434 = vmax.f32 %v1425, 0.0
          %v1435 = vmax.f32 %v1426, 0.0
          %v1436 = vmax.f32 %v1427, 0.0
          %v1437 = vmax.f32 %v1428, 0.0
          %v1438 = vmax.f32 %v1429, 0.0
          %1439 = vrot.lane.b32.xlu0 %v1430, 64
          %v1440 = vpop.permute.xlu0 %1439
          %v1441 = vsel %vm658, %v1440, %v1438
          %1442 = vrot.lane.b32.xlu0 %v1431, 64
          %v1443 = vpop.permute.xlu0 %1442
          %1444 = vrot.lane.b32.xlu0 %v1432, 64
          %v1445 = vpop.permute.xlu0 %1444
          %1446 = vrot.lane.b32.xlu0 %v1433, 64
          %v1447 = vpop.permute.xlu0 %1446
          %1448 = vrot.lane.b32.xlu0 %v1434, 64
          %v1449 = vpop.permute.xlu0 %1448
          %1450 = vrot.lane.b32.xlu0 %v1435, 64
          %v1451 = vpop.permute.xlu0 %1450
          %1452 = vrot.lane.b32.xlu0 %v1436, 64
          %v1453 = vpop.permute.xlu0 %1452
          %1454 = vrot.lane.b32.xlu0 %v1437, 64
          %v1455 = vpop.permute.xlu0 %1454
          %1456 = vrot.lane.b32.xlu0 %v1441, 64
          %v1457 = vpop.permute.xlu0 %1456
          %v1458 = vsel %vm658, %v1443, %v1440
          %v1459 = vsel %vm658, %v1445, %v1443
          %v1460 = vsel %vm658, %v1447, %v1445
          %v1461 = vsel %vm658, %v1449, %v1447
          %v1462 = vsel %vm658, %v1451, %v1449
          %v1463 = vsel %vm658, %v1453, %v1451
          %v1464 = vsel %vm658, %v1455, %v1453
          %v1465 = vsel %vm658, %v1457, %v1455
          %1475 = vrot.lane.b32.xlu0 %v1441, 65
          %v1476 = vpop.permute.xlu0 %1475
          %1477 = vrot.lane.b32.xlu0 %v1458, 65
          %v1478 = vpop.permute.xlu0 %1477
          %1479 = vrot.lane.b32.xlu0 %v1459, 65
          %v1480 = vpop.permute.xlu0 %1479
          %1481 = vrot.lane.b32.xlu0 %v1460, 65
          %v1482 = vpop.permute.xlu0 %1481
          %1483 = vrot.lane.b32.xlu0 %v1461, 65
          %v1484 = vpop.permute.xlu0 %1483
          %1485 = vrot.lane.b32.xlu0 %v1462, 65
          %v1486 = vpop.permute.xlu0 %1485
          %1487 = vrot.lane.b32.xlu0 %v1463, 65
          %v1488 = vpop.permute.xlu0 %1487
          %1489 = vrot.lane.b32.xlu0 %v1464, 65
          %v1490 = vpop.permute.xlu0 %1489
          %1491 = vrot.lane.b32.xlu0 %v1465, 65
          %v1492 = vpop.permute.xlu0 %1491
          %v1493 = vsel %vm713, %v1476, %v1478
          %v1494 = vsel %vm713, %v1478, %v1480
          %v1495 = vsel %vm713, %v1480, %v1482
          %v1496 = vsel %vm713, %v1482, %v1484
          %v1497 = vsel %vm713, %v1484, %v1486
          %v1498 = vsel %vm713, %v1486, %v1488
          %v1499 = vsel %vm713, %v1488, %v1490
          %v1500 = vsel %vm713, %v1490, %v1492
          %v1510 = vsel %vm1019, 0.0, %v1493
          %v1511 = vsel %vm1020, 0.0, %v1494
          %v1512 = vsel %vm1021, 0.0, %v1495
          %v1513 = vsel %vm1022, 0.0, %v1496
          %v1514 = vsel %vm1023, 0.0, %v1497
          %v1515 = vsel %vm1024, 0.0, %v1498
          %v1516 = vsel %vm1025, 0.0, %v1499
          %v1517 = vsel %vm1026, 0.0, %v1500
          %v1518 = vsel %vm1027, 0.0, %v1492
          %1527 = vrot.lane.b32.xlu0 %v1430, 127
          %v1528 = vpop.permute.xlu0 %1527
          %1529 = vrot.lane.b32.xlu0 %v1431, 127
          %v1530 = vpop.permute.xlu0 %1529
          %1531 = vrot.lane.b32.xlu0 %v1432, 127
          %v1532 = vpop.permute.xlu0 %1531
          %1533 = vrot.lane.b32.xlu0 %v1433, 127
          %v1534 = vpop.permute.xlu0 %1533
          %1535 = vrot.lane.b32.xlu0 %v1434, 127
          %v1536 = vpop.permute.xlu0 %1535
          %1537 = vrot.lane.b32.xlu0 %v1435, 127
          %v1538 = vpop.permute.xlu0 %1537
          %1539 = vrot.lane.b32.xlu0 %v1436, 127
          %v1540 = vpop.permute.xlu0 %1539
          %1541 = vrot.lane.b32.xlu0 %v1437, 127
          %v1542 = vpop.permute.xlu0 %1541
          %1543 = vrot.lane.b32.xlu0 %v1441, 127
          %v1544 = vpop.permute.xlu0 %1543
          %v1545 = vsel %vm758, %v1528, %v1530
          %v1546 = vsel %vm758, %v1530, %v1532
          %v1547 = vsel %vm758, %v1532, %v1534
          %v1548 = vsel %vm758, %v1534, %v1536
          %v1549 = vsel %vm758, %v1536, %v1538
          %v1550 = vsel %vm758, %v1538, %v1540
          %v1551 = vsel %vm758, %v1540, %v1542
          %v1552 = vsel %vm758, %v1542, %v1544
          %v1562 = vsel %vm1090, 0.0, %v1545
          %v1563 = vsel %vm1091, 0.0, %v1546
          %v1564 = vsel %vm1092, 0.0, %v1547
          %v1565 = vsel %vm1093, 0.0, %v1548
          %v1566 = vsel %vm1094, 0.0, %v1549
          %v1567 = vsel %vm1095, 0.0, %v1550
          %v1568 = vsel %vm1096, 0.0, %v1551
          %v1569 = vsel %vm1097, 0.0, %v1552
          %v1570 = vsel %vm1098, 0.0, %v1544
          %s1571 = scalar_lea.vmem %s2, 8
          %v1572 = vld [vmem:[%s1571] sm:$0xff]
          %1573 = vset.pattern.permute.xlu0 6
          %1574 = vperm.xlu0 %1573, %v868
          %v1575 = vpop.permute.xlu0 %1574
          %v1578 = vsel %vm1156, %v1572, 0
          %1580 = vmatpush.msra.mxu0 0.0
          %1581 = vmatpush.msra.mxu0 0.0
          %1582 = vmatpush.msra.mxu0 0.0
          %1583 = vmatpush.msra.mxu0 0.0
          %1584 = vmatpush.msra.mxu0 0.0
          %1585 = vmatpush.msra.mxu0 0.0
          %1586 = vmatpush.msra.mxu0 0.0
          %1587 = vmatpush.msra.mxu0 0.0
          %1588 = vmatpush.msra.mxu0 0.0
          %1589 = vmatpush.msra.mxu0 0.0
          %1590 = vmatpush.msra.mxu0 0.0
          %1591 = vmatpush.msra.mxu0 0.0
          %1592 = vmatpush.msra.mxu0 0.0
          %1593 = vmatpush.msra.mxu0 %v1562
          %1594 = vmatpush.msra.mxu0 %v1430
          %1595 = vmatpush.msra.mxu0 %v1510
          %1596 = vmatmul.f32.gmra.mxu0 %v1578
          %v1597 = vpop.f32.mrf.mxu0
          %v1598 = vadd.f32 %v1575, %v1597
          %1599 = vdwg.mxu0
          %1600 = vmatpush.msra.mxu0 0.0
          %1601 = vmatpush.msra.mxu0 0.0
          %1602 = vmatpush.msra.mxu0 0.0
          %1603 = vmatpush.msra.mxu0 0.0
          %1604 = vmatpush.msra.mxu0 0.0
          %1605 = vmatpush.msra.mxu0 0.0
          %1606 = vmatpush.msra.mxu0 0.0
          %1607 = vmatpush.msra.mxu0 0.0
          %1608 = vmatpush.msra.mxu0 0.0
          %1609 = vmatpush.msra.mxu0 0.0
          %1610 = vmatpush.msra.mxu0 0.0
          %1611 = vmatpush.msra.mxu0 0.0
          %1612 = vmatpush.msra.mxu0 0.0
          %1613 = vmatpush.msra.mxu0 %v1563
          %1614 = vmatpush.msra.mxu0 %v1431
          %1615 = vmatpush.msra.mxu0 %v1511
          %1616 = vmatmul.f32.gmra.mxu0 %v1578
          %v1617 = vpop.f32.mrf.mxu0
          %v1618 = vadd.f32 %v1575, %v1617
          %1619 = vdwg.mxu0
          %1620 = vmatpush.msra.mxu0 0.0
          %1621 = vmatpush.msra.mxu0 0.0
          %1622 = vmatpush.msra.mxu0 0.0
          %1623 = vmatpush.msra.mxu0 0.0
          %1624 = vmatpush.msra.mxu0 0.0
          %1625 = vmatpush.msra.mxu0 0.0
          %1626 = vmatpush.msra.mxu0 0.0
          %1627 = vmatpush.msra.mxu0 0.0
          %1628 = vmatpush.msra.mxu0 0.0
          %1629 = vmatpush.msra.mxu0 0.0
          %1630 = vmatpush.msra.mxu0 0.0
          %1631 = vmatpush.msra.mxu0 0.0
          %1632 = vmatpush.msra.mxu0 0.0
          %1633 = vmatpush.msra.mxu0 %v1564
          %1634 = vmatpush.msra.mxu0 %v1432
          %1635 = vmatpush.msra.mxu0 %v1512
          %1636 = vmatmul.f32.gmra.mxu0 %v1578
          %v1637 = vpop.f32.mrf.mxu0
          %v1638 = vadd.f32 %v1575, %v1637
          %1639 = vdwg.mxu0
          %1640 = vmatpush.msra.mxu0 0.0
          %1641 = vmatpush.msra.mxu0 0.0
          %1642 = vmatpush.msra.mxu0 0.0
          %1643 = vmatpush.msra.mxu0 0.0
          %1644 = vmatpush.msra.mxu0 0.0
          %1645 = vmatpush.msra.mxu0 0.0
          %1646 = vmatpush.msra.mxu0 0.0
          %1647 = vmatpush.msra.mxu0 0.0
          %1648 = vmatpush.msra.mxu0 0.0
          %1649 = vmatpush.msra.mxu0 0.0
          %1650 = vmatpush.msra.mxu0 0.0
          %1651 = vmatpush.msra.mxu0 0.0
          %1652 = vmatpush.msra.mxu0 0.0
          %1653 = vmatpush.msra.mxu0 %v1565
          %1654 = vmatpush.msra.mxu0 %v1433
          %1655 = vmatpush.msra.mxu0 %v1513
          %1656 = vmatmul.f32.gmra.mxu0 %v1578
          %v1657 = vpop.f32.mrf.mxu0
          %v1658 = vadd.f32 %v1575, %v1657
          %1659 = vdwg.mxu0
          %1660 = vmatpush.msra.mxu0 0.0
          %1661 = vmatpush.msra.mxu0 0.0
          %1662 = vmatpush.msra.mxu0 0.0
          %1663 = vmatpush.msra.mxu0 0.0
          %1664 = vmatpush.msra.mxu0 0.0
          %1665 = vmatpush.msra.mxu0 0.0
          %1666 = vmatpush.msra.mxu0 0.0
          %1667 = vmatpush.msra.mxu0 0.0
          %1668 = vmatpush.msra.mxu0 0.0
          %1669 = vmatpush.msra.mxu0 0.0
          %1670 = vmatpush.msra.mxu0 0.0
          %1671 = vmatpush.msra.mxu0 0.0
          %1672 = vmatpush.msra.mxu0 0.0
          %1673 = vmatpush.msra.mxu0 %v1566
          %1674 = vmatpush.msra.mxu0 %v1434
          %1675 = vmatpush.msra.mxu0 %v1514
          %1676 = vmatmul.f32.gmra.mxu0 %v1578
          %v1677 = vpop.f32.mrf.mxu0
          %v1678 = vadd.f32 %v1575, %v1677
          %1679 = vdwg.mxu0
          %1680 = vmatpush.msra.mxu0 0.0
          %1681 = vmatpush.msra.mxu0 0.0
          %1682 = vmatpush.msra.mxu0 0.0
          %1683 = vmatpush.msra.mxu0 0.0
          %1684 = vmatpush.msra.mxu0 0.0
          %1685 = vmatpush.msra.mxu0 0.0
          %1686 = vmatpush.msra.mxu0 0.0
          %1687 = vmatpush.msra.mxu0 0.0
          %1688 = vmatpush.msra.mxu0 0.0
          %1689 = vmatpush.msra.mxu0 0.0
          %1690 = vmatpush.msra.mxu0 0.0
          %1691 = vmatpush.msra.mxu0 0.0
          %1692 = vmatpush.msra.mxu0 0.0
          %1693 = vmatpush.msra.mxu0 %v1567
          %1694 = vmatpush.msra.mxu0 %v1435
          %1695 = vmatpush.msra.mxu0 %v1515
          %1696 = vmatmul.f32.gmra.mxu0 %v1578
          %v1697 = vpop.f32.mrf.mxu0
          %v1698 = vadd.f32 %v1575, %v1697
          %1699 = vdwg.mxu0
          %1700 = vmatpush.msra.mxu0 0.0
          %1701 = vmatpush.msra.mxu0 0.0
          %1702 = vmatpush.msra.mxu0 0.0
          %1703 = vmatpush.msra.mxu0 0.0
          %1704 = vmatpush.msra.mxu0 0.0
          %1705 = vmatpush.msra.mxu0 0.0
          %1706 = vmatpush.msra.mxu0 0.0
          %1707 = vmatpush.msra.mxu0 0.0
          %1708 = vmatpush.msra.mxu0 0.0
          %1709 = vmatpush.msra.mxu0 0.0
          %1710 = vmatpush.msra.mxu0 0.0
          %1711 = vmatpush.msra.mxu0 0.0
          %1712 = vmatpush.msra.mxu0 0.0
          %1713 = vmatpush.msra.mxu0 %v1568
          %1714 = vmatpush.msra.mxu0 %v1436
          %1715 = vmatpush.msra.mxu0 %v1516
          %1716 = vmatmul.f32.gmra.mxu0 %v1578
          %v1717 = vpop.f32.mrf.mxu0
          %v1718 = vadd.f32 %v1575, %v1717
          %1719 = vdwg.mxu0
          %1720 = vmatpush.msra.mxu0 0.0
          %1721 = vmatpush.msra.mxu0 0.0
          %1722 = vmatpush.msra.mxu0 0.0
          %1723 = vmatpush.msra.mxu0 0.0
          %1724 = vmatpush.msra.mxu0 0.0
          %1725 = vmatpush.msra.mxu0 0.0
          %1726 = vmatpush.msra.mxu0 0.0
          %1727 = vmatpush.msra.mxu0 0.0
          %1728 = vmatpush.msra.mxu0 0.0
          %1729 = vmatpush.msra.mxu0 0.0
          %1730 = vmatpush.msra.mxu0 0.0
          %1731 = vmatpush.msra.mxu0 0.0
          %1732 = vmatpush.msra.mxu0 0.0
          %1733 = vmatpush.msra.mxu0 %v1569
          %1734 = vmatpush.msra.mxu0 %v1437
          %1735 = vmatpush.msra.mxu0 %v1517
          %1736 = vmatmul.f32.gmra.mxu0 %v1578
          %v1737 = vpop.f32.mrf.mxu0
          %v1738 = vadd.f32 %v1575, %v1737
          %1739 = vdwg.mxu0
          %1740 = vmatpush.msra.mxu0 0.0
          %1741 = vmatpush.msra.mxu0 0.0
          %1742 = vmatpush.msra.mxu0 0.0
          %1743 = vmatpush.msra.mxu0 0.0
          %1744 = vmatpush.msra.mxu0 0.0
          %1745 = vmatpush.msra.mxu0 0.0
          %1746 = vmatpush.msra.mxu0 0.0
          %1747 = vmatpush.msra.mxu0 0.0
          %1748 = vmatpush.msra.mxu0 0.0
          %1749 = vmatpush.msra.mxu0 0.0
          %1750 = vmatpush.msra.mxu0 0.0
          %1751 = vmatpush.msra.mxu0 0.0
          %1752 = vmatpush.msra.mxu0 0.0
          %1753 = vmatpush.msra.mxu0 %v1570
          %1754 = vmatpush.msra.mxu0 %v1438
          %1755 = vmatpush.msra.mxu0 %v1518
          %1756 = vmatmul.f32.gmra.mxu0 %v1578
          %v1757 = vpop.f32.mrf.mxu0
          %v1758 = vadd.f32 %v1575, %v1757
          %1759 = vdwg.mxu0
          %v1760 = vadd.f32 %v1598, %v1618
          %v1761 = vadd.f32 %v1760, %v1638
          %v1762 = vadd.f32 %v1761, %v1658
          %v1763 = vadd.f32 %v1762, %v1678
          %v1764 = vadd.f32 %v1763, %v1698
          %v1765 = vadd.f32 %v1764, %v1718
          %v1766 = vadd.f32 %v1765, %v1738
          %v1767 = vsel %vm890, %v1758, 0.0
          %v1768 = vadd.f32 %v1766, %v1767
          %1769 = vadd.xlane.f32.xlu0 %v1768
          %v1770 = vpop.xlane.xlu0 %1769
          %v1771 = vmul.f32 %v1770, 0.00091911765
          %v1772 = vmul.f32 %v1598, %v1598
          %v1773 = vmul.f32 %v1618, %v1618
          %v1774 = vmul.f32 %v1638, %v1638
          %v1775 = vmul.f32 %v1658, %v1658
          %v1776 = vmul.f32 %v1678, %v1678
          %v1777 = vmul.f32 %v1698, %v1698
          %v1778 = vmul.f32 %v1718, %v1718
          %v1779 = vmul.f32 %v1738, %v1738
          %v1780 = vmul.f32 %v1758, %v1758
          %v1781 = vadd.f32 %v1772, %v1773
          %v1782 = vadd.f32 %v1781, %v1774
          %v1783 = vadd.f32 %v1782, %v1775
          %v1784 = vadd.f32 %v1783, %v1776
          %v1785 = vadd.f32 %v1784, %v1777
          %v1786 = vadd.f32 %v1785, %v1778
          %v1787 = vadd.f32 %v1786, %v1779
          %v1788 = vsel %vm890, %v1780, 0.0
          %v1789 = vadd.f32 %v1787, %v1788
          %1790 = vadd.xlane.f32.xlu0 %v1789
          %v1791 = vpop.xlane.xlu0 %1790
          %v1792 = vmul.f32 %v1791, 0.00091911765
          %v1793 = vmul.f32 %v1771, %v1771
          %v1794 = vsub.f32 %v1792, %v1793
          %v1795 = vsub.f32 %v1598, %v1771
          %v1796 = vsub.f32 %v1618, %v1771
          %v1797 = vsub.f32 %v1638, %v1771
          %v1798 = vsub.f32 %v1658, %v1771
          %v1799 = vsub.f32 %v1678, %v1771
          %v1800 = vsub.f32 %v1698, %v1771
          %v1801 = vsub.f32 %v1718, %v1771
          %v1802 = vsub.f32 %v1738, %v1771
          %v1803 = vsub.f32 %v1758, %v1771
          %v1804 = vadd.f32 %v1794, 1e-05
          %v1805 = vrsqrt.pop %v1804
          %v1806 = vmul.f32 %v1805, %v1804
          %v1807 = vmul.f32 %v1806, %v1805
          %v1808 = vmul.f32 0.5, %v1807
          %v1809 = vsub.f32 1.5, %v1808
          %v1810 = vmul.f32 %v1805, %v1809
          %vm1811 = vweird.f32 %v1804
          %vm1812 = vweird.f32 %v1805
          %vm1813 = vmor %vm1811, %vm1812
          %v1814 = vsel %vm1813, %v1805, %v1810
          %v1815 = vmul.f32 %v1795, %v1814
          %v1816 = vmul.f32 %v1796, %v1814
          %v1817 = vmul.f32 %v1797, %v1814
          %v1818 = vmul.f32 %v1798, %v1814
          %v1819 = vmul.f32 %v1799, %v1814
          %v1820 = vmul.f32 %v1800, %v1814
          %v1821 = vmul.f32 %v1801, %v1814
          %v1822 = vmul.f32 %v1802, %v1814
          %v1823 = vmul.f32 %v1803, %v1814
          %1824 = vset.pattern.permute.xlu0 7
          %1825 = vperm.xlu0 %1824, %v868
          %v1826 = vpop.permute.xlu0 %1825
          %v1828 = vmul.f32 %v1815, %v1826
          %v1829 = vmul.f32 %v1816, %v1826
          %v1830 = vmul.f32 %v1817, %v1826
          %v1831 = vmul.f32 %v1818, %v1826
          %v1832 = vmul.f32 %v1819, %v1826
          %v1833 = vmul.f32 %v1820, %v1826
          %v1834 = vmul.f32 %v1821, %v1826
          %v1835 = vmul.f32 %v1822, %v1826
          %v1836 = vmul.f32 %v1823, %v1826
          %1837 = vset.pattern.permute.xlu0 8
          %1838 = vperm.xlu0 %1837, %v868
          %v1839 = vpop.permute.xlu0 %1838
          %v1841 = vadd.f32 %v1828, %v1839
          %v1842 = vadd.f32 %v1829, %v1839
          %v1843 = vadd.f32 %v1830, %v1839
          %v1844 = vadd.f32 %v1831, %v1839
          %v1845 = vadd.f32 %v1832, %v1839
          %v1846 = vadd.f32 %v1833, %v1839
          %v1847 = vadd.f32 %v1834, %v1839
          %v1848 = vadd.f32 %v1835, %v1839
          %v1849 = vadd.f32 %v1836, %v1839
          %v1850 = vmax.f32 %v1841, 0.0
          %v1851 = vmax.f32 %v1842, 0.0
          %v1852 = vmax.f32 %v1843, 0.0
          %v1853 = vmax.f32 %v1844, 0.0
          %v1854 = vmax.f32 %v1845, 0.0
          %v1855 = vmax.f32 %v1846, 0.0
          %v1856 = vmax.f32 %v1847, 0.0
          %v1857 = vmax.f32 %v1848, 0.0
          %v1858 = vmax.f32 %v1849, 0.0
          %1859 = vrot.lane.b32.xlu0 %v1850, 64
          %v1860 = vpop.permute.xlu0 %1859
          %v1861 = vsel %vm658, %v1860, %v1858
          %1862 = vrot.lane.b32.xlu0 %v1851, 64
          %v1863 = vpop.permute.xlu0 %1862
          %1864 = vrot.lane.b32.xlu0 %v1852, 64
          %v1865 = vpop.permute.xlu0 %1864
          %1866 = vrot.lane.b32.xlu0 %v1853, 64
          %v1867 = vpop.permute.xlu0 %1866
          %1868 = vrot.lane.b32.xlu0 %v1854, 64
          %v1869 = vpop.permute.xlu0 %1868
          %1870 = vrot.lane.b32.xlu0 %v1855, 64
          %v1871 = vpop.permute.xlu0 %1870
          %1872 = vrot.lane.b32.xlu0 %v1856, 64
          %v1873 = vpop.permute.xlu0 %1872
          %1874 = vrot.lane.b32.xlu0 %v1857, 64
          %v1875 = vpop.permute.xlu0 %1874
          %1876 = vrot.lane.b32.xlu0 %v1861, 64
          %v1877 = vpop.permute.xlu0 %1876
          %v1878 = vsel %vm658, %v1863, %v1860
          %v1879 = vsel %vm658, %v1865, %v1863
          %v1880 = vsel %vm658, %v1867, %v1865
          %v1881 = vsel %vm658, %v1869, %v1867
          %v1882 = vsel %vm658, %v1871, %v1869
          %v1883 = vsel %vm658, %v1873, %v1871
          %v1884 = vsel %vm658, %v1875, %v1873
          %v1885 = vsel %vm658, %v1877, %v1875
          %1895 = vrot.lane.b32.xlu0 %v1861, 65
          %v1896 = vpop.permute.xlu0 %1895
          %1897 = vrot.lane.b32.xlu0 %v1878, 65
          %v1898 = vpop.permute.xlu0 %1897
          %1899 = vrot.lane.b32.xlu0 %v1879, 65
          %v1900 = vpop.permute.xlu0 %1899
          %1901 = vrot.lane.b32.xlu0 %v1880, 65
          %v1902 = vpop.permute.xlu0 %1901
          %1903 = vrot.lane.b32.xlu0 %v1881, 65
          %v1904 = vpop.permute.xlu0 %1903
          %1905 = vrot.lane.b32.xlu0 %v1882, 65
          %v1906 = vpop.permute.xlu0 %1905
          %1907 = vrot.lane.b32.xlu0 %v1883, 65
          %v1908 = vpop.permute.xlu0 %1907
          %1909 = vrot.lane.b32.xlu0 %v1884, 65
          %v1910 = vpop.permute.xlu0 %1909
          %1911 = vrot.lane.b32.xlu0 %v1885, 65
          %v1912 = vpop.permute.xlu0 %1911
          %v1913 = vsel %vm713, %v1896, %v1898
          %v1914 = vsel %vm713, %v1898, %v1900
          %v1915 = vsel %vm713, %v1900, %v1902
          %v1916 = vsel %vm713, %v1902, %v1904
          %v1917 = vsel %vm713, %v1904, %v1906
          %v1918 = vsel %vm713, %v1906, %v1908
          %v1919 = vsel %vm713, %v1908, %v1910
          %v1920 = vsel %vm713, %v1910, %v1912
          %v1930 = vsel %vm1019, 0.0, %v1913
          %v1931 = vsel %vm1020, 0.0, %v1914
          %v1932 = vsel %vm1021, 0.0, %v1915
          %v1933 = vsel %vm1022, 0.0, %v1916
          %v1934 = vsel %vm1023, 0.0, %v1917
          %v1935 = vsel %vm1024, 0.0, %v1918
          %v1936 = vsel %vm1025, 0.0, %v1919
          %v1937 = vsel %vm1026, 0.0, %v1920
          %v1938 = vsel %vm1027, 0.0, %v1912
          %1947 = vrot.lane.b32.xlu0 %v1850, 127
          %v1948 = vpop.permute.xlu0 %1947
          %1949 = vrot.lane.b32.xlu0 %v1851, 127
          %v1950 = vpop.permute.xlu0 %1949
          %1951 = vrot.lane.b32.xlu0 %v1852, 127
          %v1952 = vpop.permute.xlu0 %1951
          %1953 = vrot.lane.b32.xlu0 %v1853, 127
          %v1954 = vpop.permute.xlu0 %1953
          %1955 = vrot.lane.b32.xlu0 %v1854, 127
          %v1956 = vpop.permute.xlu0 %1955
          %1957 = vrot.lane.b32.xlu0 %v1855, 127
          %v1958 = vpop.permute.xlu0 %1957
          %1959 = vrot.lane.b32.xlu0 %v1856, 127
          %v1960 = vpop.permute.xlu0 %1959
          %1961 = vrot.lane.b32.xlu0 %v1857, 127
          %v1962 = vpop.permute.xlu0 %1961
          %1963 = vrot.lane.b32.xlu0 %v1861, 127
          %v1964 = vpop.permute.xlu0 %1963
          %v1965 = vsel %vm758, %v1948, %v1950
          %v1966 = vsel %vm758, %v1950, %v1952
          %v1967 = vsel %vm758, %v1952, %v1954
          %v1968 = vsel %vm758, %v1954, %v1956
          %v1969 = vsel %vm758, %v1956, %v1958
          %v1970 = vsel %vm758, %v1958, %v1960
          %v1971 = vsel %vm758, %v1960, %v1962
          %v1972 = vsel %vm758, %v1962, %v1964
          %v1982 = vsel %vm1090, 0.0, %v1965
          %v1983 = vsel %vm1091, 0.0, %v1966
          %v1984 = vsel %vm1092, 0.0, %v1967
          %v1985 = vsel %vm1093, 0.0, %v1968
          %v1986 = vsel %vm1094, 0.0, %v1969
          %v1987 = vsel %vm1095, 0.0, %v1970
          %v1988 = vsel %vm1096, 0.0, %v1971
          %v1989 = vsel %vm1097, 0.0, %v1972
          %v1990 = vsel %vm1098, 0.0, %v1964
          %s1991 = scalar_lea.vmem %s2, 16
          %v1992 = vld [vmem:[%s1991] sm:$0xff]
          %1993 = vset.pattern.permute.xlu0 9
          %1994 = vperm.xlu0 %1993, %v868
          %v1995 = vpop.permute.xlu0 %1994
          %v1998 = vsel %vm1156, %v1992, 0
          %2000 = vmatpush.msra.mxu0 0.0
          %2001 = vmatpush.msra.mxu0 0.0
          %2002 = vmatpush.msra.mxu0 0.0
          %2003 = vmatpush.msra.mxu0 0.0
          %2004 = vmatpush.msra.mxu0 0.0
          %2005 = vmatpush.msra.mxu0 0.0
          %2006 = vmatpush.msra.mxu0 0.0
          %2007 = vmatpush.msra.mxu0 0.0
          %2008 = vmatpush.msra.mxu0 0.0
          %2009 = vmatpush.msra.mxu0 0.0
          %2010 = vmatpush.msra.mxu0 0.0
          %2011 = vmatpush.msra.mxu0 0.0
          %2012 = vmatpush.msra.mxu0 0.0
          %2013 = vmatpush.msra.mxu0 %v1982
          %2014 = vmatpush.msra.mxu0 %v1850
          %2015 = vmatpush.msra.mxu0 %v1930
          %2016 = vmatmul.f32.gmra.mxu0 %v1998
          %v2017 = vpop.f32.mrf.mxu0
          %v2018 = vadd.f32 %v1995, %v2017
          %2019 = vdwg.mxu0
          %2020 = vmatpush.msra.mxu0 0.0
          %2021 = vmatpush.msra.mxu0 0.0
          %2022 = vmatpush.msra.mxu0 0.0
          %2023 = vmatpush.msra.mxu0 0.0
          %2024 = vmatpush.msra.mxu0 0.0
          %2025 = vmatpush.msra.mxu0 0.0
          %2026 = vmatpush.msra.mxu0 0.0
          %2027 = vmatpush.msra.mxu0 0.0
          %2028 = vmatpush.msra.mxu0 0.0
          %2029 = vmatpush.msra.mxu0 0.0
          %2030 = vmatpush.msra.mxu0 0.0
          %2031 = vmatpush.msra.mxu0 0.0
          %2032 = vmatpush.msra.mxu0 0.0
          %2033 = vmatpush.msra.mxu0 %v1983
          %2034 = vmatpush.msra.mxu0 %v1851
          %2035 = vmatpush.msra.mxu0 %v1931
          %2036 = vmatmul.f32.gmra.mxu0 %v1998
          %v2037 = vpop.f32.mrf.mxu0
          %v2038 = vadd.f32 %v1995, %v2037
          %2039 = vdwg.mxu0
          %2040 = vmatpush.msra.mxu0 0.0
          %2041 = vmatpush.msra.mxu0 0.0
          %2042 = vmatpush.msra.mxu0 0.0
          %2043 = vmatpush.msra.mxu0 0.0
          %2044 = vmatpush.msra.mxu0 0.0
          %2045 = vmatpush.msra.mxu0 0.0
          %2046 = vmatpush.msra.mxu0 0.0
          %2047 = vmatpush.msra.mxu0 0.0
          %2048 = vmatpush.msra.mxu0 0.0
          %2049 = vmatpush.msra.mxu0 0.0
          %2050 = vmatpush.msra.mxu0 0.0
          %2051 = vmatpush.msra.mxu0 0.0
          %2052 = vmatpush.msra.mxu0 0.0
          %2053 = vmatpush.msra.mxu0 %v1984
          %2054 = vmatpush.msra.mxu0 %v1852
          %2055 = vmatpush.msra.mxu0 %v1932
          %2056 = vmatmul.f32.gmra.mxu0 %v1998
          %v2057 = vpop.f32.mrf.mxu0
          %v2058 = vadd.f32 %v1995, %v2057
          %2059 = vdwg.mxu0
          %2060 = vmatpush.msra.mxu0 0.0
          %2061 = vmatpush.msra.mxu0 0.0
          %2062 = vmatpush.msra.mxu0 0.0
          %2063 = vmatpush.msra.mxu0 0.0
          %2064 = vmatpush.msra.mxu0 0.0
          %2065 = vmatpush.msra.mxu0 0.0
          %2066 = vmatpush.msra.mxu0 0.0
          %2067 = vmatpush.msra.mxu0 0.0
          %2068 = vmatpush.msra.mxu0 0.0
          %2069 = vmatpush.msra.mxu0 0.0
          %2070 = vmatpush.msra.mxu0 0.0
          %2071 = vmatpush.msra.mxu0 0.0
          %2072 = vmatpush.msra.mxu0 0.0
          %2073 = vmatpush.msra.mxu0 %v1985
          %2074 = vmatpush.msra.mxu0 %v1853
          %2075 = vmatpush.msra.mxu0 %v1933
          %2076 = vmatmul.f32.gmra.mxu0 %v1998
          %v2077 = vpop.f32.mrf.mxu0
          %v2078 = vadd.f32 %v1995, %v2077
          %2079 = vdwg.mxu0
          %2080 = vmatpush.msra.mxu0 0.0
          %2081 = vmatpush.msra.mxu0 0.0
          %2082 = vmatpush.msra.mxu0 0.0
          %2083 = vmatpush.msra.mxu0 0.0
          %2084 = vmatpush.msra.mxu0 0.0
          %2085 = vmatpush.msra.mxu0 0.0
          %2086 = vmatpush.msra.mxu0 0.0
          %2087 = vmatpush.msra.mxu0 0.0
          %2088 = vmatpush.msra.mxu0 0.0
          %2089 = vmatpush.msra.mxu0 0.0
          %2090 = vmatpush.msra.mxu0 0.0
          %2091 = vmatpush.msra.mxu0 0.0
          %2092 = vmatpush.msra.mxu0 0.0
          %2093 = vmatpush.msra.mxu0 %v1986
          %2094 = vmatpush.msra.mxu0 %v1854
          %2095 = vmatpush.msra.mxu0 %v1934
          %2096 = vmatmul.f32.gmra.mxu0 %v1998
          %v2097 = vpop.f32.mrf.mxu0
          %v2098 = vadd.f32 %v1995, %v2097
          %2099 = vdwg.mxu0
          %2100 = vmatpush.msra.mxu0 0.0
          %2101 = vmatpush.msra.mxu0 0.0
          %2102 = vmatpush.msra.mxu0 0.0
          %2103 = vmatpush.msra.mxu0 0.0
          %2104 = vmatpush.msra.mxu0 0.0
          %2105 = vmatpush.msra.mxu0 0.0
          %2106 = vmatpush.msra.mxu0 0.0
          %2107 = vmatpush.msra.mxu0 0.0
          %2108 = vmatpush.msra.mxu0 0.0
          %2109 = vmatpush.msra.mxu0 0.0
          %2110 = vmatpush.msra.mxu0 0.0
          %2111 = vmatpush.msra.mxu0 0.0
          %2112 = vmatpush.msra.mxu0 0.0
          %2113 = vmatpush.msra.mxu0 %v1987
          %2114 = vmatpush.msra.mxu0 %v1855
          %2115 = vmatpush.msra.mxu0 %v1935
          %2116 = vmatmul.f32.gmra.mxu0 %v1998
          %v2117 = vpop.f32.mrf.mxu0
          %v2118 = vadd.f32 %v1995, %v2117
          %2119 = vdwg.mxu0
          %2120 = vmatpush.msra.mxu0 0.0
          %2121 = vmatpush.msra.mxu0 0.0
          %2122 = vmatpush.msra.mxu0 0.0
          %2123 = vmatpush.msra.mxu0 0.0
          %2124 = vmatpush.msra.mxu0 0.0
          %2125 = vmatpush.msra.mxu0 0.0
          %2126 = vmatpush.msra.mxu0 0.0
          %2127 = vmatpush.msra.mxu0 0.0
          %2128 = vmatpush.msra.mxu0 0.0
          %2129 = vmatpush.msra.mxu0 0.0
          %2130 = vmatpush.msra.mxu0 0.0
          %2131 = vmatpush.msra.mxu0 0.0
          %2132 = vmatpush.msra.mxu0 0.0
          %2133 = vmatpush.msra.mxu0 %v1988
          %2134 = vmatpush.msra.mxu0 %v1856
          %2135 = vmatpush.msra.mxu0 %v1936
          %2136 = vmatmul.f32.gmra.mxu0 %v1998
          %v2137 = vpop.f32.mrf.mxu0
          %v2138 = vadd.f32 %v1995, %v2137
          %2139 = vdwg.mxu0
          %2140 = vmatpush.msra.mxu0 0.0
          %2141 = vmatpush.msra.mxu0 0.0
          %2142 = vmatpush.msra.mxu0 0.0
          %2143 = vmatpush.msra.mxu0 0.0
          %2144 = vmatpush.msra.mxu0 0.0
          %2145 = vmatpush.msra.mxu0 0.0
          %2146 = vmatpush.msra.mxu0 0.0
          %2147 = vmatpush.msra.mxu0 0.0
          %2148 = vmatpush.msra.mxu0 0.0
          %2149 = vmatpush.msra.mxu0 0.0
          %2150 = vmatpush.msra.mxu0 0.0
          %2151 = vmatpush.msra.mxu0 0.0
          %2152 = vmatpush.msra.mxu0 0.0
          %2153 = vmatpush.msra.mxu0 %v1989
          %2154 = vmatpush.msra.mxu0 %v1857
          %2155 = vmatpush.msra.mxu0 %v1937
          %2156 = vmatmul.f32.gmra.mxu0 %v1998
          %v2157 = vpop.f32.mrf.mxu0
          %v2158 = vadd.f32 %v1995, %v2157
          %2159 = vdwg.mxu0
          %2160 = vmatpush.msra.mxu0 0.0
          %2161 = vmatpush.msra.mxu0 0.0
          %2162 = vmatpush.msra.mxu0 0.0
          %2163 = vmatpush.msra.mxu0 0.0
          %2164 = vmatpush.msra.mxu0 0.0
          %2165 = vmatpush.msra.mxu0 0.0
          %2166 = vmatpush.msra.mxu0 0.0
          %2167 = vmatpush.msra.mxu0 0.0
          %2168 = vmatpush.msra.mxu0 0.0
          %2169 = vmatpush.msra.mxu0 0.0
          %2170 = vmatpush.msra.mxu0 0.0
          %2171 = vmatpush.msra.mxu0 0.0
          %2172 = vmatpush.msra.mxu0 0.0
          %2173 = vmatpush.msra.mxu0 %v1990
          %2174 = vmatpush.msra.mxu0 %v1858
          %2175 = vmatpush.msra.mxu0 %v1938
          %2176 = vmatmul.f32.gmra.mxu0 %v1998
          %v2177 = vpop.f32.mrf.mxu0
          %v2178 = vadd.f32 %v1995, %v2177
          %2179 = vdwg.mxu0
          %v2180 = vadd.f32 %v2018, %v2038
          %v2181 = vadd.f32 %v2180, %v2058
          %v2182 = vadd.f32 %v2181, %v2078
          %v2183 = vadd.f32 %v2182, %v2098
          %v2184 = vadd.f32 %v2183, %v2118
          %v2185 = vadd.f32 %v2184, %v2138
          %v2186 = vadd.f32 %v2185, %v2158
          %v2187 = vsel %vm890, %v2178, 0.0
          %v2188 = vadd.f32 %v2186, %v2187
          %2189 = vadd.xlane.f32.xlu0 %v2188
          %v2190 = vpop.xlane.xlu0 %2189
          %v2191 = vmul.f32 %v2190, 0.00091911765
          %v2192 = vmul.f32 %v2018, %v2018
          %v2193 = vmul.f32 %v2038, %v2038
          %v2194 = vmul.f32 %v2058, %v2058
          %v2195 = vmul.f32 %v2078, %v2078
          %v2196 = vmul.f32 %v2098, %v2098
          %v2197 = vmul.f32 %v2118, %v2118
          %v2198 = vmul.f32 %v2138, %v2138
          %v2199 = vmul.f32 %v2158, %v2158
          %v2200 = vmul.f32 %v2178, %v2178
          %v2201 = vadd.f32 %v2192, %v2193
          %v2202 = vadd.f32 %v2201, %v2194
          %v2203 = vadd.f32 %v2202, %v2195
          %v2204 = vadd.f32 %v2203, %v2196
          %v2205 = vadd.f32 %v2204, %v2197
          %v2206 = vadd.f32 %v2205, %v2198
          %v2207 = vadd.f32 %v2206, %v2199
          %v2208 = vsel %vm890, %v2200, 0.0
          %v2209 = vadd.f32 %v2207, %v2208
          %2210 = vadd.xlane.f32.xlu0 %v2209
          %v2211 = vpop.xlane.xlu0 %2210
          %v2212 = vmul.f32 %v2211, 0.00091911765
          %v2213 = vmul.f32 %v2191, %v2191
          %v2214 = vsub.f32 %v2212, %v2213
          %v2215 = vsub.f32 %v2018, %v2191
          %v2216 = vsub.f32 %v2038, %v2191
          %v2217 = vsub.f32 %v2058, %v2191
          %v2218 = vsub.f32 %v2078, %v2191
          %v2219 = vsub.f32 %v2098, %v2191
          %v2220 = vsub.f32 %v2118, %v2191
          %v2221 = vsub.f32 %v2138, %v2191
          %v2222 = vsub.f32 %v2158, %v2191
          %v2223 = vsub.f32 %v2178, %v2191
          %v2224 = vadd.f32 %v2214, 1e-05
          %v2225 = vrsqrt.pop %v2224
          %v2226 = vmul.f32 %v2225, %v2224
          %v2227 = vmul.f32 %v2226, %v2225
          %v2228 = vmul.f32 0.5, %v2227
          %v2229 = vsub.f32 1.5, %v2228
          %v2230 = vmul.f32 %v2225, %v2229
          %vm2231 = vweird.f32 %v2224
          %vm2232 = vweird.f32 %v2225
          %vm2233 = vmor %vm2231, %vm2232
          %v2234 = vsel %vm2233, %v2225, %v2230
          %v2235 = vmul.f32 %v2215, %v2234
          %v2236 = vmul.f32 %v2216, %v2234
          %v2237 = vmul.f32 %v2217, %v2234
          %v2238 = vmul.f32 %v2218, %v2234
          %v2239 = vmul.f32 %v2219, %v2234
          %v2240 = vmul.f32 %v2220, %v2234
          %v2241 = vmul.f32 %v2221, %v2234
          %v2242 = vmul.f32 %v2222, %v2234
          %v2243 = vmul.f32 %v2223, %v2234
          %2244 = vset.pattern.permute.xlu0 10
          %2245 = vperm.xlu0 %2244, %v868
          %v2246 = vpop.permute.xlu0 %2245
          %v2248 = vmul.f32 %v2235, %v2246
          %v2249 = vmul.f32 %v2236, %v2246
          %v2250 = vmul.f32 %v2237, %v2246
          %v2251 = vmul.f32 %v2238, %v2246
          %v2252 = vmul.f32 %v2239, %v2246
          %v2253 = vmul.f32 %v2240, %v2246
          %v2254 = vmul.f32 %v2241, %v2246
          %v2255 = vmul.f32 %v2242, %v2246
          %v2256 = vmul.f32 %v2243, %v2246
          %2257 = vset.pattern.permute.xlu0 11
          %2258 = vperm.xlu0 %2257, %v868
          %v2259 = vpop.permute.xlu0 %2258
          %v2261 = vadd.f32 %v2248, %v2259
          %v2262 = vadd.f32 %v2249, %v2259
          %v2263 = vadd.f32 %v2250, %v2259
          %v2264 = vadd.f32 %v2251, %v2259
          %v2265 = vadd.f32 %v2252, %v2259
          %v2266 = vadd.f32 %v2253, %v2259
          %v2267 = vadd.f32 %v2254, %v2259
          %v2268 = vadd.f32 %v2255, %v2259
          %v2269 = vadd.f32 %v2256, %v2259
          %v2270 = vmax.f32 %v2261, 0.0
          %v2271 = vmax.f32 %v2262, 0.0
          %v2272 = vmax.f32 %v2263, 0.0
          %v2273 = vmax.f32 %v2264, 0.0
          %v2274 = vmax.f32 %v2265, 0.0
          %v2275 = vmax.f32 %v2266, 0.0
          %v2276 = vmax.f32 %v2267, 0.0
          %v2277 = vmax.f32 %v2268, 0.0
          %v2278 = vmax.f32 %v2269, 0.0
          %v2284 = vrot.slane %v2274, 7
          %v2285 = vrot.slane %v2275, 7
          %v2286 = vrot.slane %v2276, 7
          %v2287 = vrot.slane %v2277, 7
          %v2288 = vrot.slane %v2278, 7
          %2289 = vrot.lane.b32.xlu0 %v2284, 96
          %v2290 = vpop.permute.xlu0 %2289
          %2291 = vrot.lane.b32.xlu0 %v2285, 96
          %v2292 = vpop.permute.xlu0 %2291
          %2293 = vrot.lane.b32.xlu0 %v2286, 96
          %v2294 = vpop.permute.xlu0 %2293
          %2295 = vrot.lane.b32.xlu0 %v2287, 96
          %v2296 = vpop.permute.xlu0 %2295
          %2297 = vrot.lane.b32.xlu0 %v2288, 96
          %v2298 = vpop.permute.xlu0 %2297
          %vm2299 = vcmask 785408
          %v2300 = vsel %vm2299, %v2290, %v2292
          %v2301 = vsel %vm2299, %v2292, %v2294
          %v2302 = vsel %vm2299, %v2294, %v2296
          %v2303 = vsel %vm2299, %v2296, %v2298
          %vm2309 = vcmask 1040384
          %v2310 = vsel %vm2309, %v2270, %v2300
          %v2311 = vsel %vm2309, %v2271, %v2301
          %v2312 = vsel %vm2309, %v2272, %v2302
          %v2313 = vsel %vm2309, %v2273, %v2303
          %v2314 = vsel %vm2309, %v2274, %v2298
          %v2315 = vpack.c.bf16 %v2311, %v2310
          %v2316 = vpack.c.bf16 %v2313, %v2312
          %v2317 = vpack.c.bf16 %v2314, %v2314
          %v2321 = vrot.slane %v2315, 3
          %v2322 = vrot.slane %v2316, 6
          %v2323 = vrot.slane %v2316, 1
          %v2324 = vrot.slane %v2317, 4
          %v2325 = vrot.slane %v2317, 7
          %v2328 = vsel %vm2309, %v2315, %v2321
          %vm2329 = vcmask 1041408
          %v2331 = vsel %vm2329, %v2328, %v2322
          %vm2332 = vcmask 1043459
          %v2335 = vsel %vm2332, %v2323, %v2324
          %vm2336 = vcmask 1044483
          %v2338 = vsel %vm2336, %v2335, %v2325
          %vm2339 = vcmask 1042432
          %v2340 = vsel %vm2339, %v2331, %v2338
          %vm2342 = vcmask 1041409
          %vm2343 = vmor %vm2342, %vm2309
          %vm2344 = vcmask 1042434
          %vm2345 = vmor %vm2344, %vm2343
          %vm2346 = vmor %vm2332, %vm2345
          %vm2347 = vcmask 258052
          %vm2348 = vmor %vm2347, %vm2346
          %2349 = vst.msk [vmem:[#allocation2] sm:$0x1f] %vm2348, %v2340
          %v2354 = vrot.slane %v2270, 1
          %v2355 = vrot.slane %v2271, 1
          %v2356 = vrot.slane %v2272, 1
          %v2357 = vrot.slane %v2273, 1
          %v2358 = vrot.slane %v2274, 1
          %2364 = vrot.lane.b32.xlu0 %v2274, 96
          %v2365 = vpop.permute.xlu0 %2364
          %2366 = vrot.lane.b32.xlu0 %v2275, 96
          %v2367 = vpop.permute.xlu0 %2366
          %2368 = vrot.lane.b32.xlu0 %v2276, 96
          %v2369 = vpop.permute.xlu0 %2368
          %2370 = vrot.lane.b32.xlu0 %v2277, 96
          %v2371 = vpop.permute.xlu0 %2370
          %2372 = vrot.lane.b32.xlu0 %v2278, 96
          %v2373 = vpop.permute.xlu0 %2372
          %v2374 = vsel %vm2299, %v2365, %v2367
          %v2375 = vsel %vm2299, %v2367, %v2369
          %v2376 = vsel %vm2299, %v2369, %v2371
          %v2377 = vsel %vm2299, %v2371, %v2373
          %v2383 = vsel %vm2309, %v2354, %v2374
          %v2384 = vsel %vm2309, %v2355, %v2375
          %v2385 = vsel %vm2309, %v2356, %v2376
          %v2386 = vsel %vm2309, %v2357, %v2377
          %v2387 = vsel %vm2309, %v2358, %v2373
          %v2388 = vpack.c.bf16 %v2384, %v2383
          %v2389 = vpack.c.bf16 %v2386, %v2385
          %v2390 = vpack.c.bf16 %v2387, %v2387
          %v2394 = vrot.slane %v2388, 3
          %v2395 = vrot.slane %v2389, 6
          %v2396 = vrot.slane %v2389, 1
          %v2397 = vrot.slane %v2390, 4
          %v2398 = vrot.slane %v2390, 7
          %v2401 = vsel %vm2309, %v2388, %v2394
          %v2403 = vsel %vm2329, %v2401, %v2395
          %v2406 = vsel %vm2332, %v2396, %v2397
          %v2408 = vsel %vm2336, %v2406, %v2398
          %v2409 = vsel %vm2339, %v2403, %v2408
          %s2411 = scalar_lea.vmem [#allocation2], 5
          %2412 = vst.msk [vmem:[%s2411] sm:$0x1f] %vm2348, %v2409
          %v2413 = vrot.slane %v2270, 2
          %v2414 = vrot.slane %v2271, 2
          %v2415 = vrot.slane %v2272, 2
          %v2416 = vrot.slane %v2273, 2
          %v2417 = vrot.slane %v2274, 2
          %v2423 = vrot.slane %v2275, 1
          %v2424 = vrot.slane %v2276, 1
          %v2425 = vrot.slane %v2277, 1
          %v2426 = vrot.slane %v2278, 1
          %2427 = vrot.lane.b32.xlu0 %v2358, 96
          %v2428 = vpop.permute.xlu0 %2427
          %2429 = vrot.lane.b32.xlu0 %v2423, 96
          %v2430 = vpop.permute.xlu0 %2429
          %2431 = vrot.lane.b32.xlu0 %v2424, 96
          %v2432 = vpop.permute.xlu0 %2431
          %2433 = vrot.lane.b32.xlu0 %v2425, 96
          %v2434 = vpop.permute.xlu0 %2433
          %2435 = vrot.lane.b32.xlu0 %v2426, 96
          %v2436 = vpop.permute.xlu0 %2435
          %v2437 = vsel %vm2299, %v2428, %v2430
          %v2438 = vsel %vm2299, %v2430, %v2432
          %v2439 = vsel %vm2299, %v2432, %v2434
          %v2440 = vsel %vm2299, %v2434, %v2436
          %v2446 = vsel %vm2309, %v2413, %v2437
          %v2447 = vsel %vm2309, %v2414, %v2438
          %v2448 = vsel %vm2309, %v2415, %v2439
          %v2449 = vsel %vm2309, %v2416, %v2440
          %v2450 = vsel %vm2309, %v2417, %v2436
          %v2451 = vpack.c.bf16 %v2447, %v2446
          %v2452 = vpack.c.bf16 %v2449, %v2448
          %v2453 = vpack.c.bf16 %v2450, %v2450
          %v2457 = vrot.slane %v2451, 3
          %v2458 = vrot.slane %v2452, 6
          %v2459 = vrot.slane %v2452, 1
          %v2460 = vrot.slane %v2453, 4
          %v2461 = vrot.slane %v2453, 7
          %v2464 = vsel %vm2309, %v2451, %v2457
          %v2466 = vsel %vm2329, %v2464, %v2458
          %v2469 = vsel %vm2332, %v2459, %v2460
          %v2471 = vsel %vm2336, %v2469, %v2461
          %v2472 = vsel %vm2339, %v2466, %v2471
          %s2474 = scalar_lea.vmem [#allocation2], 10
          %2475 = vst.msk [vmem:[%s2474] sm:$0x1f] %vm2348, %v2472
          %v2476 = vrot.slane %v2270, 3
          %v2477 = vrot.slane %v2271, 3
          %v2478 = vrot.slane %v2272, 3
          %v2479 = vrot.slane %v2273, 3
          %v2480 = vrot.slane %v2274, 3
          %v2486 = vrot.slane %v2275, 2
          %v2487 = vrot.slane %v2276, 2
          %v2488 = vrot.slane %v2277, 2
          %v2489 = vrot.slane %v2278, 2
          %2490 = vrot.lane.b32.xlu0 %v2417, 96
          %v2491 = vpop.permute.xlu0 %2490
          %2492 = vrot.lane.b32.xlu0 %v2486, 96
          %v2493 = vpop.permute.xlu0 %2492
          %2494 = vrot.lane.b32.xlu0 %v2487, 96
          %v2495 = vpop.permute.xlu0 %2494
          %2496 = vrot.lane.b32.xlu0 %v2488, 96
          %v2497 = vpop.permute.xlu0 %2496
          %2498 = vrot.lane.b32.xlu0 %v2489, 96
          %v2499 = vpop.permute.xlu0 %2498
          %v2500 = vsel %vm2299, %v2491, %v2493
          %v2501 = vsel %vm2299, %v2493, %v2495
          %v2502 = vsel %vm2299, %v2495, %v2497
          %v2503 = vsel %vm2299, %v2497, %v2499
          %v2509 = vsel %vm2309, %v2476, %v2500
          %v2510 = vsel %vm2309, %v2477, %v2501
          %v2511 = vsel %vm2309, %v2478, %v2502
          %v2512 = vsel %vm2309, %v2479, %v2503
          %v2513 = vsel %vm2309, %v2480, %v2499
          %v2514 = vpack.c.bf16 %v2510, %v2509
          %v2515 = vpack.c.bf16 %v2512, %v2511
          %v2516 = vpack.c.bf16 %v2513, %v2513
          %v2520 = vrot.slane %v2514, 3
          %v2521 = vrot.slane %v2515, 6
          %v2522 = vrot.slane %v2515, 1
          %v2523 = vrot.slane %v2516, 4
          %v2524 = vrot.slane %v2516, 7
          %v2527 = vsel %vm2309, %v2514, %v2520
          %v2529 = vsel %vm2329, %v2527, %v2521
          %v2532 = vsel %vm2332, %v2522, %v2523
          %v2534 = vsel %vm2336, %v2532, %v2524
          %v2535 = vsel %vm2339, %v2529, %v2534
          %s2537 = scalar_lea.vmem [#allocation2], 15
          %2538 = vst.msk [vmem:[%s2537] sm:$0x1f] %vm2348, %v2535
          %v2539 = vrot.slane %v2270, 4
          %v2540 = vrot.slane %v2271, 4
          %v2541 = vrot.slane %v2272, 4
          %v2542 = vrot.slane %v2273, 4
          %v2543 = vrot.slane %v2274, 4
          %v2549 = vrot.slane %v2275, 3
          %v2550 = vrot.slane %v2276, 3
          %v2551 = vrot.slane %v2277, 3
          %v2552 = vrot.slane %v2278, 3
          %2553 = vrot.lane.b32.xlu0 %v2480, 96
          %v2554 = vpop.permute.xlu0 %2553
          %2555 = vrot.lane.b32.xlu0 %v2549, 96
          %v2556 = vpop.permute.xlu0 %2555
          %2557 = vrot.lane.b32.xlu0 %v2550, 96
          %v2558 = vpop.permute.xlu0 %2557
          %2559 = vrot.lane.b32.xlu0 %v2551, 96
          %v2560 = vpop.permute.xlu0 %2559
          %2561 = vrot.lane.b32.xlu0 %v2552, 96
          %v2562 = vpop.permute.xlu0 %2561
          %v2563 = vsel %vm2299, %v2554, %v2556
          %v2564 = vsel %vm2299, %v2556, %v2558
          %v2565 = vsel %vm2299, %v2558, %v2560
          %v2566 = vsel %vm2299, %v2560, %v2562
          %v2572 = vsel %vm2309, %v2539, %v2563
          %v2573 = vsel %vm2309, %v2540, %v2564
          %v2574 = vsel %vm2309, %v2541, %v2565
          %v2575 = vsel %vm2309, %v2542, %v2566
          %v2576 = vsel %vm2309, %v2543, %v2562
          %v2577 = vpack.c.bf16 %v2573, %v2572
          %v2578 = vpack.c.bf16 %v2575, %v2574
          %v2579 = vpack.c.bf16 %v2576, %v2576
          %v2583 = vrot.slane %v2577, 3
          %v2584 = vrot.slane %v2578, 6
          %v2585 = vrot.slane %v2578, 1
          %v2586 = vrot.slane %v2579, 4
          %v2587 = vrot.slane %v2579, 7
          %v2590 = vsel %vm2309, %v2577, %v2583
          %v2592 = vsel %vm2329, %v2590, %v2584
          %v2595 = vsel %vm2332, %v2585, %v2586
          %v2597 = vsel %vm2336, %v2595, %v2587
          %v2598 = vsel %vm2339, %v2592, %v2597
          %s2600 = scalar_lea.vmem [#allocation2], 20
          %2601 = vst.msk [vmem:[%s2600] sm:$0x1f] %vm2348, %v2598
          %v2602 = vrot.slane %v2270, 5
          %v2603 = vrot.slane %v2271, 5
          %v2604 = vrot.slane %v2272, 5
          %v2605 = vrot.slane %v2273, 5
          %v2606 = vrot.slane %v2274, 5
          %v2612 = vrot.slane %v2275, 4
          %v2613 = vrot.slane %v2276, 4
          %v2614 = vrot.slane %v2277, 4
          %v2615 = vrot.slane %v2278, 4
          %2616 = vrot.lane.b32.xlu0 %v2543, 96
          %v2617 = vpop.permute.xlu0 %2616
          %2618 = vrot.lane.b32.xlu0 %v2612, 96
          %v2619 = vpop.permute.xlu0 %2618
          %2620 = vrot.lane.b32.xlu0 %v2613, 96
          %v2621 = vpop.permute.xlu0 %2620
          %2622 = vrot.lane.b32.xlu0 %v2614, 96
          %v2623 = vpop.permute.xlu0 %2622
          %2624 = vrot.lane.b32.xlu0 %v2615, 96
          %v2625 = vpop.permute.xlu0 %2624
          %v2626 = vsel %vm2299, %v2617, %v2619
          %v2627 = vsel %vm2299, %v2619, %v2621
          %v2628 = vsel %vm2299, %v2621, %v2623
          %v2629 = vsel %vm2299, %v2623, %v2625
          %v2635 = vsel %vm2309, %v2602, %v2626
          %v2636 = vsel %vm2309, %v2603, %v2627
          %v2637 = vsel %vm2309, %v2604, %v2628
          %v2638 = vsel %vm2309, %v2605, %v2629
          %v2639 = vsel %vm2309, %v2606, %v2625
          %v2640 = vpack.c.bf16 %v2636, %v2635
          %v2641 = vpack.c.bf16 %v2638, %v2637
          %v2642 = vpack.c.bf16 %v2639, %v2639
          %v2646 = vrot.slane %v2640, 3
          %v2647 = vrot.slane %v2641, 6
          %v2648 = vrot.slane %v2641, 1
          %v2649 = vrot.slane %v2642, 4
          %v2650 = vrot.slane %v2642, 7
          %v2653 = vsel %vm2309, %v2640, %v2646
          %v2655 = vsel %vm2329, %v2653, %v2647
          %v2658 = vsel %vm2332, %v2648, %v2649
          %v2660 = vsel %vm2336, %v2658, %v2650
          %v2661 = vsel %vm2339, %v2655, %v2660
          %s2663 = scalar_lea.vmem [#allocation2], 25
          %2664 = vst.msk [vmem:[%s2663] sm:$0x1f] %vm2348, %v2661
          %v2665 = vrot.slane %v2270, 6
          %v2666 = vrot.slane %v2271, 6
          %v2667 = vrot.slane %v2272, 6
          %v2668 = vrot.slane %v2273, 6
          %v2669 = vrot.slane %v2274, 6
          %v2675 = vrot.slane %v2275, 5
          %v2676 = vrot.slane %v2276, 5
          %v2677 = vrot.slane %v2277, 5
          %v2678 = vrot.slane %v2278, 5
          %2679 = vrot.lane.b32.xlu0 %v2606, 96
          %v2680 = vpop.permute.xlu0 %2679
          %2681 = vrot.lane.b32.xlu0 %v2675, 96
          %v2682 = vpop.permute.xlu0 %2681
          %2683 = vrot.lane.b32.xlu0 %v2676, 96
          %v2684 = vpop.permute.xlu0 %2683
          %2685 = vrot.lane.b32.xlu0 %v2677, 96
          %v2686 = vpop.permute.xlu0 %2685
          %2687 = vrot.lane.b32.xlu0 %v2678, 96
          %v2688 = vpop.permute.xlu0 %2687
          %v2689 = vsel %vm2299, %v2680, %v2682
          %v2690 = vsel %vm2299, %v2682, %v2684
          %v2691 = vsel %vm2299, %v2684, %v2686
          %v2692 = vsel %vm2299, %v2686, %v2688
          %v2698 = vsel %vm2309, %v2665, %v2689
          %v2699 = vsel %vm2309, %v2666, %v2690
          %v2700 = vsel %vm2309, %v2667, %v2691
          %v2701 = vsel %vm2309, %v2668, %v2692
          %v2702 = vsel %vm2309, %v2669, %v2688
          %v2703 = vpack.c.bf16 %v2699, %v2698
          %v2704 = vpack.c.bf16 %v2701, %v2700
          %v2705 = vpack.c.bf16 %v2702, %v2702
          %v2709 = vrot.slane %v2703, 3
          %v2710 = vrot.slane %v2704, 6
          %v2711 = vrot.slane %v2704, 1
          %v2712 = vrot.slane %v2705, 4
          %v2713 = vrot.slane %v2705, 7
          %v2716 = vsel %vm2309, %v2703, %v2709
          %v2718 = vsel %vm2329, %v2716, %v2710
          %v2721 = vsel %vm2332, %v2711, %v2712
          %v2723 = vsel %vm2336, %v2721, %v2713
          %v2724 = vsel %vm2339, %v2718, %v2723
          %s2726 = scalar_lea.vmem [#allocation2], 30
          %2727 = vst.msk [vmem:[%s2726] sm:$0x1f] %vm2348, %v2724
          %v2728 = vrot.slane %v2270, 7
          %v2729 = vrot.slane %v2271, 7
          %v2730 = vrot.slane %v2272, 7
          %v2731 = vrot.slane %v2273, 7
          %v2737 = vrot.slane %v2275, 6
          %v2738 = vrot.slane %v2276, 6
          %v2739 = vrot.slane %v2277, 6
          %v2740 = vrot.slane %v2278, 6
          %2741 = vrot.lane.b32.xlu0 %v2669, 96
          %v2742 = vpop.permute.xlu0 %2741
          %2743 = vrot.lane.b32.xlu0 %v2737, 96
          %v2744 = vpop.permute.xlu0 %2743
          %2745 = vrot.lane.b32.xlu0 %v2738, 96
          %v2746 = vpop.permute.xlu0 %2745
          %2747 = vrot.lane.b32.xlu0 %v2739, 96
          %v2748 = vpop.permute.xlu0 %2747
          %2749 = vrot.lane.b32.xlu0 %v2740, 96
          %v2750 = vpop.permute.xlu0 %2749
          %v2751 = vsel %vm2299, %v2742, %v2744
          %v2752 = vsel %vm2299, %v2744, %v2746
          %v2753 = vsel %vm2299, %v2746, %v2748
          %v2754 = vsel %vm2299, %v2748, %v2750
          %v2760 = vsel %vm2309, %v2728, %v2751
          %v2761 = vsel %vm2309, %v2729, %v2752
          %v2762 = vsel %vm2309, %v2730, %v2753
          %v2763 = vsel %vm2309, %v2731, %v2754
          %v2764 = vsel %vm2309, %v2284, %v2750
          %v2765 = vpack.c.bf16 %v2761, %v2760
          %v2766 = vpack.c.bf16 %v2763, %v2762
          %v2767 = vpack.c.bf16 %v2764, %v2764
          %v2771 = vrot.slane %v2765, 3
          %v2772 = vrot.slane %v2766, 6
          %v2773 = vrot.slane %v2766, 1
          %v2774 = vrot.slane %v2767, 4
          %v2775 = vrot.slane %v2767, 7
          %v2778 = vsel %vm2309, %v2765, %v2771
          %v2780 = vsel %vm2329, %v2778, %v2772
          %v2783 = vsel %vm2332, %v2773, %v2774
          %v2785 = vsel %vm2336, %v2783, %v2775
          %v2786 = vsel %vm2339, %v2780, %v2785
          %s2788 = scalar_lea.vmem [#allocation2], 35
          %2789 = vst.msk [vmem:[%s2788] sm:$0x1f] %vm2348, %v2786
          %2790 = vst [vmem:[#allocation3] sm:$0xff] 0.0
          %vm2791 = vcmask 254976
          %2792 = vst.msk [vmem:[#allocation3 + $0x8] sm:$0x3] %vm2791, 0.0
        $region56: #{mlp_forward.1} parent=51 // pred_fallthru
          _
        %s2793 = smul.u32 %s20, 2
        %s2794 = smul.u32 %s2793, 5
        %s2795 = scalar_lea.vmem [#allocation2], %s2794
        %v2796 = vld [vmem:[%s2795] sm:$0x1f]
        %v2797 = vld [vmem:[%s295] sm:$0xff]
        %v2798 = vld [vmem:[%s295 + $0x8] sm:$0xff]
        %v2799 = vld [vmem:[%s295 + $0x10] sm:$0xf]
        %v2800 = vld [vmem:[%s295 + $0x14] sm:$0xff]
        %v2801 = vld [vmem:[%s295 + $0x1c] sm:$0xff]
        %v2802 = vld [vmem:[%s295 + $0x24] sm:$0xf]
        %v2803 = vld [vmem:[%s295 + $0x28] sm:$0xff]
        %v2804 = vld [vmem:[%s295 + $0x30] sm:$0xff]
        %v2805 = vld [vmem:[%s295 + $0x38] sm:$0xf]
        %v2806 = vld [vmem:[%s295 + $0x3c] sm:$0xff]
        %v2807 = vld [vmem:[%s295 + $0x44] sm:$0xff]
        %v2808 = vld [vmem:[%s295 + $0x4c] sm:$0xf]
        %v2809 = vld [vmem:[%s295 + $0x50] sm:$0xff]
        %v2810 = vld [vmem:[%s295 + $0x58] sm:$0xff]
        %v2811 = vld [vmem:[%s295 + $0x60] sm:$0xf]
        %v2812 = vld [vmem:[%s295 + $0x64] sm:$0xff]
        %v2813 = vld [vmem:[%s295 + $0x6c] sm:$0xff]
        %v2814 = vld [vmem:[%s295 + $0x74] sm:$0xf]
        %v2815 = vld [vmem:[%s295 + $0x78] sm:$0xff]
        %v2816 = vld [vmem:[%s295 + $0x80] sm:$0xff]
        %v2817 = vld [vmem:[%s295 + $0x88] sm:$0xf]
        %v2818 = vld [vmem:[%s295 + $0x8c] sm:$0xff]
        %v2819 = vld [vmem:[%s295 + $0x94] sm:$0xff]
        %v2820 = vld [vmem:[%s295 + $0x9c] sm:$0xf]
        %v2821 = vld [vmem:[%s295 + $0xa0] sm:$0xff]
        %v2822 = vld [vmem:[%s295 + $0xa8] sm:$0xff]
        %v2823 = vld [vmem:[%s295 + $0xb0] sm:$0xf]
        %v2824 = vld [vmem:[%s295 + $0xb4] sm:$0xff]
        %v2825 = vld [vmem:[%s295 + $0xbc] sm:$0xff]
        %v2826 = vld [vmem:[%s295 + $0xc4] sm:$0xf]
        %v2827 = vld [vmem:[%s295 + $0xc8] sm:$0xff]
        %v2828 = vld [vmem:[%s295 + $0xd0] sm:$0xff]
        %v2829 = vld [vmem:[%s295 + $0xd8] sm:$0xf]
        %v2830 = vld [vmem:[%s295 + $0xdc] sm:$0xff]
        %v2831 = vld [vmem:[%s295 + $0xe4] sm:$0xff]
        %v2832 = vld [vmem:[%s295 + $0xec] sm:$0xf]
        %v2833 = vld [vmem:[%s295 + $0xf0] sm:$0xff]
        %v2834 = vld [vmem:[%s295 + $0xf8] sm:$0xff]
        %v2835 = vld [vmem:[%s295 + $0x100] sm:$0xf]
        %v2836 = vld [vmem:[%s295 + $0x104] sm:$0xff]
        %v2837 = vld [vmem:[%s295 + $0x10c] sm:$0xff]
        %v2838 = vld [vmem:[%s295 + $0x114] sm:$0xf]
        %v2839 = vld [vmem:[%s295 + $0x118] sm:$0xff]
        %v2840 = vld [vmem:[%s295 + $0x120] sm:$0xff]
        %v2841 = vld [vmem:[%s295 + $0x128] sm:$0xf]
        %v2842 = vld [vmem:[%s295 + $0x12c] sm:$0xff]
        %v2843 = vld [vmem:[%s295 + $0x134] sm:$0xff]
        %v2844 = vld [vmem:[%s295 + $0x13c] sm:$0xf]
        %v2845 = vld [vmem:[%s295 + $0x140] sm:$0xff]
        %v2846 = vld [vmem:[%s295 + $0x148] sm:$0xff]
        %v2847 = vld [vmem:[%s295 + $0x150] sm:$0xf]
        %v2848 = vld [vmem:[%s295 + $0x154] sm:$0xff]
        %v2849 = vld [vmem:[%s295 + $0x15c] sm:$0xff]
        %v2850 = vld [vmem:[%s295 + $0x164] sm:$0xf]
        %v2851 = vld [vmem:[%s295 + $0x168] sm:$0xff]
        %v2852 = vld [vmem:[%s295 + $0x170] sm:$0xff]
        %v2853 = vld [vmem:[%s295 + $0x178] sm:$0xf]
        %v2854 = vld [vmem:[%s295 + $0x17c] sm:$0xff]
        %v2855 = vld [vmem:[%s295 + $0x184] sm:$0xff]
        %v2856 = vld [vmem:[%s295 + $0x18c] sm:$0xf]
        %v2857 = vld [vmem:[%s295 + $0x190] sm:$0xff]
        %v2858 = vld [vmem:[%s295 + $0x198] sm:$0xff]
        %v2859 = vld [vmem:[%s295 + $0x1a0] sm:$0xf]
        %v2860 = vld [vmem:[%s295 + $0x1a4] sm:$0xff]
        %v2861 = vld [vmem:[%s295 + $0x1ac] sm:$0xff]
        %v2862 = vld [vmem:[%s295 + $0x1b4] sm:$0xf]
        %v2863 = vld [vmem:[%s295 + $0x1b8] sm:$0xff]
        %v2864 = vld [vmem:[%s295 + $0x1c0] sm:$0xff]
        %v2865 = vld [vmem:[%s295 + $0x1c8] sm:$0xf]
        %v2866 = vld [vmem:[%s295 + $0x1cc] sm:$0xff]
        %v2867 = vld [vmem:[%s295 + $0x1d4] sm:$0xff]
        %v2868 = vld [vmem:[%s295 + $0x1dc] sm:$0xf]
        %v2869 = vld [vmem:[%s295 + $0x1e0] sm:$0xff]
        %v2870 = vld [vmem:[%s295 + $0x1e8] sm:$0xff]
        %v2871 = vld [vmem:[%s295 + $0x1f0] sm:$0xf]
        %v2872 = vld [vmem:[%s295 + $0x1f4] sm:$0xff]
        %v2873 = vld [vmem:[%s295 + $0x1fc] sm:$0xff]
        %v2874 = vld [vmem:[%s295 + $0x204] sm:$0xf]
        %v2875 = vld [vmem:[%s295 + $0x208] sm:$0xff]
        %v2876 = vld [vmem:[%s295 + $0x210] sm:$0xff]
        %v2877 = vld [vmem:[%s295 + $0x218] sm:$0xf]
        %v2878 = vld [vmem:[%s295 + $0x21c] sm:$0xff]
        %v2879 = vld [vmem:[%s295 + $0x224] sm:$0xff]
        %v2880 = vld [vmem:[%s295 + $0x22c] sm:$0xf]
        %v2881 = vld [vmem:[%s295 + $0x230] sm:$0xff]
        %v2882 = vld [vmem:[%s295 + $0x238] sm:$0xff]
        %v2883 = vld [vmem:[%s295 + $0x240] sm:$0xf]
        %v2884 = vld [vmem:[%s295 + $0x244] sm:$0xff]
        %v2885 = vld [vmem:[%s295 + $0x24c] sm:$0xff]
        %v2886 = vld [vmem:[%s295 + $0x254] sm:$0xf]
        %v2887 = vld [vmem:[%s295 + $0x258] sm:$0xff]
        %v2888 = vld [vmem:[%s295 + $0x260] sm:$0xff]
        %v2889 = vld [vmem:[%s295 + $0x268] sm:$0xf]
        %v2890 = vld [vmem:[%s295 + $0x26c] sm:$0xff]
        %v2891 = vld [vmem:[%s295 + $0x274] sm:$0xff]
        %v2892 = vld [vmem:[%s295 + $0x27c] sm:$0xf]
        %v2893 = vld [vmem:[%s295 + $0x280] sm:$0xff]
        %v2894 = vld [vmem:[%s295 + $0x288] sm:$0xff]
        %v2895 = vld [vmem:[%s295 + $0x290] sm:$0xf]
        %v2896 = vld [vmem:[%s295 + $0x294] sm:$0xff]
        %v2897 = vld [vmem:[%s295 + $0x29c] sm:$0xff]
        %v2898 = vld [vmem:[%s295 + $0x2a4] sm:$0xf]
        %v2899 = vld [vmem:[%s295 + $0x2a8] sm:$0xff]
        %v2900 = vld [vmem:[%s295 + $0x2b0] sm:$0xff]
        %v2901 = vld [vmem:[%s295 + $0x2b8] sm:$0xf]
        %v2902 = vld [vmem:[%s295 + $0x2bc] sm:$0xff]
        %v2903 = vld [vmem:[%s295 + $0x2c4] sm:$0xff]
        %v2904 = vld [vmem:[%s295 + $0x2cc] sm:$0xf]
        %v2905 = vld [vmem:[%s295 + $0x2d0] sm:$0xff]
        %v2906 = vld [vmem:[%s295 + $0x2d8] sm:$0xff]
        %v2907 = vld [vmem:[%s295 + $0x2e0] sm:$0xf]
        %v2908 = vld [vmem:[%s295 + $0x2e4] sm:$0xff]
        %v2909 = vld [vmem:[%s295 + $0x2ec] sm:$0xff]
        %v2910 = vld [vmem:[%s295 + $0x2f4] sm:$0xf]
        %v2911 = vld [vmem:[%s295 + $0x2f8] sm:$0xff]
        %v2912 = vld [vmem:[%s295 + $0x300] sm:$0xff]
        %v2913 = vld [vmem:[%s295 + $0x308] sm:$0xf]
        %v2914 = vld [vmem:[%s295 + $0x30c] sm:$0xff]
        %v2915 = vld [vmem:[%s295 + $0x314] sm:$0xff]
        %v2916 = vld [vmem:[%s295 + $0x31c] sm:$0xf]
        %v2917 = vld [vmem:[%s295 + $0x320] sm:$0xff]
        %v2918 = vld [vmem:[%s295 + $0x328] sm:$0xff]
        %v2919 = vld [vmem:[%s295 + $0x330] sm:$0xf]
        %v2920 = vld [vmem:[%s295 + $0x334] sm:$0xff]
        %v2921 = vld [vmem:[%s295 + $0x33c] sm:$0xff]
        %v2922 = vld [vmem:[%s295 + $0x344] sm:$0xf]
        %v2923 = vld [vmem:[%s295 + $0x348] sm:$0xff]
        %v2924 = vld [vmem:[%s295 + $0x350] sm:$0xff]
        %v2925 = vld [vmem:[%s295 + $0x358] sm:$0xf]
        %v2926 = vld [vmem:[%s295 + $0x35c] sm:$0xff]
        %v2927 = vld [vmem:[%s295 + $0x364] sm:$0xff]
        %v2928 = vld [vmem:[%s295 + $0x36c] sm:$0xf]
        %v2929 = vld [vmem:[%s295 + $0x370] sm:$0xff]
        %v2930 = vld [vmem:[%s295 + $0x378] sm:$0xff]
        %v2931 = vld [vmem:[%s295 + $0x380] sm:$0xf]
        %v2932 = vld [vmem:[%s295 + $0x384] sm:$0xff]
        %v2933 = vld [vmem:[%s295 + $0x38c] sm:$0xff]
        %v2934 = vld [vmem:[%s295 + $0x394] sm:$0xf]
        %v2935 = vld [vmem:[%s295 + $0x398] sm:$0xff]
        %v2936 = vld [vmem:[%s295 + $0x3a0] sm:$0xff]
        %v2937 = vld [vmem:[%s295 + $0x3a8] sm:$0xf]
        %v2938 = vld [vmem:[%s295 + $0x3ac] sm:$0xff]
        %v2939 = vld [vmem:[%s295 + $0x3b4] sm:$0xff]
        %v2940 = vld [vmem:[%s295 + $0x3bc] sm:$0xf]
        %v2941 = vld [vmem:[%s295 + $0x3c0] sm:$0xff]
        %v2942 = vld [vmem:[%s295 + $0x3c8] sm:$0xff]
        %v2943 = vld [vmem:[%s295 + $0x3d0] sm:$0xf]
        %v2944 = vld [vmem:[%s295 + $0x3d4] sm:$0xff]
        %v2945 = vld [vmem:[%s295 + $0x3dc] sm:$0xff]
        %v2946 = vld [vmem:[%s295 + $0x3e4] sm:$0xf]
        %v2947 = vld [vmem:[%s295 + $0x3e8] sm:$0xff]
        %v2948 = vld [vmem:[%s295 + $0x3f0] sm:$0xff]
        %v2949 = vld [vmem:[%s295 + $0x3f8] sm:$0xf]
        %v2950 = vld [vmem:[%s295 + $0x3fc] sm:$0xff]
        %v2951 = vld [vmem:[%s295 + $0x404] sm:$0xff]
        %v2952 = vld [vmem:[%s295 + $0x40c] sm:$0xf]
        %v2953 = vld [vmem:[%s295 + $0x410] sm:$0xff]
        %v2954 = vld [vmem:[%s295 + $0x418] sm:$0xff]
        %v2955 = vld [vmem:[%s295 + $0x420] sm:$0xf]
        %v2956 = vld [vmem:[%s295 + $0x424] sm:$0xff]
        %v2957 = vld [vmem:[%s295 + $0x42c] sm:$0xff]
        %v2958 = vld [vmem:[%s295 + $0x434] sm:$0xf]
        %v2959 = vld [vmem:[%s295 + $0x438] sm:$0xff]
        %v2960 = vld [vmem:[%s295 + $0x440] sm:$0xff]
        %v2961 = vld [vmem:[%s295 + $0x448] sm:$0xf]
        %v2962 = vld [vmem:[%s295 + $0x44c] sm:$0xff]
        %v2963 = vld [vmem:[%s295 + $0x454] sm:$0xff]
        %v2964 = vld [vmem:[%s295 + $0x45c] sm:$0xf]
        %v2965 = vld [vmem:[%s295 + $0x460] sm:$0xff]
        %v2966 = vld [vmem:[%s295 + $0x468] sm:$0xff]
        %v2967 = vld [vmem:[%s295 + $0x470] sm:$0xf]
        %v2968 = vld [vmem:[%s295 + $0x474] sm:$0xff]
        %v2969 = vld [vmem:[%s295 + $0x47c] sm:$0xff]
        %v2970 = vld [vmem:[%s295 + $0x484] sm:$0xf]
        %v2971 = vld [vmem:[%s295 + $0x488] sm:$0xff]
        %v2972 = vld [vmem:[%s295 + $0x490] sm:$0xff]
        %v2973 = vld [vmem:[%s295 + $0x498] sm:$0xf]
        %v2974 = vld [vmem:[%s295 + $0x49c] sm:$0xff]
        %v2975 = vld [vmem:[%s295 + $0x4a4] sm:$0xff]
        %v2976 = vld [vmem:[%s295 + $0x4ac] sm:$0xf]
        %v2977 = vld [vmem:[%s295 + $0x4b0] sm:$0xff]
        %v2978 = vld [vmem:[%s295 + $0x4b8] sm:$0xff]
        %v2979 = vld [vmem:[%s295 + $0x4c0] sm:$0xf]
        %v2980 = vld [vmem:[%s295 + $0x4c4] sm:$0xff]
        %v2981 = vld [vmem:[%s295 + $0x4cc] sm:$0xff]
        %v2982 = vld [vmem:[%s295 + $0x4d4] sm:$0xf]
        %v2983 = vld [vmem:[%s295 + $0x4d8] sm:$0xff]
        %v2984 = vld [vmem:[%s295 + $0x4e0] sm:$0xff]
        %v2985 = vld [vmem:[%s295 + $0x4e8] sm:$0xf]
        %v2986 = vld [vmem:[%s295 + $0x4ec] sm:$0xff]
        %v2987 = vld [vmem:[%s295 + $0x4f4] sm:$0xff]
        %v2988 = vld [vmem:[%s295 + $0x4fc] sm:$0xf]
        %v2989 = vld [vmem:[%s295 + $0x500] sm:$0xff]
        %v2990 = vld [vmem:[%s295 + $0x508] sm:$0xff]
        %v2991 = vld [vmem:[%s295 + $0x510] sm:$0xf]
        %v2992 = vld [vmem:[%s295 + $0x514] sm:$0xff]
        %v2993 = vld [vmem:[%s295 + $0x51c] sm:$0xff]
        %v2994 = vld [vmem:[%s295 + $0x524] sm:$0xf]
        %v2995 = vld [vmem:[%s295 + $0x528] sm:$0xff]
        %v2996 = vld [vmem:[%s295 + $0x530] sm:$0xff]
        %v2997 = vld [vmem:[%s295 + $0x538] sm:$0xf]
        %v2998 = vld [vmem:[%s295 + $0x53c] sm:$0xff]
        %v2999 = vld [vmem:[%s295 + $0x544] sm:$0xff]
        %v3000 = vld [vmem:[%s295 + $0x54c] sm:$0xf]
        %s3001 = sadd.s32 %s2793, 1
        %s3002 = smul.u32 %s3001, 5
        %s3003 = scalar_lea.vmem [#allocation2], %s3002
        %v3004 = vld [vmem:[%s3003] sm:$0x1f]
        %s3005 = scalar_lea.vmem %s295, 1360
        %v3006 = vld [vmem:[%s3005] sm:$0xff]
        %v3007 = vld [vmem:[%s3005 + $0x8] sm:$0xff]
        %v3008 = vld [vmem:[%s3005 + $0x10] sm:$0xf]
        %v3009 = vld [vmem:[%s3005 + $0x14] sm:$0xff]
        %v3010 = vld [vmem:[%s3005 + $0x1c] sm:$0xff]
        %v3011 = vld [vmem:[%s3005 + $0x24] sm:$0xf]
        %v3012 = vld [vmem:[%s3005 + $0x28] sm:$0xff]
        %v3013 = vld [vmem:[%s3005 + $0x30] sm:$0xff]
        %v3014 = vld [vmem:[%s3005 + $0x38] sm:$0xf]
        %v3015 = vld [vmem:[%s3005 + $0x3c] sm:$0xff]
        %v3016 = vld [vmem:[%s3005 + $0x44] sm:$0xff]
        %v3017 = vld [vmem:[%s3005 + $0x4c] sm:$0xf]
        %v3018 = vld [vmem:[%s3005 + $0x50] sm:$0xff]
        %v3019 = vld [vmem:[%s3005 + $0x58] sm:$0xff]
        %v3020 = vld [vmem:[%s3005 + $0x60] sm:$0xf]
        %v3021 = vld [vmem:[%s3005 + $0x64] sm:$0xff]
        %v3022 = vld [vmem:[%s3005 + $0x6c] sm:$0xff]
        %v3023 = vld [vmem:[%s3005 + $0x74] sm:$0xf]
        %v3024 = vld [vmem:[%s3005 + $0x78] sm:$0xff]
        %v3025 = vld [vmem:[%s3005 + $0x80] sm:$0xff]
        %v3026 = vld [vmem:[%s3005 + $0x88] sm:$0xf]
        %v3027 = vld [vmem:[%s3005 + $0x8c] sm:$0xff]
        %v3028 = vld [vmem:[%s3005 + $0x94] sm:$0xff]
        %v3029 = vld [vmem:[%s3005 + $0x9c] sm:$0xf]
        %v3030 = vld [vmem:[%s3005 + $0xa0] sm:$0xff]
        %v3031 = vld [vmem:[%s3005 + $0xa8] sm:$0xff]
        %v3032 = vld [vmem:[%s3005 + $0xb0] sm:$0xf]
        %v3033 = vld [vmem:[%s3005 + $0xb4] sm:$0xff]
        %v3034 = vld [vmem:[%s3005 + $0xbc] sm:$0xff]
        %v3035 = vld [vmem:[%s3005 + $0xc4] sm:$0xf]
        %v3036 = vld [vmem:[%s3005 + $0xc8] sm:$0xff]
        %v3037 = vld [vmem:[%s3005 + $0xd0] sm:$0xff]
        %v3038 = vld [vmem:[%s3005 + $0xd8] sm:$0xf]
        %v3039 = vld [vmem:[%s3005 + $0xdc] sm:$0xff]
        %v3040 = vld [vmem:[%s3005 + $0xe4] sm:$0xff]
        %v3041 = vld [vmem:[%s3005 + $0xec] sm:$0xf]
        %v3042 = vld [vmem:[%s3005 + $0xf0] sm:$0xff]
        %v3043 = vld [vmem:[%s3005 + $0xf8] sm:$0xff]
        %v3044 = vld [vmem:[%s3005 + $0x100] sm:$0xf]
        %v3045 = vld [vmem:[%s3005 + $0x104] sm:$0xff]
        %v3046 = vld [vmem:[%s3005 + $0x10c] sm:$0xff]
        %v3047 = vld [vmem:[%s3005 + $0x114] sm:$0xf]
        %v3048 = vld [vmem:[%s3005 + $0x118] sm:$0xff]
        %v3049 = vld [vmem:[%s3005 + $0x120] sm:$0xff]
        %v3050 = vld [vmem:[%s3005 + $0x128] sm:$0xf]
        %v3051 = vld [vmem:[%s3005 + $0x12c] sm:$0xff]
        %v3052 = vld [vmem:[%s3005 + $0x134] sm:$0xff]
        %v3053 = vld [vmem:[%s3005 + $0x13c] sm:$0xf]
        %v3054 = vld [vmem:[%s3005 + $0x140] sm:$0xff]
        %v3055 = vld [vmem:[%s3005 + $0x148] sm:$0xff]
        %v3056 = vld [vmem:[%s3005 + $0x150] sm:$0xf]
        %v3057 = vld [vmem:[%s3005 + $0x154] sm:$0xff]
        %v3058 = vld [vmem:[%s3005 + $0x15c] sm:$0xff]
        %v3059 = vld [vmem:[%s3005 + $0x164] sm:$0xf]
        %v3060 = vld [vmem:[%s3005 + $0x168] sm:$0xff]
        %v3061 = vld [vmem:[%s3005 + $0x170] sm:$0xff]
        %v3062 = vld [vmem:[%s3005 + $0x178] sm:$0xf]
        %v3063 = vld [vmem:[%s3005 + $0x17c] sm:$0xff]
        %v3064 = vld [vmem:[%s3005 + $0x184] sm:$0xff]
        %v3065 = vld [vmem:[%s3005 + $0x18c] sm:$0xf]
        %v3066 = vld [vmem:[%s3005 + $0x190] sm:$0xff]
        %v3067 = vld [vmem:[%s3005 + $0x198] sm:$0xff]
        %v3068 = vld [vmem:[%s3005 + $0x1a0] sm:$0xf]
        %v3069 = vld [vmem:[%s3005 + $0x1a4] sm:$0xff]
        %v3070 = vld [vmem:[%s3005 + $0x1ac] sm:$0xff]
        %v3071 = vld [vmem:[%s3005 + $0x1b4] sm:$0xf]
        %v3072 = vld [vmem:[%s3005 + $0x1b8] sm:$0xff]
        %v3073 = vld [vmem:[%s3005 + $0x1c0] sm:$0xff]
        %v3074 = vld [vmem:[%s3005 + $0x1c8] sm:$0xf]
        %v3075 = vld [vmem:[%s3005 + $0x1cc] sm:$0xff]
        %v3076 = vld [vmem:[%s3005 + $0x1d4] sm:$0xff]
        %v3077 = vld [vmem:[%s3005 + $0x1dc] sm:$0xf]
        %v3078 = vld [vmem:[%s3005 + $0x1e0] sm:$0xff]
        %v3079 = vld [vmem:[%s3005 + $0x1e8] sm:$0xff]
        %v3080 = vld [vmem:[%s3005 + $0x1f0] sm:$0xf]
        %v3081 = vld [vmem:[%s3005 + $0x1f4] sm:$0xff]
        %v3082 = vld [vmem:[%s3005 + $0x1fc] sm:$0xff]
        %v3083 = vld [vmem:[%s3005 + $0x204] sm:$0xf]
        %v3084 = vld [vmem:[%s3005 + $0x208] sm:$0xff]
        %v3085 = vld [vmem:[%s3005 + $0x210] sm:$0xff]
        %v3086 = vld [vmem:[%s3005 + $0x218] sm:$0xf]
        %v3087 = vld [vmem:[%s3005 + $0x21c] sm:$0xff]
        %v3088 = vld [vmem:[%s3005 + $0x224] sm:$0xff]
        %v3089 = vld [vmem:[%s3005 + $0x22c] sm:$0xf]
        %v3090 = vld [vmem:[%s3005 + $0x230] sm:$0xff]
        %v3091 = vld [vmem:[%s3005 + $0x238] sm:$0xff]
        %v3092 = vld [vmem:[%s3005 + $0x240] sm:$0xf]
        %v3093 = vld [vmem:[%s3005 + $0x244] sm:$0xff]
        %v3094 = vld [vmem:[%s3005 + $0x24c] sm:$0xff]
        %v3095 = vld [vmem:[%s3005 + $0x254] sm:$0xf]
        %v3096 = vld [vmem:[%s3005 + $0x258] sm:$0xff]
        %v3097 = vld [vmem:[%s3005 + $0x260] sm:$0xff]
        %v3098 = vld [vmem:[%s3005 + $0x268] sm:$0xf]
        %v3099 = vld [vmem:[%s3005 + $0x26c] sm:$0xff]
        %v3100 = vld [vmem:[%s3005 + $0x274] sm:$0xff]
        %v3101 = vld [vmem:[%s3005 + $0x27c] sm:$0xf]
        %v3102 = vld [vmem:[%s3005 + $0x280] sm:$0xff]
        %v3103 = vld [vmem:[%s3005 + $0x288] sm:$0xff]
        %v3104 = vld [vmem:[%s3005 + $0x290] sm:$0xf]
        %v3105 = vld [vmem:[%s3005 + $0x294] sm:$0xff]
        %v3106 = vld [vmem:[%s3005 + $0x29c] sm:$0xff]
        %v3107 = vld [vmem:[%s3005 + $0x2a4] sm:$0xf]
        %v3108 = vld [vmem:[%s3005 + $0x2a8] sm:$0xff]
        %v3109 = vld [vmem:[%s3005 + $0x2b0] sm:$0xff]
        %v3110 = vld [vmem:[%s3005 + $0x2b8] sm:$0xf]
        %v3111 = vld [vmem:[%s3005 + $0x2bc] sm:$0xff]
        %v3112 = vld [vmem:[%s3005 + $0x2c4] sm:$0xff]
        %v3113 = vld [vmem:[%s3005 + $0x2cc] sm:$0xf]
        %v3114 = vld [vmem:[%s3005 + $0x2d0] sm:$0xff]
        %v3115 = vld [vmem:[%s3005 + $0x2d8] sm:$0xff]
        %v3116 = vld [vmem:[%s3005 + $0x2e0] sm:$0xf]
        %v3117 = vld [vmem:[%s3005 + $0x2e4] sm:$0xff]
        %v3118 = vld [vmem:[%s3005 + $0x2ec] sm:$0xff]
        %v3119 = vld [vmem:[%s3005 + $0x2f4] sm:$0xf]
        %v3120 = vld [vmem:[%s3005 + $0x2f8] sm:$0xff]
        %v3121 = vld [vmem:[%s3005 + $0x300] sm:$0xff]
        %v3122 = vld [vmem:[%s3005 + $0x308] sm:$0xf]
        %v3123 = vld [vmem:[%s3005 + $0x30c] sm:$0xff]
        %v3124 = vld [vmem:[%s3005 + $0x314] sm:$0xff]
        %v3125 = vld [vmem:[%s3005 + $0x31c] sm:$0xf]
        %v3126 = vld [vmem:[%s3005 + $0x320] sm:$0xff]
        %v3127 = vld [vmem:[%s3005 + $0x328] sm:$0xff]
        %v3128 = vld [vmem:[%s3005 + $0x330] sm:$0xf]
        %v3129 = vld [vmem:[%s3005 + $0x334] sm:$0xff]
        %v3130 = vld [vmem:[%s3005 + $0x33c] sm:$0xff]
        %v3131 = vld [vmem:[%s3005 + $0x344] sm:$0xf]
        %v3132 = vld [vmem:[%s3005 + $0x348] sm:$0xff]
        %v3133 = vld [vmem:[%s3005 + $0x350] sm:$0xff]
        %v3134 = vld [vmem:[%s3005 + $0x358] sm:$0xf]
        %v3135 = vld [vmem:[%s3005 + $0x35c] sm:$0xff]
        %v3136 = vld [vmem:[%s3005 + $0x364] sm:$0xff]
        %v3137 = vld [vmem:[%s3005 + $0x36c] sm:$0xf]
        %v3138 = vld [vmem:[%s3005 + $0x370] sm:$0xff]
        %v3139 = vld [vmem:[%s3005 + $0x378] sm:$0xff]
        %v3140 = vld [vmem:[%s3005 + $0x380] sm:$0xf]
        %v3141 = vld [vmem:[%s3005 + $0x384] sm:$0xff]
        %v3142 = vld [vmem:[%s3005 + $0x38c] sm:$0xff]
        %v3143 = vld [vmem:[%s3005 + $0x394] sm:$0xf]
        %v3144 = vld [vmem:[%s3005 + $0x398] sm:$0xff]
        %v3145 = vld [vmem:[%s3005 + $0x3a0] sm:$0xff]
        %v3146 = vld [vmem:[%s3005 + $0x3a8] sm:$0xf]
        %v3147 = vld [vmem:[%s3005 + $0x3ac] sm:$0xff]
        %v3148 = vld [vmem:[%s3005 + $0x3b4] sm:$0xff]
        %v3149 = vld [vmem:[%s3005 + $0x3bc] sm:$0xf]
        %v3150 = vld [vmem:[%s3005 + $0x3c0] sm:$0xff]
        %v3151 = vld [vmem:[%s3005 + $0x3c8] sm:$0xff]
        %v3152 = vld [vmem:[%s3005 + $0x3d0] sm:$0xf]
        %v3153 = vld [vmem:[%s3005 + $0x3d4] sm:$0xff]
        %v3154 = vld [vmem:[%s3005 + $0x3dc] sm:$0xff]
        %v3155 = vld [vmem:[%s3005 + $0x3e4] sm:$0xf]
        %v3156 = vld [vmem:[%s3005 + $0x3e8] sm:$0xff]
        %v3157 = vld [vmem:[%s3005 + $0x3f0] sm:$0xff]
        %v3158 = vld [vmem:[%s3005 + $0x3f8] sm:$0xf]
        %v3159 = vld [vmem:[%s3005 + $0x3fc] sm:$0xff]
        %v3160 = vld [vmem:[%s3005 + $0x404] sm:$0xff]
        %v3161 = vld [vmem:[%s3005 + $0x40c] sm:$0xf]
        %v3162 = vld [vmem:[%s3005 + $0x410] sm:$0xff]
        %v3163 = vld [vmem:[%s3005 + $0x418] sm:$0xff]
        %v3164 = vld [vmem:[%s3005 + $0x420] sm:$0xf]
        %v3165 = vld [vmem:[%s3005 + $0x424] sm:$0xff]
        %v3166 = vld [vmem:[%s3005 + $0x42c] sm:$0xff]
        %v3167 = vld [vmem:[%s3005 + $0x434] sm:$0xf]
        %v3168 = vld [vmem:[%s3005 + $0x438] sm:$0xff]
        %v3169 = vld [vmem:[%s3005 + $0x440] sm:$0xff]
        %v3170 = vld [vmem:[%s3005 + $0x448] sm:$0xf]
        %v3171 = vld [vmem:[%s3005 + $0x44c] sm:$0xff]
        %v3172 = vld [vmem:[%s3005 + $0x454] sm:$0xff]
        %v3173 = vld [vmem:[%s3005 + $0x45c] sm:$0xf]
        %v3174 = vld [vmem:[%s3005 + $0x460] sm:$0xff]
        %v3175 = vld [vmem:[%s3005 + $0x468] sm:$0xff]
        %v3176 = vld [vmem:[%s3005 + $0x470] sm:$0xf]
        %v3177 = vld [vmem:[%s3005 + $0x474] sm:$0xff]
        %v3178 = vld [vmem:[%s3005 + $0x47c] sm:$0xff]
        %v3179 = vld [vmem:[%s3005 + $0x484] sm:$0xf]
        %v3180 = vld [vmem:[%s3005 + $0x488] sm:$0xff]
        %v3181 = vld [vmem:[%s3005 + $0x490] sm:$0xff]
        %v3182 = vld [vmem:[%s3005 + $0x498] sm:$0xf]
        %v3183 = vld [vmem:[%s3005 + $0x49c] sm:$0xff]
        %v3184 = vld [vmem:[%s3005 + $0x4a4] sm:$0xff]
        %v3185 = vld [vmem:[%s3005 + $0x4ac] sm:$0xf]
        %v3186 = vld [vmem:[%s3005 + $0x4b0] sm:$0xff]
        %v3187 = vld [vmem:[%s3005 + $0x4b8] sm:$0xff]
        %v3188 = vld [vmem:[%s3005 + $0x4c0] sm:$0xf]
        %v3189 = vld [vmem:[%s3005 + $0x4c4] sm:$0xff]
        %v3190 = vld [vmem:[%s3005 + $0x4cc] sm:$0xff]
        %v3191 = vld [vmem:[%s3005 + $0x4d4] sm:$0xf]
        %v3192 = vld [vmem:[%s3005 + $0x4d8] sm:$0xff]
        %v3193 = vld [vmem:[%s3005 + $0x4e0] sm:$0xff]
        %v3194 = vld [vmem:[%s3005 + $0x4e8] sm:$0xf]
        %v3195 = vld [vmem:[%s3005 + $0x4ec] sm:$0xff]
        %v3196 = vld [vmem:[%s3005 + $0x4f4] sm:$0xff]
        %v3197 = vld [vmem:[%s3005 + $0x4fc] sm:$0xf]
        %v3198 = vld [vmem:[%s3005 + $0x500] sm:$0xff]
        %v3199 = vld [vmem:[%s3005 + $0x508] sm:$0xff]
        %v3200 = vld [vmem:[%s3005 + $0x510] sm:$0xf]
        %v3201 = vld [vmem:[%s3005 + $0x514] sm:$0xff]
        %v3202 = vld [vmem:[%s3005 + $0x51c] sm:$0xff]
        %v3203 = vld [vmem:[%s3005 + $0x524] sm:$0xf]
        %v3204 = vld [vmem:[%s3005 + $0x528] sm:$0xff]
        %v3205 = vld [vmem:[%s3005 + $0x530] sm:$0xff]
        %v3206 = vld [vmem:[%s3005 + $0x538] sm:$0xf]
        %v3207 = vld [vmem:[%s3005 + $0x53c] sm:$0xff]
        %v3208 = vld [vmem:[%s3005 + $0x544] sm:$0xff]
        %v3209 = vld [vmem:[%s3005 + $0x54c] sm:$0xf]
        %3211 = vst [vmem:[#allocation1] ss:$9 sm:$0xff] %v3004
        %v3212 = vld [vmem:[#allocation1] sm:$0xff]
        %v3213 = vld [vmem:[#allocation1 + $0x9] sm:$0xff]
        %v3214 = vld [vmem:[#allocation1 + $0x12] sm:$0xff]
        %v3215 = vld [vmem:[#allocation1 + $0x1b] sm:$0xff]
        %v3216 = vld [vmem:[#allocation1 + $0x24] sm:$0xff]
        %v3425 = vunpack.c.l.b16 %v3006
        %v3426 = vunpack.c.h.b16 %v3006
        %v3427 = vunpack.c.l.b16 %v3007
        %v3428 = vunpack.c.h.b16 %v3007
        %v3429 = vunpack.c.l.b16 %v3008
        %v3430 = vunpack.c.l.b16 %v3009
        %v3431 = vunpack.c.h.b16 %v3009
        %v3432 = vunpack.c.l.b16 %v3010
        %v3433 = vunpack.c.h.b16 %v3010
        %v3434 = vunpack.c.l.b16 %v3011
        %v3435 = vunpack.c.l.b16 %v3012
        %v3436 = vunpack.c.h.b16 %v3012
        %v3437 = vunpack.c.l.b16 %v3013
        %v3438 = vunpack.c.h.b16 %v3013
        %v3439 = vunpack.c.l.b16 %v3014
        %v3440 = vunpack.c.l.b16 %v3015
        %v3441 = vunpack.c.h.b16 %v3015
        %v3442 = vunpack.c.l.b16 %v3016
        %v3443 = vunpack.c.h.b16 %v3016
        %v3444 = vunpack.c.l.b16 %v3017
        %v3445 = vunpack.c.l.b16 %v3018
        %v3446 = vunpack.c.h.b16 %v3018
        %v3447 = vunpack.c.l.b16 %v3019
        %v3448 = vunpack.c.h.b16 %v3019
        %v3449 = vunpack.c.l.b16 %v3020
        %v3450 = vunpack.c.l.b16 %v3021
        %v3451 = vunpack.c.h.b16 %v3021
        %v3452 = vunpack.c.l.b16 %v3022
        %v3453 = vunpack.c.h.b16 %v3022
        %v3454 = vunpack.c.l.b16 %v3023
        %v3455 = vunpack.c.l.b16 %v3024
        %v3456 = vunpack.c.h.b16 %v3024
        %v3457 = vunpack.c.l.b16 %v3025
        %v3458 = vunpack.c.h.b16 %v3025
        %v3459 = vunpack.c.l.b16 %v3026
        %v3460 = vunpack.c.l.b16 %v3027
        %v3461 = vunpack.c.h.b16 %v3027
        %v3462 = vunpack.c.l.b16 %v3028
        %v3463 = vunpack.c.h.b16 %v3028
        %v3464 = vunpack.c.l.b16 %v3029
        %v3465 = vunpack.c.l.b16 %v3030
        %v3466 = vunpack.c.h.b16 %v3030
        %v3467 = vunpack.c.l.b16 %v3031
        %v3468 = vunpack.c.h.b16 %v3031
        %v3469 = vunpack.c.l.b16 %v3032
        %v3470 = vunpack.c.l.b16 %v3033
        %v3471 = vunpack.c.h.b16 %v3033
        %v3472 = vunpack.c.l.b16 %v3034
        %v3473 = vunpack.c.h.b16 %v3034
        %v3474 = vunpack.c.l.b16 %v3035
        %v3475 = vunpack.c.l.b16 %v3036
        %v3476 = vunpack.c.h.b16 %v3036
        %v3477 = vunpack.c.l.b16 %v3037
        %v3478 = vunpack.c.h.b16 %v3037
        %v3479 = vunpack.c.l.b16 %v3038
        %v3480 = vunpack.c.l.b16 %v3039
        %v3481 = vunpack.c.h.b16 %v3039
        %v3482 = vunpack.c.l.b16 %v3040
        %v3483 = vunpack.c.h.b16 %v3040
        %v3484 = vunpack.c.l.b16 %v3041
        %v3485 = vunpack.c.l.b16 %v3042
        %v3486 = vunpack.c.h.b16 %v3042
        %v3487 = vunpack.c.l.b16 %v3043
        %v3488 = vunpack.c.h.b16 %v3043
        %v3489 = vunpack.c.l.b16 %v3044
        %v3490 = vunpack.c.l.b16 %v3045
        %v3491 = vunpack.c.h.b16 %v3045
        %v3492 = vunpack.c.l.b16 %v3046
        %v3493 = vunpack.c.h.b16 %v3046
        %v3494 = vunpack.c.l.b16 %v3047
        %v3495 = vunpack.c.l.b16 %v3048
        %v3496 = vunpack.c.h.b16 %v3048
        %v3497 = vunpack.c.l.b16 %v3049
        %v3498 = vunpack.c.h.b16 %v3049
        %v3499 = vunpack.c.l.b16 %v3050
        %v3500 = vunpack.c.l.b16 %v3051
        %v3501 = vunpack.c.h.b16 %v3051
        %v3502 = vunpack.c.l.b16 %v3052
        %v3503 = vunpack.c.h.b16 %v3052
        %v3504 = vunpack.c.l.b16 %v3053
        %v3505 = vunpack.c.l.b16 %v3054
        %v3506 = vunpack.c.h.b16 %v3054
        %v3507 = vunpack.c.l.b16 %v3055
        %v3508 = vunpack.c.h.b16 %v3055
        %v3509 = vunpack.c.l.b16 %v3056
        %v3510 = vunpack.c.l.b16 %v3057
        %v3511 = vunpack.c.h.b16 %v3057
        %v3512 = vunpack.c.l.b16 %v3058
        %v3513 = vunpack.c.h.b16 %v3058
        %v3514 = vunpack.c.l.b16 %v3059
        %v3515 = vunpack.c.l.b16 %v3060
        %v3516 = vunpack.c.h.b16 %v3060
        %v3517 = vunpack.c.l.b16 %v3061
        %v3518 = vunpack.c.h.b16 %v3061
        %v3519 = vunpack.c.l.b16 %v3062
        %v3520 = vunpack.c.l.b16 %v3063
        %v3521 = vunpack.c.h.b16 %v3063
        %v3522 = vunpack.c.l.b16 %v3064
        %v3523 = vunpack.c.h.b16 %v3064
        %v3524 = vunpack.c.l.b16 %v3065
        %v3525 = vunpack.c.l.b16 %v3066
        %v3526 = vunpack.c.h.b16 %v3066
        %v3527 = vunpack.c.l.b16 %v3067
        %v3528 = vunpack.c.h.b16 %v3067
        %v3529 = vunpack.c.l.b16 %v3068
        %v3530 = vunpack.c.l.b16 %v3069
        %v3531 = vunpack.c.h.b16 %v3069
        %v3532 = vunpack.c.l.b16 %v3070
        %v3533 = vunpack.c.h.b16 %v3070
        %v3534 = vunpack.c.l.b16 %v3071
        %v3535 = vunpack.c.l.b16 %v3072
        %v3536 = vunpack.c.h.b16 %v3072
        %v3537 = vunpack.c.l.b16 %v3073
        %v3538 = vunpack.c.h.b16 %v3073
        %v3539 = vunpack.c.l.b16 %v3074
        %v3540 = vunpack.c.l.b16 %v3075
        %v3541 = vunpack.c.h.b16 %v3075
        %v3542 = vunpack.c.l.b16 %v3076
        %v3543 = vunpack.c.h.b16 %v3076
        %v3544 = vunpack.c.l.b16 %v3077
        %v3545 = vunpack.c.l.b16 %v3078
        %v3546 = vunpack.c.h.b16 %v3078
        %v3547 = vunpack.c.l.b16 %v3079
        %v3548 = vunpack.c.h.b16 %v3079
        %v3549 = vunpack.c.l.b16 %v3080
        %v3550 = vunpack.c.l.b16 %v3081
        %v3551 = vunpack.c.h.b16 %v3081
        %v3552 = vunpack.c.l.b16 %v3082
        %v3553 = vunpack.c.h.b16 %v3082
        %v3554 = vunpack.c.l.b16 %v3083
        %v3555 = vunpack.c.l.b16 %v3084
        %v3556 = vunpack.c.h.b16 %v3084
        %v3557 = vunpack.c.l.b16 %v3085
        %v3558 = vunpack.c.h.b16 %v3085
        %v3559 = vunpack.c.l.b16 %v3086
        %v3560 = vunpack.c.l.b16 %v3087
        %v3561 = vunpack.c.h.b16 %v3087
        %v3562 = vunpack.c.l.b16 %v3088
        %v3563 = vunpack.c.h.b16 %v3088
        %v3564 = vunpack.c.l.b16 %v3089
        %v3565 = vunpack.c.l.b16 %v3090
        %v3566 = vunpack.c.h.b16 %v3090
        %v3567 = vunpack.c.l.b16 %v3091
        %v3568 = vunpack.c.h.b16 %v3091
        %v3569 = vunpack.c.l.b16 %v3092
        %v3570 = vunpack.c.l.b16 %v3093
        %v3571 = vunpack.c.h.b16 %v3093
        %v3572 = vunpack.c.l.b16 %v3094
        %v3573 = vunpack.c.h.b16 %v3094
        %v3574 = vunpack.c.l.b16 %v3095
        %v3575 = vunpack.c.l.b16 %v3096
        %v3576 = vunpack.c.h.b16 %v3096
        %v3577 = vunpack.c.l.b16 %v3097
        %v3578 = vunpack.c.h.b16 %v3097
        %v3579 = vunpack.c.l.b16 %v3098
        %v3580 = vunpack.c.l.b16 %v3099
        %v3581 = vunpack.c.h.b16 %v3099
        %v3582 = vunpack.c.l.b16 %v3100
        %v3583 = vunpack.c.h.b16 %v3100
        %v3584 = vunpack.c.l.b16 %v3101
        %v3585 = vunpack.c.l.b16 %v3102
        %v3586 = vunpack.c.h.b16 %v3102
        %v3587 = vunpack.c.l.b16 %v3103
        %v3588 = vunpack.c.h.b16 %v3103
        %v3589 = vunpack.c.l.b16 %v3104
        %v3590 = vunpack.c.l.b16 %v3105
        %v3591 = vunpack.c.h.b16 %v3105
        %v3592 = vunpack.c.l.b16 %v3106
        %v3593 = vunpack.c.h.b16 %v3106
        %v3594 = vunpack.c.l.b16 %v3107
        %v3595 = vunpack.c.l.b16 %v3108
        %v3596 = vunpack.c.h.b16 %v3108
        %v3597 = vunpack.c.l.b16 %v3109
        %v3598 = vunpack.c.h.b16 %v3109
        %v3599 = vunpack.c.l.b16 %v3110
        %v3600 = vunpack.c.l.b16 %v3111
        %v3601 = vunpack.c.h.b16 %v3111
        %v3602 = vunpack.c.l.b16 %v3112
        %v3603 = vunpack.c.h.b16 %v3112
        %v3604 = vunpack.c.l.b16 %v3113
        %v3605 = vunpack.c.l.b16 %v3114
        %v3606 = vunpack.c.h.b16 %v3114
        %v3607 = vunpack.c.l.b16 %v3115
        %v3608 = vunpack.c.h.b16 %v3115
        %v3609 = vunpack.c.l.b16 %v3116
        %v3610 = vunpack.c.l.b16 %v3117
        %v3611 = vunpack.c.h.b16 %v3117
        %v3612 = vunpack.c.l.b16 %v3118
        %v3613 = vunpack.c.h.b16 %v3118
        %v3614 = vunpack.c.l.b16 %v3119
        %v3615 = vunpack.c.l.b16 %v3120
        %v3616 = vunpack.c.h.b16 %v3120
        %v3617 = vunpack.c.l.b16 %v3121
        %v3618 = vunpack.c.h.b16 %v3121
        %v3619 = vunpack.c.l.b16 %v3122
        %v3620 = vunpack.c.l.b16 %v3123
        %v3621 = vunpack.c.h.b16 %v3123
        %v3622 = vunpack.c.l.b16 %v3124
        %v3623 = vunpack.c.h.b16 %v3124
        %v3624 = vunpack.c.l.b16 %v3125
        %v3625 = vunpack.c.l.b16 %v3126
        %v3626 = vunpack.c.h.b16 %v3126
        %v3627 = vunpack.c.l.b16 %v3127
        %v3628 = vunpack.c.h.b16 %v3127
        %v3629 = vunpack.c.l.b16 %v3128
        %v3630 = vunpack.c.l.b16 %v3129
        %v3631 = vunpack.c.h.b16 %v3129
        %v3632 = vunpack.c.l.b16 %v3130
        %v3633 = vunpack.c.h.b16 %v3130
        %v3634 = vunpack.c.l.b16 %v3131
        %v3635 = vunpack.c.l.b16 %v3132
        %v3636 = vunpack.c.h.b16 %v3132
        %v3637 = vunpack.c.l.b16 %v3133
        %v3638 = vunpack.c.h.b16 %v3133
        %v3639 = vunpack.c.l.b16 %v3134
        %v3640 = vunpack.c.l.b16 %v3135
        %v3641 = vunpack.c.h.b16 %v3135
        %v3642 = vunpack.c.l.b16 %v3136
        %v3643 = vunpack.c.h.b16 %v3136
        %v3644 = vunpack.c.l.b16 %v3137
        %v3645 = vunpack.c.l.b16 %v3138
        %v3646 = vunpack.c.h.b16 %v3138
        %v3647 = vunpack.c.l.b16 %v3139
        %v3648 = vunpack.c.h.b16 %v3139
        %v3649 = vunpack.c.l.b16 %v3140
        %v3650 = vunpack.c.l.b16 %v3141
        %v3651 = vunpack.c.h.b16 %v3141
        %v3652 = vunpack.c.l.b16 %v3142
        %v3653 = vunpack.c.h.b16 %v3142
        %v3654 = vunpack.c.l.b16 %v3143
        %v3655 = vunpack.c.l.b16 %v3144
        %v3656 = vunpack.c.h.b16 %v3144
        %v3657 = vunpack.c.l.b16 %v3145
        %v3658 = vunpack.c.h.b16 %v3145
        %v3659 = vunpack.c.l.b16 %v3146
        %v3660 = vunpack.c.l.b16 %v3147
        %v3661 = vunpack.c.h.b16 %v3147
        %v3662 = vunpack.c.l.b16 %v3148
        %v3663 = vunpack.c.h.b16 %v3148
        %v3664 = vunpack.c.l.b16 %v3149
        %v3665 = vunpack.c.l.b16 %v3150
        %v3666 = vunpack.c.h.b16 %v3150
        %v3667 = vunpack.c.l.b16 %v3151
        %v3668 = vunpack.c.h.b16 %v3151
        %v3669 = vunpack.c.l.b16 %v3152
        %v3670 = vunpack.c.l.b16 %v3153
        %v3671 = vunpack.c.h.b16 %v3153
        %v3672 = vunpack.c.l.b16 %v3154
        %v3673 = vunpack.c.h.b16 %v3154
        %v3674 = vunpack.c.l.b16 %v3155
        %v3675 = vunpack.c.l.b16 %v3156
        %v3676 = vunpack.c.h.b16 %v3156
        %v3677 = vunpack.c.l.b16 %v3157
        %v3678 = vunpack.c.h.b16 %v3157
        %v3679 = vunpack.c.l.b16 %v3158
        %v3680 = vunpack.c.l.b16 %v3159
        %v3681 = vunpack.c.h.b16 %v3159
        %v3682 = vunpack.c.l.b16 %v3160
        %v3683 = vunpack.c.h.b16 %v3160
        %v3684 = vunpack.c.l.b16 %v3161
        %v3685 = vunpack.c.l.b16 %v3162
        %v3686 = vunpack.c.h.b16 %v3162
        %v3687 = vunpack.c.l.b16 %v3163
        %v3688 = vunpack.c.h.b16 %v3163
        %v3689 = vunpack.c.l.b16 %v3164
        %v3690 = vunpack.c.l.b16 %v3165
        %v3691 = vunpack.c.h.b16 %v3165
        %v3692 = vunpack.c.l.b16 %v3166
        %v3693 = vunpack.c.h.b16 %v3166
        %v3694 = vunpack.c.l.b16 %v3167
        %v3695 = vunpack.c.l.b16 %v3168
        %v3696 = vunpack.c.h.b16 %v3168
        %v3697 = vunpack.c.l.b16 %v3169
        %v3698 = vunpack.c.h.b16 %v3169
        %v3699 = vunpack.c.l.b16 %v3170
        %v3700 = vunpack.c.l.b16 %v3171
        %v3701 = vunpack.c.h.b16 %v3171
        %v3702 = vunpack.c.l.b16 %v3172
        %v3703 = vunpack.c.h.b16 %v3172
        %v3704 = vunpack.c.l.b16 %v3173
        %v3705 = vunpack.c.l.b16 %v3174
        %v3706 = vunpack.c.h.b16 %v3174
        %v3707 = vunpack.c.l.b16 %v3175
        %v3708 = vunpack.c.h.b16 %v3175
        %v3709 = vunpack.c.l.b16 %v3176
        %v3710 = vunpack.c.l.b16 %v3177
        %v3711 = vunpack.c.h.b16 %v3177
        %v3712 = vunpack.c.l.b16 %v3178
        %v3713 = vunpack.c.h.b16 %v3178
        %v3714 = vunpack.c.l.b16 %v3179
        %v3715 = vunpack.c.l.b16 %v3180
        %v3716 = vunpack.c.h.b16 %v3180
        %v3717 = vunpack.c.l.b16 %v3181
        %v3718 = vunpack.c.h.b16 %v3181
        %v3719 = vunpack.c.l.b16 %v3182
        %v3720 = vunpack.c.l.b16 %v3183
        %v3721 = vunpack.c.h.b16 %v3183
        %v3722 = vunpack.c.l.b16 %v3184
        %v3723 = vunpack.c.h.b16 %v3184
        %v3724 = vunpack.c.l.b16 %v3185
        %v3725 = vunpack.c.l.b16 %v3186
        %v3726 = vunpack.c.h.b16 %v3186
        %v3727 = vunpack.c.l.b16 %v3187
        %v3728 = vunpack.c.h.b16 %v3187
        %v3729 = vunpack.c.l.b16 %v3188
        %v3730 = vunpack.c.l.b16 %v3189
        %v3731 = vunpack.c.h.b16 %v3189
        %v3732 = vunpack.c.l.b16 %v3190
        %v3733 = vunpack.c.h.b16 %v3190
        %v3734 = vunpack.c.l.b16 %v3191
        %v3735 = vunpack.c.l.b16 %v3192
        %v3736 = vunpack.c.h.b16 %v3192
        %v3737 = vunpack.c.l.b16 %v3193
        %v3738 = vunpack.c.h.b16 %v3193
        %v3739 = vunpack.c.l.b16 %v3194
        %v3740 = vunpack.c.l.b16 %v3195
        %v3741 = vunpack.c.h.b16 %v3195
        %v3742 = vunpack.c.l.b16 %v3196
        %v3743 = vunpack.c.h.b16 %v3196
        %v3744 = vunpack.c.l.b16 %v3197
        %v3745 = vunpack.c.l.b16 %v3198
        %v3746 = vunpack.c.h.b16 %v3198
        %v3747 = vunpack.c.l.b16 %v3199
        %v3748 = vunpack.c.h.b16 %v3199
        %v3749 = vunpack.c.l.b16 %v3200
        %v3750 = vunpack.c.l.b16 %v3201
        %v3751 = vunpack.c.h.b16 %v3201
        %v3752 = vunpack.c.l.b16 %v3202
        %v3753 = vunpack.c.h.b16 %v3202
        %v3754 = vunpack.c.l.b16 %v3203
        %v3755 = vunpack.c.l.b16 %v3204
        %v3756 = vunpack.c.h.b16 %v3204
        %v3757 = vunpack.c.l.b16 %v3205
        %v3758 = vunpack.c.h.b16 %v3205
        %v3759 = vunpack.c.l.b16 %v3206
        %v3760 = vunpack.c.l.b16 %v3207
        %v3761 = vunpack.c.h.b16 %v3207
        %v3762 = vunpack.c.l.b16 %v3208
        %v3763 = vunpack.c.h.b16 %v3208
        %v3764 = vunpack.c.l.b16 %v3209
        %v3765 = vpack.c.b16 %v3430, %v3425
        %v3766 = vpack.c.b16 %v3431, %v3426
        %v3767 = vpack.c.b16 %v3432, %v3427
        %v3768 = vpack.c.b16 %v3433, %v3428
        %v3769 = vpack.c.b16 %v3434, %v3429
        %v3770 = vpack.c.b16 %v3440, %v3435
        %v3771 = vpack.c.b16 %v3441, %v3436
        %v3772 = vpack.c.b16 %v3442, %v3437
        %v3773 = vpack.c.b16 %v3443, %v3438
        %v3774 = vpack.c.b16 %v3444, %v3439
        %v3775 = vpack.c.b16 %v3450, %v3445
        %v3776 = vpack.c.b16 %v3451, %v3446
        %v3777 = vpack.c.b16 %v3452, %v3447
        %v3778 = vpack.c.b16 %v3453, %v3448
        %v3779 = vpack.c.b16 %v3454, %v3449
        %v3780 = vpack.c.b16 %v3460, %v3455
        %v3781 = vpack.c.b16 %v3461, %v3456
        %v3782 = vpack.c.b16 %v3462, %v3457
        %v3783 = vpack.c.b16 %v3463, %v3458
        %v3784 = vpack.c.b16 %v3464, %v3459
        %v3785 = vpack.c.b16 %v3470, %v3465
        %v3786 = vpack.c.b16 %v3471, %v3466
        %v3787 = vpack.c.b16 %v3472, %v3467
        %v3788 = vpack.c.b16 %v3473, %v3468
        %v3789 = vpack.c.b16 %v3474, %v3469
        %v3790 = vpack.c.b16 %v3480, %v3475
        %v3791 = vpack.c.b16 %v3481, %v3476
        %v3792 = vpack.c.b16 %v3482, %v3477
        %v3793 = vpack.c.b16 %v3483, %v3478
        %v3794 = vpack.c.b16 %v3484, %v3479
        %v3795 = vpack.c.b16 %v3490, %v3485
        %v3796 = vpack.c.b16 %v3491, %v3486
        %v3797 = vpack.c.b16 %v3492, %v3487
        %v3798 = vpack.c.b16 %v3493, %v3488
        %v3799 = vpack.c.b16 %v3494, %v3489
        %v3800 = vpack.c.b16 %v3500, %v3495
        %v3801 = vpack.c.b16 %v3501, %v3496
        %v3802 = vpack.c.b16 %v3502, %v3497
        %v3803 = vpack.c.b16 %v3503, %v3498
        %v3804 = vpack.c.b16 %v3504, %v3499
        %v3805 = vpack.c.b16 %v3510, %v3505
        %v3806 = vpack.c.b16 %v3511, %v3506
        %v3807 = vpack.c.b16 %v3512, %v3507
        %v3808 = vpack.c.b16 %v3513, %v3508
        %v3809 = vpack.c.b16 %v3514, %v3509
        %v3810 = vpack.c.b16 %v3520, %v3515
        %v3811 = vpack.c.b16 %v3521, %v3516
        %v3812 = vpack.c.b16 %v3522, %v3517
        %v3813 = vpack.c.b16 %v3523, %v3518
        %v3814 = vpack.c.b16 %v3524, %v3519
        %v3815 = vpack.c.b16 %v3530, %v3525
        %v3816 = vpack.c.b16 %v3531, %v3526
        %v3817 = vpack.c.b16 %v3532, %v3527
        %v3818 = vpack.c.b16 %v3533, %v3528
        %v3819 = vpack.c.b16 %v3534, %v3529
        %v3820 = vpack.c.b16 %v3540, %v3535
        %v3821 = vpack.c.b16 %v3541, %v3536
        %v3822 = vpack.c.b16 %v3542, %v3537
        %v3823 = vpack.c.b16 %v3543, %v3538
        %v3824 = vpack.c.b16 %v3544, %v3539
        %v3825 = vpack.c.b16 %v3550, %v3545
        %v3826 = vpack.c.b16 %v3551, %v3546
        %v3827 = vpack.c.b16 %v3552, %v3547
        %v3828 = vpack.c.b16 %v3553, %v3548
        %v3829 = vpack.c.b16 %v3554, %v3549
        %v3830 = vpack.c.b16 %v3560, %v3555
        %v3831 = vpack.c.b16 %v3561, %v3556
        %v3832 = vpack.c.b16 %v3562, %v3557
        %v3833 = vpack.c.b16 %v3563, %v3558
        %v3834 = vpack.c.b16 %v3564, %v3559
        %v3835 = vpack.c.b16 %v3570, %v3565
        %v3836 = vpack.c.b16 %v3571, %v3566
        %v3837 = vpack.c.b16 %v3572, %v3567
        %v3838 = vpack.c.b16 %v3573, %v3568
        %v3839 = vpack.c.b16 %v3574, %v3569
        %v3840 = vpack.c.b16 %v3580, %v3575
        %v3841 = vpack.c.b16 %v3581, %v3576
        %v3842 = vpack.c.b16 %v3582, %v3577
        %v3843 = vpack.c.b16 %v3583, %v3578
        %v3844 = vpack.c.b16 %v3584, %v3579
        %v3845 = vpack.c.b16 %v3590, %v3585
        %v3846 = vpack.c.b16 %v3591, %v3586
        %v3847 = vpack.c.b16 %v3592, %v3587
        %v3848 = vpack.c.b16 %v3593, %v3588
        %v3849 = vpack.c.b16 %v3594, %v3589
        %v3850 = vpack.c.b16 %v3600, %v3595
        %v3851 = vpack.c.b16 %v3601, %v3596
        %v3852 = vpack.c.b16 %v3602, %v3597
        %v3853 = vpack.c.b16 %v3603, %v3598
        %v3854 = vpack.c.b16 %v3604, %v3599
        %v3855 = vpack.c.b16 %v3610, %v3605
        %v3856 = vpack.c.b16 %v3611, %v3606
        %v3857 = vpack.c.b16 %v3612, %v3607
        %v3858 = vpack.c.b16 %v3613, %v3608
        %v3859 = vpack.c.b16 %v3614, %v3609
        %v3860 = vpack.c.b16 %v3620, %v3615
        %v3861 = vpack.c.b16 %v3621, %v3616
        %v3862 = vpack.c.b16 %v3622, %v3617
        %v3863 = vpack.c.b16 %v3623, %v3618
        %v3864 = vpack.c.b16 %v3624, %v3619
        %v3865 = vpack.c.b16 %v3630, %v3625
        %v3866 = vpack.c.b16 %v3631, %v3626
        %v3867 = vpack.c.b16 %v3632, %v3627
        %v3868 = vpack.c.b16 %v3633, %v3628
        %v3869 = vpack.c.b16 %v3634, %v3629
        %v3870 = vpack.c.b16 %v3640, %v3635
        %v3871 = vpack.c.b16 %v3641, %v3636
        %v3872 = vpack.c.b16 %v3642, %v3637
        %v3873 = vpack.c.b16 %v3643, %v3638
        %v3874 = vpack.c.b16 %v3644, %v3639
        %v3875 = vpack.c.b16 %v3650, %v3645
        %v3876 = vpack.c.b16 %v3651, %v3646
        %v3877 = vpack.c.b16 %v3652, %v3647
        %v3878 = vpack.c.b16 %v3653, %v3648
        %v3879 = vpack.c.b16 %v3654, %v3649
        %v3880 = vpack.c.b16 %v3660, %v3655
        %v3881 = vpack.c.b16 %v3661, %v3656
        %v3882 = vpack.c.b16 %v3662, %v3657
        %v3883 = vpack.c.b16 %v3663, %v3658
        %v3884 = vpack.c.b16 %v3664, %v3659
        %v3885 = vpack.c.b16 %v3670, %v3665
        %v3886 = vpack.c.b16 %v3671, %v3666
        %v3887 = vpack.c.b16 %v3672, %v3667
        %v3888 = vpack.c.b16 %v3673, %v3668
        %v3889 = vpack.c.b16 %v3674, %v3669
        %v3890 = vpack.c.b16 %v3680, %v3675
        %v3891 = vpack.c.b16 %v3681, %v3676
        %v3892 = vpack.c.b16 %v3682, %v3677
        %v3893 = vpack.c.b16 %v3683, %v3678
        %v3894 = vpack.c.b16 %v3684, %v3679
        %v3895 = vpack.c.b16 %v3690, %v3685
        %v3896 = vpack.c.b16 %v3691, %v3686
        %v3897 = vpack.c.b16 %v3692, %v3687
        %v3898 = vpack.c.b16 %v3693, %v3688
        %v3899 = vpack.c.b16 %v3694, %v3689
        %v3900 = vpack.c.b16 %v3700, %v3695
        %v3901 = vpack.c.b16 %v3701, %v3696
        %v3902 = vpack.c.b16 %v3702, %v3697
        %v3903 = vpack.c.b16 %v3703, %v3698
        %v3904 = vpack.c.b16 %v3704, %v3699
        %v3905 = vpack.c.b16 %v3710, %v3705
        %v3906 = vpack.c.b16 %v3711, %v3706
        %v3907 = vpack.c.b16 %v3712, %v3707
        %v3908 = vpack.c.b16 %v3713, %v3708
        %v3909 = vpack.c.b16 %v3714, %v3709
        %v3910 = vpack.c.b16 %v3720, %v3715
        %v3911 = vpack.c.b16 %v3721, %v3716
        %v3912 = vpack.c.b16 %v3722, %v3717
        %v3913 = vpack.c.b16 %v3723, %v3718
        %v3914 = vpack.c.b16 %v3724, %v3719
        %v3915 = vpack.c.b16 %v3730, %v3725
        %v3916 = vpack.c.b16 %v3731, %v3726
        %v3917 = vpack.c.b16 %v3732, %v3727
        %v3918 = vpack.c.b16 %v3733, %v3728
        %v3919 = vpack.c.b16 %v3734, %v3729
        %v3920 = vpack.c.b16 %v3740, %v3735
        %v3921 = vpack.c.b16 %v3741, %v3736
        %v3922 = vpack.c.b16 %v3742, %v3737
        %v3923 = vpack.c.b16 %v3743, %v3738
        %v3924 = vpack.c.b16 %v3744, %v3739
        %v3925 = vpack.c.b16 %v3750, %v3745
        %v3926 = vpack.c.b16 %v3751, %v3746
        %v3927 = vpack.c.b16 %v3752, %v3747
        %v3928 = vpack.c.b16 %v3753, %v3748
        %v3929 = vpack.c.b16 %v3754, %v3749
        %v3930 = vpack.c.b16 %v3760, %v3755
        %v3931 = vpack.c.b16 %v3761, %v3756
        %v3932 = vpack.c.b16 %v3762, %v3757
        %v3933 = vpack.c.b16 %v3763, %v3758
        %v3934 = vpack.c.b16 %v3764, %v3759
        %vm4105 = vcmask 261120
        %v4106 = vsel %vm4105, %v3216, 0
        %4108 = vmatpush.bf16.msra.mxu0 %v3800
        %4109 = vmatpush.bf16.msra.mxu0 %v3795
        %4110 = vmatpush.bf16.msra.mxu0 %v3790
        %4111 = vmatpush.bf16.msra.mxu0 %v3785
        %4112 = vmatpush.bf16.msra.mxu0 %v3780
        %4113 = vmatpush.bf16.msra.mxu0 %v3775
        %4114 = vmatpush.bf16.msra.mxu0 %v3770
        %4115 = vmatpush.bf16.msra.mxu0 %v3765
        %4116 = vmatmul.bf16.gmra.mxu0 %v3212
        %v4117 = vpop.f32.mrf.mxu0
        %v4118 = vadd.f32 0.0, %v4117
        %v4119 = vpop.f32.mrf.mxu0
        %4120 = vdwg.mxu0
        %4121 = vmatpush.bf16.msra.mxu0 %v3840
        %4122 = vmatpush.bf16.msra.mxu0 %v3835
        %4123 = vmatpush.bf16.msra.mxu0 %v3830
        %4124 = vmatpush.bf16.msra.mxu0 %v3825
        %4125 = vmatpush.bf16.msra.mxu0 %v3820
        %4126 = vmatpush.bf16.msra.mxu0 %v3815
        %4127 = vmatpush.bf16.msra.mxu0 %v3810
        %4128 = vmatpush.bf16.msra.mxu0 %v3805
        %4129 = vmatmul.bf16.gmra.mxu0 %v3213
        %v4130 = vpop.f32.mrf.mxu0
        %v4131 = vadd.f32 %v4118, %v4130
        %v4132 = vpop.f32.mrf.mxu0
        %4133 = vdwg.mxu0
        %4134 = vmatpush.bf16.msra.mxu0 %v3880
        %4135 = vmatpush.bf16.msra.mxu0 %v3875
        %4136 = vmatpush.bf16.msra.mxu0 %v3870
        %4137 = vmatpush.bf16.msra.mxu0 %v3865
        %4138 = vmatpush.bf16.msra.mxu0 %v3860
        %4139 = vmatpush.bf16.msra.mxu0 %v3855
        %4140 = vmatpush.bf16.msra.mxu0 %v3850
        %4141 = vmatpush.bf16.msra.mxu0 %v3845
        %4142 = vmatmul.bf16.gmra.mxu0 %v3214
        %v4143 = vpop.f32.mrf.mxu0
        %v4144 = vadd.f32 %v4131, %v4143
        %v4145 = vpop.f32.mrf.mxu0
        %4146 = vdwg.mxu0
        %4147 = vmatpush.bf16.msra.mxu0 %v3920
        %4148 = vmatpush.bf16.msra.mxu0 %v3915
        %4149 = vmatpush.bf16.msra.mxu0 %v3910
        %4150 = vmatpush.bf16.msra.mxu0 %v3905
        %4151 = vmatpush.bf16.msra.mxu0 %v3900
        %4152 = vmatpush.bf16.msra.mxu0 %v3895
        %4153 = vmatpush.bf16.msra.mxu0 %v3890
        %4154 = vmatpush.bf16.msra.mxu0 %v3885
        %4155 = vmatmul.bf16.gmra.mxu0 %v3215
        %v4156 = vpop.f32.mrf.mxu0
        %v4157 = vadd.f32 %v4144, %v4156
        %v4158 = vpop.f32.mrf.mxu0
        %4159 = vdwg.mxu0
        %4160 = vmatpush.bf16.msra.mxu0 0
        %4161 = vmatpush.bf16.msra.mxu0 0
        %4162 = vmatpush.bf16.msra.mxu0 0
        %4163 = vmatpush.bf16.msra.mxu0 0
        %4164 = vmatpush.bf16.msra.mxu0 0
        %4165 = vmatpush.bf16.msra.mxu0 0
        %4166 = vmatpush.bf16.msra.mxu0 %v3930
        %4167 = vmatpush.bf16.msra.mxu0 %v3925
        %4168 = vmatmul.bf16.gmra.mxu0 %v4106
        %v4169 = vpop.f32.mrf.mxu0
        %v4170 = vadd.f32 %v4157, %v4169
        %v4171 = vpop.f32.mrf.mxu0
        %4172 = vdwg.mxu0
        %4173 = vmatpush.bf16.msra.mxu0 %v3801
        %4174 = vmatpush.bf16.msra.mxu0 %v3796
        %4175 = vmatpush.bf16.msra.mxu0 %v3791
        %4176 = vmatpush.bf16.msra.mxu0 %v3786
        %4177 = vmatpush.bf16.msra.mxu0 %v3781
        %4178 = vmatpush.bf16.msra.mxu0 %v3776
        %4179 = vmatpush.bf16.msra.mxu0 %v3771
        %4180 = vmatpush.bf16.msra.mxu0 %v3766
        %4181 = vmatmul.bf16.gmra.mxu0 %v3212
        %v4182 = vpop.f32.mrf.mxu0
        %v4183 = vadd.f32 0.0, %v4182
        %v4184 = vpop.f32.mrf.mxu0
        %4185 = vdwg.mxu0
        %4186 = vmatpush.bf16.msra.mxu0 %v3841
        %4187 = vmatpush.bf16.msra.mxu0 %v3836
        %4188 = vmatpush.bf16.msra.mxu0 %v3831
        %4189 = vmatpush.bf16.msra.mxu0 %v3826
        %4190 = vmatpush.bf16.msra.mxu0 %v3821
        %4191 = vmatpush.bf16.msra.mxu0 %v3816
        %4192 = vmatpush.bf16.msra.mxu0 %v3811
        %4193 = vmatpush.bf16.msra.mxu0 %v3806
        %4194 = vmatmul.bf16.gmra.mxu0 %v3213
        %v4195 = vpop.f32.mrf.mxu0
        %v4196 = vadd.f32 %v4183, %v4195
        %v4197 = vpop.f32.mrf.mxu0
        %4198 = vdwg.mxu0
        %4199 = vmatpush.bf16.msra.mxu0 %v3881
        %4200 = vmatpush.bf16.msra.mxu0 %v3876
        %4201 = vmatpush.bf16.msra.mxu0 %v3871
        %4202 = vmatpush.bf16.msra.mxu0 %v3866
        %4203 = vmatpush.bf16.msra.mxu0 %v3861
        %4204 = vmatpush.bf16.msra.mxu0 %v3856
        %4205 = vmatpush.bf16.msra.mxu0 %v3851
        %4206 = vmatpush.bf16.msra.mxu0 %v3846
        %4207 = vmatmul.bf16.gmra.mxu0 %v3214
        %v4208 = vpop.f32.mrf.mxu0
        %v4209 = vadd.f32 %v4196, %v4208
        %v4210 = vpop.f32.mrf.mxu0
        %4211 = vdwg.mxu0
        %4212 = vmatpush.bf16.msra.mxu0 %v3921
        %4213 = vmatpush.bf16.msra.mxu0 %v3916
        %4214 = vmatpush.bf16.msra.mxu0 %v3911
        %4215 = vmatpush.bf16.msra.mxu0 %v3906
        %4216 = vmatpush.bf16.msra.mxu0 %v3901
        %4217 = vmatpush.bf16.msra.mxu0 %v3896
        %4218 = vmatpush.bf16.msra.mxu0 %v3891
        %4219 = vmatpush.bf16.msra.mxu0 %v3886
        %4220 = vmatmul.bf16.gmra.mxu0 %v3215
        %v4221 = vpop.f32.mrf.mxu0
        %v4222 = vadd.f32 %v4209, %v4221
        %v4223 = vpop.f32.mrf.mxu0
        %4224 = vdwg.mxu0
        %4225 = vmatpush.bf16.msra.mxu0 0
        %4226 = vmatpush.bf16.msra.mxu0 0
        %4227 = vmatpush.bf16.msra.mxu0 0
        %4228 = vmatpush.bf16.msra.mxu0 0
        %4229 = vmatpush.bf16.msra.mxu0 0
        %4230 = vmatpush.bf16.msra.mxu0 0
        %4231 = vmatpush.bf16.msra.mxu0 %v3931
        %4232 = vmatpush.bf16.msra.mxu0 %v3926
        %4233 = vmatmul.bf16.gmra.mxu0 %v4106
        %v4234 = vpop.f32.mrf.mxu0
        %v4235 = vadd.f32 %v4222, %v4234
        %v4236 = vpop.f32.mrf.mxu0
        %4237 = vdwg.mxu0
        %4238 = vmatpush.bf16.msra.mxu0 %v3802
        %4239 = vmatpush.bf16.msra.mxu0 %v3797
        %4240 = vmatpush.bf16.msra.mxu0 %v3792
        %4241 = vmatpush.bf16.msra.mxu0 %v3787
        %4242 = vmatpush.bf16.msra.mxu0 %v3782
        %4243 = vmatpush.bf16.msra.mxu0 %v3777
        %4244 = vmatpush.bf16.msra.mxu0 %v3772
        %4245 = vmatpush.bf16.msra.mxu0 %v3767
        %4246 = vmatmul.bf16.gmra.mxu0 %v3212
        %v4247 = vpop.f32.mrf.mxu0
        %v4248 = vadd.f32 0.0, %v4247
        %v4249 = vpop.f32.mrf.mxu0
        %4250 = vdwg.mxu0
        %4251 = vmatpush.bf16.msra.mxu0 %v3842
        %4252 = vmatpush.bf16.msra.mxu0 %v3837
        %4253 = vmatpush.bf16.msra.mxu0 %v3832
        %4254 = vmatpush.bf16.msra.mxu0 %v3827
        %4255 = vmatpush.bf16.msra.mxu0 %v3822
        %4256 = vmatpush.bf16.msra.mxu0 %v3817
        %4257 = vmatpush.bf16.msra.mxu0 %v3812
        %4258 = vmatpush.bf16.msra.mxu0 %v3807
        %4259 = vmatmul.bf16.gmra.mxu0 %v3213
        %v4260 = vpop.f32.mrf.mxu0
        %v4261 = vadd.f32 %v4248, %v4260
        %v4262 = vpop.f32.mrf.mxu0
        %4263 = vdwg.mxu0
        %4264 = vmatpush.bf16.msra.mxu0 %v3882
        %4265 = vmatpush.bf16.msra.mxu0 %v3877
        %4266 = vmatpush.bf16.msra.mxu0 %v3872
        %4267 = vmatpush.bf16.msra.mxu0 %v3867
        %4268 = vmatpush.bf16.msra.mxu0 %v3862
        %4269 = vmatpush.bf16.msra.mxu0 %v3857
        %4270 = vmatpush.bf16.msra.mxu0 %v3852
        %4271 = vmatpush.bf16.msra.mxu0 %v3847
        %4272 = vmatmul.bf16.gmra.mxu0 %v3214
        %v4273 = vpop.f32.mrf.mxu0
        %v4274 = vadd.f32 %v4261, %v4273
        %v4275 = vpop.f32.mrf.mxu0
        %4276 = vdwg.mxu0
        %4277 = vmatpush.bf16.msra.mxu0 %v3922
        %4278 = vmatpush.bf16.msra.mxu0 %v3917
        %4279 = vmatpush.bf16.msra.mxu0 %v3912
        %4280 = vmatpush.bf16.msra.mxu0 %v3907
        %4281 = vmatpush.bf16.msra.mxu0 %v3902
        %4282 = vmatpush.bf16.msra.mxu0 %v3897
        %4283 = vmatpush.bf16.msra.mxu0 %v3892
        %4284 = vmatpush.bf16.msra.mxu0 %v3887
        %4285 = vmatmul.bf16.gmra.mxu0 %v3215
        %v4286 = vpop.f32.mrf.mxu0
        %v4287 = vadd.f32 %v4274, %v4286
        %v4288 = vpop.f32.mrf.mxu0
        %4289 = vdwg.mxu0
        %4290 = vmatpush.bf16.msra.mxu0 0
        %4291 = vmatpush.bf16.msra.mxu0 0
        %4292 = vmatpush.bf16.msra.mxu0 0
        %4293 = vmatpush.bf16.msra.mxu0 0
        %4294 = vmatpush.bf16.msra.mxu0 0
        %4295 = vmatpush.bf16.msra.mxu0 0
        %4296 = vmatpush.bf16.msra.mxu0 %v3932
        %4297 = vmatpush.bf16.msra.mxu0 %v3927
        %4298 = vmatmul.bf16.gmra.mxu0 %v4106
        %v4299 = vpop.f32.mrf.mxu0
        %v4300 = vadd.f32 %v4287, %v4299
        %v4301 = vpop.f32.mrf.mxu0
        %4302 = vdwg.mxu0
        %4303 = vmatpush.bf16.msra.mxu0 %v3803
        %4304 = vmatpush.bf16.msra.mxu0 %v3798
        %4305 = vmatpush.bf16.msra.mxu0 %v3793
        %4306 = vmatpush.bf16.msra.mxu0 %v3788
        %4307 = vmatpush.bf16.msra.mxu0 %v3783
        %4308 = vmatpush.bf16.msra.mxu0 %v3778
        %4309 = vmatpush.bf16.msra.mxu0 %v3773
        %4310 = vmatpush.bf16.msra.mxu0 %v3768
        %4311 = vmatmul.bf16.gmra.mxu0 %v3212
        %v4312 = vpop.f32.mrf.mxu0
        %v4313 = vadd.f32 0.0, %v4312
        %v4314 = vpop.f32.mrf.mxu0
        %4315 = vdwg.mxu0
        %4316 = vmatpush.bf16.msra.mxu0 %v3843
        %4317 = vmatpush.bf16.msra.mxu0 %v3838
        %4318 = vmatpush.bf16.msra.mxu0 %v3833
        %4319 = vmatpush.bf16.msra.mxu0 %v3828
        %4320 = vmatpush.bf16.msra.mxu0 %v3823
        %4321 = vmatpush.bf16.msra.mxu0 %v3818
        %4322 = vmatpush.bf16.msra.mxu0 %v3813
        %4323 = vmatpush.bf16.msra.mxu0 %v3808
        %4324 = vmatmul.bf16.gmra.mxu0 %v3213
        %v4325 = vpop.f32.mrf.mxu0
        %v4326 = vadd.f32 %v4313, %v4325
        %v4327 = vpop.f32.mrf.mxu0
        %4328 = vdwg.mxu0
        %4329 = vmatpush.bf16.msra.mxu0 %v3883
        %4330 = vmatpush.bf16.msra.mxu0 %v3878
        %4331 = vmatpush.bf16.msra.mxu0 %v3873
        %4332 = vmatpush.bf16.msra.mxu0 %v3868
        %4333 = vmatpush.bf16.msra.mxu0 %v3863
        %4334 = vmatpush.bf16.msra.mxu0 %v3858
        %4335 = vmatpush.bf16.msra.mxu0 %v3853
        %4336 = vmatpush.bf16.msra.mxu0 %v3848
        %4337 = vmatmul.bf16.gmra.mxu0 %v3214
        %v4338 = vpop.f32.mrf.mxu0
        %v4339 = vadd.f32 %v4326, %v4338
        %v4340 = vpop.f32.mrf.mxu0
        %4341 = vdwg.mxu0
        %4342 = vmatpush.bf16.msra.mxu0 %v3923
        %4343 = vmatpush.bf16.msra.mxu0 %v3918
        %4344 = vmatpush.bf16.msra.mxu0 %v3913
        %4345 = vmatpush.bf16.msra.mxu0 %v3908
        %4346 = vmatpush.bf16.msra.mxu0 %v3903
        %4347 = vmatpush.bf16.msra.mxu0 %v3898
        %4348 = vmatpush.bf16.msra.mxu0 %v3893
        %4349 = vmatpush.bf16.msra.mxu0 %v3888
        %4350 = vmatmul.bf16.gmra.mxu0 %v3215
        %v4351 = vpop.f32.mrf.mxu0
        %v4352 = vadd.f32 %v4339, %v4351
        %v4353 = vpop.f32.mrf.mxu0
        %4354 = vdwg.mxu0
        %4355 = vmatpush.bf16.msra.mxu0 0
        %4356 = vmatpush.bf16.msra.mxu0 0
        %4357 = vmatpush.bf16.msra.mxu0 0
        %4358 = vmatpush.bf16.msra.mxu0 0
        %4359 = vmatpush.bf16.msra.mxu0 0
        %4360 = vmatpush.bf16.msra.mxu0 0
        %4361 = vmatpush.bf16.msra.mxu0 %v3933
        %4362 = vmatpush.bf16.msra.mxu0 %v3928
        %4363 = vmatmul.bf16.gmra.mxu0 %v4106
        %v4364 = vpop.f32.mrf.mxu0
        %v4365 = vadd.f32 %v4352, %v4364
        %v4366 = vpop.f32.mrf.mxu0
        %4367 = vdwg.mxu0
        %4368 = vmatpush.bf16.msra.mxu0 %v3804
        %4369 = vmatpush.bf16.msra.mxu0 %v3799
        %4370 = vmatpush.bf16.msra.mxu0 %v3794
        %4371 = vmatpush.bf16.msra.mxu0 %v3789
        %4372 = vmatpush.bf16.msra.mxu0 %v3784
        %4373 = vmatpush.bf16.msra.mxu0 %v3779
        %4374 = vmatpush.bf16.msra.mxu0 %v3774
        %4375 = vmatpush.bf16.msra.mxu0 %v3769
        %4376 = vmatmul.bf16.gmra.mxu0 %v3212
        %v4377 = vpop.f32.mrf.mxu0
        %v4378 = vadd.f32 0.0, %v4377
        %v4379 = vpop.f32.mrf.mxu0
        %4380 = vdwg.mxu0
        %4381 = vmatpush.bf16.msra.mxu0 %v3844
        %4382 = vmatpush.bf16.msra.mxu0 %v3839
        %4383 = vmatpush.bf16.msra.mxu0 %v3834
        %4384 = vmatpush.bf16.msra.mxu0 %v3829
        %4385 = vmatpush.bf16.msra.mxu0 %v3824
        %4386 = vmatpush.bf16.msra.mxu0 %v3819
        %4387 = vmatpush.bf16.msra.mxu0 %v3814
        %4388 = vmatpush.bf16.msra.mxu0 %v3809
        %4389 = vmatmul.bf16.gmra.mxu0 %v3213
        %v4390 = vpop.f32.mrf.mxu0
        %v4391 = vadd.f32 %v4378, %v4390
        %v4392 = vpop.f32.mrf.mxu0
        %4393 = vdwg.mxu0
        %4394 = vmatpush.bf16.msra.mxu0 %v3884
        %4395 = vmatpush.bf16.msra.mxu0 %v3879
        %4396 = vmatpush.bf16.msra.mxu0 %v3874
        %4397 = vmatpush.bf16.msra.mxu0 %v3869
        %4398 = vmatpush.bf16.msra.mxu0 %v3864
        %4399 = vmatpush.bf16.msra.mxu0 %v3859
        %4400 = vmatpush.bf16.msra.mxu0 %v3854
        %4401 = vmatpush.bf16.msra.mxu0 %v3849
        %4402 = vmatmul.bf16.gmra.mxu0 %v3214
        %v4403 = vpop.f32.mrf.mxu0
        %v4404 = vadd.f32 %v4391, %v4403
        %v4405 = vpop.f32.mrf.mxu0
        %4406 = vdwg.mxu0
        %4407 = vmatpush.bf16.msra.mxu0 %v3924
        %4408 = vmatpush.bf16.msra.mxu0 %v3919
        %4409 = vmatpush.bf16.msra.mxu0 %v3914
        %4410 = vmatpush.bf16.msra.mxu0 %v3909
        %4411 = vmatpush.bf16.msra.mxu0 %v3904
        %4412 = vmatpush.bf16.msra.mxu0 %v3899
        %4413 = vmatpush.bf16.msra.mxu0 %v3894
        %4414 = vmatpush.bf16.msra.mxu0 %v3889
        %4415 = vmatmul.bf16.gmra.mxu0 %v3215
        %v4416 = vpop.f32.mrf.mxu0
        %v4417 = vadd.f32 %v4404, %v4416
        %v4418 = vpop.f32.mrf.mxu0
        %4419 = vdwg.mxu0
        %4420 = vmatpush.bf16.msra.mxu0 0
        %4421 = vmatpush.bf16.msra.mxu0 0
        %4422 = vmatpush.bf16.msra.mxu0 0
        %4423 = vmatpush.bf16.msra.mxu0 0
        %4424 = vmatpush.bf16.msra.mxu0 0
        %4425 = vmatpush.bf16.msra.mxu0 0
        %4426 = vmatpush.bf16.msra.mxu0 %v3934
        %4427 = vmatpush.bf16.msra.mxu0 %v3929
        %4428 = vmatmul.bf16.gmra.mxu0 %v4106
        %v4429 = vpop.f32.mrf.mxu0
        %v4430 = vadd.f32 %v4417, %v4429
        %v4431 = vpop.f32.mrf.mxu0
        %4432 = vdwg.mxu0
        %4434 = vst [vmem:[#allocation1] ss:$9 sm:$0xff] %v2796
        %v4435 = vld [vmem:[#allocation1] sm:$0xff]
        %v4436 = vld [vmem:[#allocation1 + $0x9] sm:$0xff]
        %v4437 = vld [vmem:[#allocation1 + $0x12] sm:$0xff]
        %v4438 = vld [vmem:[#allocation1 + $0x1b] sm:$0xff]
        %v4439 = vld [vmem:[#allocation1 + $0x24] sm:$0xff]
        %v4648 = vunpack.c.l.b16 %v2797
        %v4649 = vunpack.c.h.b16 %v2797
        %v4650 = vunpack.c.l.b16 %v2798
        %v4651 = vunpack.c.h.b16 %v2798
        %v4652 = vunpack.c.l.b16 %v2799
        %v4653 = vunpack.c.l.b16 %v2800
        %v4654 = vunpack.c.h.b16 %v2800
        %v4655 = vunpack.c.l.b16 %v2801
        %v4656 = vunpack.c.h.b16 %v2801
        %v4657 = vunpack.c.l.b16 %v2802
        %v4658 = vunpack.c.l.b16 %v2803
        %v4659 = vunpack.c.h.b16 %v2803
        %v4660 = vunpack.c.l.b16 %v2804
        %v4661 = vunpack.c.h.b16 %v2804
        %v4662 = vunpack.c.l.b16 %v2805
        %v4663 = vunpack.c.l.b16 %v2806
        %v4664 = vunpack.c.h.b16 %v2806
        %v4665 = vunpack.c.l.b16 %v2807
        %v4666 = vunpack.c.h.b16 %v2807
        %v4667 = vunpack.c.l.b16 %v2808
        %v4668 = vunpack.c.l.b16 %v2809
        %v4669 = vunpack.c.h.b16 %v2809
        %v4670 = vunpack.c.l.b16 %v2810
        %v4671 = vunpack.c.h.b16 %v2810
        %v4672 = vunpack.c.l.b16 %v2811
        %v4673 = vunpack.c.l.b16 %v2812
        %v4674 = vunpack.c.h.b16 %v2812
        %v4675 = vunpack.c.l.b16 %v2813
        %v4676 = vunpack.c.h.b16 %v2813
        %v4677 = vunpack.c.l.b16 %v2814
        %v4678 = vunpack.c.l.b16 %v2815
        %v4679 = vunpack.c.h.b16 %v2815
        %v4680 = vunpack.c.l.b16 %v2816
        %v4681 = vunpack.c.h.b16 %v2816
        %v4682 = vunpack.c.l.b16 %v2817
        %v4683 = vunpack.c.l.b16 %v2818
        %v4684 = vunpack.c.h.b16 %v2818
        %v4685 = vunpack.c.l.b16 %v2819
        %v4686 = vunpack.c.h.b16 %v2819
        %v4687 = vunpack.c.l.b16 %v2820
        %v4688 = vunpack.c.l.b16 %v2821
        %v4689 = vunpack.c.h.b16 %v2821
        %v4690 = vunpack.c.l.b16 %v2822
        %v4691 = vunpack.c.h.b16 %v2822
        %v4692 = vunpack.c.l.b16 %v2823
        %v4693 = vunpack.c.l.b16 %v2824
        %v4694 = vunpack.c.h.b16 %v2824
        %v4695 = vunpack.c.l.b16 %v2825
        %v4696 = vunpack.c.h.b16 %v2825
        %v4697 = vunpack.c.l.b16 %v2826
        %v4698 = vunpack.c.l.b16 %v2827
        %v4699 = vunpack.c.h.b16 %v2827
        %v4700 = vunpack.c.l.b16 %v2828
        %v4701 = vunpack.c.h.b16 %v2828
        %v4702 = vunpack.c.l.b16 %v2829
        %v4703 = vunpack.c.l.b16 %v2830
        %v4704 = vunpack.c.h.b16 %v2830
        %v4705 = vunpack.c.l.b16 %v2831
        %v4706 = vunpack.c.h.b16 %v2831
        %v4707 = vunpack.c.l.b16 %v2832
        %v4708 = vunpack.c.l.b16 %v2833
        %v4709 = vunpack.c.h.b16 %v2833
        %v4710 = vunpack.c.l.b16 %v2834
        %v4711 = vunpack.c.h.b16 %v2834
        %v4712 = vunpack.c.l.b16 %v2835
        %v4713 = vunpack.c.l.b16 %v2836
        %v4714 = vunpack.c.h.b16 %v2836
        %v4715 = vunpack.c.l.b16 %v2837
        %v4716 = vunpack.c.h.b16 %v2837
        %v4717 = vunpack.c.l.b16 %v2838
        %v4718 = vunpack.c.l.b16 %v2839
        %v4719 = vunpack.c.h.b16 %v2839
        %v4720 = vunpack.c.l.b16 %v2840
        %v4721 = vunpack.c.h.b16 %v2840
        %v4722 = vunpack.c.l.b16 %v2841
        %v4723 = vunpack.c.l.b16 %v2842
        %v4724 = vunpack.c.h.b16 %v2842
        %v4725 = vunpack.c.l.b16 %v2843
        %v4726 = vunpack.c.h.b16 %v2843
        %v4727 = vunpack.c.l.b16 %v2844
        %v4728 = vunpack.c.l.b16 %v2845
        %v4729 = vunpack.c.h.b16 %v2845
        %v4730 = vunpack.c.l.b16 %v2846
        %v4731 = vunpack.c.h.b16 %v2846
        %v4732 = vunpack.c.l.b16 %v2847
        %v4733 = vunpack.c.l.b16 %v2848
        %v4734 = vunpack.c.h.b16 %v2848
        %v4735 = vunpack.c.l.b16 %v2849
        %v4736 = vunpack.c.h.b16 %v2849
        %v4737 = vunpack.c.l.b16 %v2850
        %v4738 = vunpack.c.l.b16 %v2851
        %v4739 = vunpack.c.h.b16 %v2851
        %v4740 = vunpack.c.l.b16 %v2852
        %v4741 = vunpack.c.h.b16 %v2852
        %v4742 = vunpack.c.l.b16 %v2853
        %v4743 = vunpack.c.l.b16 %v2854
        %v4744 = vunpack.c.h.b16 %v2854
        %v4745 = vunpack.c.l.b16 %v2855
        %v4746 = vunpack.c.h.b16 %v2855
        %v4747 = vunpack.c.l.b16 %v2856
        %v4748 = vunpack.c.l.b16 %v2857
        %v4749 = vunpack.c.h.b16 %v2857
        %v4750 = vunpack.c.l.b16 %v2858
        %v4751 = vunpack.c.h.b16 %v2858
        %v4752 = vunpack.c.l.b16 %v2859
        %v4753 = vunpack.c.l.b16 %v2860
        %v4754 = vunpack.c.h.b16 %v2860
        %v4755 = vunpack.c.l.b16 %v2861
        %v4756 = vunpack.c.h.b16 %v2861
        %v4757 = vunpack.c.l.b16 %v2862
        %v4758 = vunpack.c.l.b16 %v2863
        %v4759 = vunpack.c.h.b16 %v2863
        %v4760 = vunpack.c.l.b16 %v2864
        %v4761 = vunpack.c.h.b16 %v2864
        %v4762 = vunpack.c.l.b16 %v2865
        %v4763 = vunpack.c.l.b16 %v2866
        %v4764 = vunpack.c.h.b16 %v2866
        %v4765 = vunpack.c.l.b16 %v2867
        %v4766 = vunpack.c.h.b16 %v2867
        %v4767 = vunpack.c.l.b16 %v2868
        %v4768 = vunpack.c.l.b16 %v2869
        %v4769 = vunpack.c.h.b16 %v2869
        %v4770 = vunpack.c.l.b16 %v2870
        %v4771 = vunpack.c.h.b16 %v2870
        %v4772 = vunpack.c.l.b16 %v2871
        %v4773 = vunpack.c.l.b16 %v2872
        %v4774 = vunpack.c.h.b16 %v2872
        %v4775 = vunpack.c.l.b16 %v2873
        %v4776 = vunpack.c.h.b16 %v2873
        %v4777 = vunpack.c.l.b16 %v2874
        %v4778 = vunpack.c.l.b16 %v2875
        %v4779 = vunpack.c.h.b16 %v2875
        %v4780 = vunpack.c.l.b16 %v2876
        %v4781 = vunpack.c.h.b16 %v2876
        %v4782 = vunpack.c.l.b16 %v2877
        %v4783 = vunpack.c.l.b16 %v2878
        %v4784 = vunpack.c.h.b16 %v2878
        %v4785 = vunpack.c.l.b16 %v2879
        %v4786 = vunpack.c.h.b16 %v2879
        %v4787 = vunpack.c.l.b16 %v2880
        %v4788 = vunpack.c.l.b16 %v2881
        %v4789 = vunpack.c.h.b16 %v2881
        %v4790 = vunpack.c.l.b16 %v2882
        %v4791 = vunpack.c.h.b16 %v2882
        %v4792 = vunpack.c.l.b16 %v2883
        %v4793 = vunpack.c.l.b16 %v2884
        %v4794 = vunpack.c.h.b16 %v2884
        %v4795 = vunpack.c.l.b16 %v2885
        %v4796 = vunpack.c.h.b16 %v2885
        %v4797 = vunpack.c.l.b16 %v2886
        %v4798 = vunpack.c.l.b16 %v2887
        %v4799 = vunpack.c.h.b16 %v2887
        %v4800 = vunpack.c.l.b16 %v2888
        %v4801 = vunpack.c.h.b16 %v2888
        %v4802 = vunpack.c.l.b16 %v2889
        %v4803 = vunpack.c.l.b16 %v2890
        %v4804 = vunpack.c.h.b16 %v2890
        %v4805 = vunpack.c.l.b16 %v2891
        %v4806 = vunpack.c.h.b16 %v2891
        %v4807 = vunpack.c.l.b16 %v2892
        %v4808 = vunpack.c.l.b16 %v2893
        %v4809 = vunpack.c.h.b16 %v2893
        %v4810 = vunpack.c.l.b16 %v2894
        %v4811 = vunpack.c.h.b16 %v2894
        %v4812 = vunpack.c.l.b16 %v2895
        %v4813 = vunpack.c.l.b16 %v2896
        %v4814 = vunpack.c.h.b16 %v2896
        %v4815 = vunpack.c.l.b16 %v2897
        %v4816 = vunpack.c.h.b16 %v2897
        %v4817 = vunpack.c.l.b16 %v2898
        %v4818 = vunpack.c.l.b16 %v2899
        %v4819 = vunpack.c.h.b16 %v2899
        %v4820 = vunpack.c.l.b16 %v2900
        %v4821 = vunpack.c.h.b16 %v2900
        %v4822 = vunpack.c.l.b16 %v2901
        %v4823 = vunpack.c.l.b16 %v2902
        %v4824 = vunpack.c.h.b16 %v2902
        %v4825 = vunpack.c.l.b16 %v2903
        %v4826 = vunpack.c.h.b16 %v2903
        %v4827 = vunpack.c.l.b16 %v2904
        %v4828 = vunpack.c.l.b16 %v2905
        %v4829 = vunpack.c.h.b16 %v2905
        %v4830 = vunpack.c.l.b16 %v2906
        %v4831 = vunpack.c.h.b16 %v2906
        %v4832 = vunpack.c.l.b16 %v2907
        %v4833 = vunpack.c.l.b16 %v2908
        %v4834 = vunpack.c.h.b16 %v2908
        %v4835 = vunpack.c.l.b16 %v2909
        %v4836 = vunpack.c.h.b16 %v2909
        %v4837 = vunpack.c.l.b16 %v2910
        %v4838 = vunpack.c.l.b16 %v2911
        %v4839 = vunpack.c.h.b16 %v2911
        %v4840 = vunpack.c.l.b16 %v2912
        %v4841 = vunpack.c.h.b16 %v2912
        %v4842 = vunpack.c.l.b16 %v2913
        %v4843 = vunpack.c.l.b16 %v2914
        %v4844 = vunpack.c.h.b16 %v2914
        %v4845 = vunpack.c.l.b16 %v2915
        %v4846 = vunpack.c.h.b16 %v2915
        %v4847 = vunpack.c.l.b16 %v2916
        %v4848 = vunpack.c.l.b16 %v2917
        %v4849 = vunpack.c.h.b16 %v2917
        %v4850 = vunpack.c.l.b16 %v2918
        %v4851 = vunpack.c.h.b16 %v2918
        %v4852 = vunpack.c.l.b16 %v2919
        %v4853 = vunpack.c.l.b16 %v2920
        %v4854 = vunpack.c.h.b16 %v2920
        %v4855 = vunpack.c.l.b16 %v2921
        %v4856 = vunpack.c.h.b16 %v2921
        %v4857 = vunpack.c.l.b16 %v2922
        %v4858 = vunpack.c.l.b16 %v2923
        %v4859 = vunpack.c.h.b16 %v2923
        %v4860 = vunpack.c.l.b16 %v2924
        %v4861 = vunpack.c.h.b16 %v2924
        %v4862 = vunpack.c.l.b16 %v2925
        %v4863 = vunpack.c.l.b16 %v2926
        %v4864 = vunpack.c.h.b16 %v2926
        %v4865 = vunpack.c.l.b16 %v2927
        %v4866 = vunpack.c.h.b16 %v2927
        %v4867 = vunpack.c.l.b16 %v2928
        %v4868 = vunpack.c.l.b16 %v2929
        %v4869 = vunpack.c.h.b16 %v2929
        %v4870 = vunpack.c.l.b16 %v2930
        %v4871 = vunpack.c.h.b16 %v2930
        %v4872 = vunpack.c.l.b16 %v2931
        %v4873 = vunpack.c.l.b16 %v2932
        %v4874 = vunpack.c.h.b16 %v2932
        %v4875 = vunpack.c.l.b16 %v2933
        %v4876 = vunpack.c.h.b16 %v2933
        %v4877 = vunpack.c.l.b16 %v2934
        %v4878 = vunpack.c.l.b16 %v2935
        %v4879 = vunpack.c.h.b16 %v2935
        %v4880 = vunpack.c.l.b16 %v2936
        %v4881 = vunpack.c.h.b16 %v2936
        %v4882 = vunpack.c.l.b16 %v2937
        %v4883 = vunpack.c.l.b16 %v2938
        %v4884 = vunpack.c.h.b16 %v2938
        %v4885 = vunpack.c.l.b16 %v2939
        %v4886 = vunpack.c.h.b16 %v2939
        %v4887 = vunpack.c.l.b16 %v2940
        %v4888 = vunpack.c.l.b16 %v2941
        %v4889 = vunpack.c.h.b16 %v2941
        %v4890 = vunpack.c.l.b16 %v2942
        %v4891 = vunpack.c.h.b16 %v2942
        %v4892 = vunpack.c.l.b16 %v2943
        %v4893 = vunpack.c.l.b16 %v2944
        %v4894 = vunpack.c.h.b16 %v2944
        %v4895 = vunpack.c.l.b16 %v2945
        %v4896 = vunpack.c.h.b16 %v2945
        %v4897 = vunpack.c.l.b16 %v2946
        %v4898 = vunpack.c.l.b16 %v2947
        %v4899 = vunpack.c.h.b16 %v2947
        %v4900 = vunpack.c.l.b16 %v2948
        %v4901 = vunpack.c.h.b16 %v2948
        %v4902 = vunpack.c.l.b16 %v2949
        %v4903 = vunpack.c.l.b16 %v2950
        %v4904 = vunpack.c.h.b16 %v2950
        %v4905 = vunpack.c.l.b16 %v2951
        %v4906 = vunpack.c.h.b16 %v2951
        %v4907 = vunpack.c.l.b16 %v2952
        %v4908 = vunpack.c.l.b16 %v2953
        %v4909 = vunpack.c.h.b16 %v2953
        %v4910 = vunpack.c.l.b16 %v2954
        %v4911 = vunpack.c.h.b16 %v2954
        %v4912 = vunpack.c.l.b16 %v2955
        %v4913 = vunpack.c.l.b16 %v2956
        %v4914 = vunpack.c.h.b16 %v2956
        %v4915 = vunpack.c.l.b16 %v2957
        %v4916 = vunpack.c.h.b16 %v2957
        %v4917 = vunpack.c.l.b16 %v2958
        %v4918 = vunpack.c.l.b16 %v2959
        %v4919 = vunpack.c.h.b16 %v2959
        %v4920 = vunpack.c.l.b16 %v2960
        %v4921 = vunpack.c.h.b16 %v2960
        %v4922 = vunpack.c.l.b16 %v2961
        %v4923 = vunpack.c.l.b16 %v2962
        %v4924 = vunpack.c.h.b16 %v2962
        %v4925 = vunpack.c.l.b16 %v2963
        %v4926 = vunpack.c.h.b16 %v2963
        %v4927 = vunpack.c.l.b16 %v2964
        %v4928 = vunpack.c.l.b16 %v2965
        %v4929 = vunpack.c.h.b16 %v2965
        %v4930 = vunpack.c.l.b16 %v2966
        %v4931 = vunpack.c.h.b16 %v2966
        %v4932 = vunpack.c.l.b16 %v2967
        %v4933 = vunpack.c.l.b16 %v2968
        %v4934 = vunpack.c.h.b16 %v2968
        %v4935 = vunpack.c.l.b16 %v2969
        %v4936 = vunpack.c.h.b16 %v2969
        %v4937 = vunpack.c.l.b16 %v2970
        %v4938 = vunpack.c.l.b16 %v2971
        %v4939 = vunpack.c.h.b16 %v2971
        %v4940 = vunpack.c.l.b16 %v2972
        %v4941 = vunpack.c.h.b16 %v2972
        %v4942 = vunpack.c.l.b16 %v2973
        %v4943 = vunpack.c.l.b16 %v2974
        %v4944 = vunpack.c.h.b16 %v2974
        %v4945 = vunpack.c.l.b16 %v2975
        %v4946 = vunpack.c.h.b16 %v2975
        %v4947 = vunpack.c.l.b16 %v2976
        %v4948 = vunpack.c.l.b16 %v2977
        %v4949 = vunpack.c.h.b16 %v2977
        %v4950 = vunpack.c.l.b16 %v2978
        %v4951 = vunpack.c.h.b16 %v2978
        %v4952 = vunpack.c.l.b16 %v2979
        %v4953 = vunpack.c.l.b16 %v2980
        %v4954 = vunpack.c.h.b16 %v2980
        %v4955 = vunpack.c.l.b16 %v2981
        %v4956 = vunpack.c.h.b16 %v2981
        %v4957 = vunpack.c.l.b16 %v2982
        %v4958 = vunpack.c.l.b16 %v2983
        %v4959 = vunpack.c.h.b16 %v2983
        %v4960 = vunpack.c.l.b16 %v2984
        %v4961 = vunpack.c.h.b16 %v2984
        %v4962 = vunpack.c.l.b16 %v2985
        %v4963 = vunpack.c.l.b16 %v2986
        %v4964 = vunpack.c.h.b16 %v2986
        %v4965 = vunpack.c.l.b16 %v2987
        %v4966 = vunpack.c.h.b16 %v2987
        %v4967 = vunpack.c.l.b16 %v2988
        %v4968 = vunpack.c.l.b16 %v2989
        %v4969 = vunpack.c.h.b16 %v2989
        %v4970 = vunpack.c.l.b16 %v2990
        %v4971 = vunpack.c.h.b16 %v2990
        %v4972 = vunpack.c.l.b16 %v2991
        %v4973 = vunpack.c.l.b16 %v2992
        %v4974 = vunpack.c.h.b16 %v2992
        %v4975 = vunpack.c.l.b16 %v2993
        %v4976 = vunpack.c.h.b16 %v2993
        %v4977 = vunpack.c.l.b16 %v2994
        %v4978 = vunpack.c.l.b16 %v2995
        %v4979 = vunpack.c.h.b16 %v2995
        %v4980 = vunpack.c.l.b16 %v2996
        %v4981 = vunpack.c.h.b16 %v2996
        %v4982 = vunpack.c.l.b16 %v2997
        %v4983 = vunpack.c.l.b16 %v2998
        %v4984 = vunpack.c.h.b16 %v2998
        %v4985 = vunpack.c.l.b16 %v2999
        %v4986 = vunpack.c.h.b16 %v2999
        %v4987 = vunpack.c.l.b16 %v3000
        %v4988 = vpack.c.b16 %v4653, %v4648
        %v4989 = vpack.c.b16 %v4654, %v4649
        %v4990 = vpack.c.b16 %v4655, %v4650
        %v4991 = vpack.c.b16 %v4656, %v4651
        %v4992 = vpack.c.b16 %v4657, %v4652
        %v4993 = vpack.c.b16 %v4663, %v4658
        %v4994 = vpack.c.b16 %v4664, %v4659
        %v4995 = vpack.c.b16 %v4665, %v4660
        %v4996 = vpack.c.b16 %v4666, %v4661
        %v4997 = vpack.c.b16 %v4667, %v4662
        %v4998 = vpack.c.b16 %v4673, %v4668
        %v4999 = vpack.c.b16 %v4674, %v4669
        %v5000 = vpack.c.b16 %v4675, %v4670
        %v5001 = vpack.c.b16 %v4676, %v4671
        %v5002 = vpack.c.b16 %v4677, %v4672
        %v5003 = vpack.c.b16 %v4683, %v4678
        %v5004 = vpack.c.b16 %v4684, %v4679
        %v5005 = vpack.c.b16 %v4685, %v4680
        %v5006 = vpack.c.b16 %v4686, %v4681
        %v5007 = vpack.c.b16 %v4687, %v4682
        %v5008 = vpack.c.b16 %v4693, %v4688
        %v5009 = vpack.c.b16 %v4694, %v4689
        %v5010 = vpack.c.b16 %v4695, %v4690
        %v5011 = vpack.c.b16 %v4696, %v4691
        %v5012 = vpack.c.b16 %v4697, %v4692
        %v5013 = vpack.c.b16 %v4703, %v4698
        %v5014 = vpack.c.b16 %v4704, %v4699
        %v5015 = vpack.c.b16 %v4705, %v4700
        %v5016 = vpack.c.b16 %v4706, %v4701
        %v5017 = vpack.c.b16 %v4707, %v4702
        %v5018 = vpack.c.b16 %v4713, %v4708
        %v5019 = vpack.c.b16 %v4714, %v4709
        %v5020 = vpack.c.b16 %v4715, %v4710
        %v5021 = vpack.c.b16 %v4716, %v4711
        %v5022 = vpack.c.b16 %v4717, %v4712
        %v5023 = vpack.c.b16 %v4723, %v4718
        %v5024 = vpack.c.b16 %v4724, %v4719
        %v5025 = vpack.c.b16 %v4725, %v4720
        %v5026 = vpack.c.b16 %v4726, %v4721
        %v5027 = vpack.c.b16 %v4727, %v4722
        %v5028 = vpack.c.b16 %v4733, %v4728
        %v5029 = vpack.c.b16 %v4734, %v4729
        %v5030 = vpack.c.b16 %v4735, %v4730
        %v5031 = vpack.c.b16 %v4736, %v4731
        %v5032 = vpack.c.b16 %v4737, %v4732
        %v5033 = vpack.c.b16 %v4743, %v4738
        %v5034 = vpack.c.b16 %v4744, %v4739
        %v5035 = vpack.c.b16 %v4745, %v4740
        %v5036 = vpack.c.b16 %v4746, %v4741
        %v5037 = vpack.c.b16 %v4747, %v4742
        %v5038 = vpack.c.b16 %v4753, %v4748
        %v5039 = vpack.c.b16 %v4754, %v4749
        %v5040 = vpack.c.b16 %v4755, %v4750
        %v5041 = vpack.c.b16 %v4756, %v4751
        %v5042 = vpack.c.b16 %v4757, %v4752
        %v5043 = vpack.c.b16 %v4763, %v4758
        %v5044 = vpack.c.b16 %v4764, %v4759
        %v5045 = vpack.c.b16 %v4765, %v4760
        %v5046 = vpack.c.b16 %v4766, %v4761
        %v5047 = vpack.c.b16 %v4767, %v4762
        %v5048 = vpack.c.b16 %v4773, %v4768
        %v5049 = vpack.c.b16 %v4774, %v4769
        %v5050 = vpack.c.b16 %v4775, %v4770
        %v5051 = vpack.c.b16 %v4776, %v4771
        %v5052 = vpack.c.b16 %v4777, %v4772
        %v5053 = vpack.c.b16 %v4783, %v4778
        %v5054 = vpack.c.b16 %v4784, %v4779
        %v5055 = vpack.c.b16 %v4785, %v4780
        %v5056 = vpack.c.b16 %v4786, %v4781
        %v5057 = vpack.c.b16 %v4787, %v4782
        %v5058 = vpack.c.b16 %v4793, %v4788
        %v5059 = vpack.c.b16 %v4794, %v4789
        %v5060 = vpack.c.b16 %v4795, %v4790
        %v5061 = vpack.c.b16 %v4796, %v4791
        %v5062 = vpack.c.b16 %v4797, %v4792
        %v5063 = vpack.c.b16 %v4803, %v4798
        %v5064 = vpack.c.b16 %v4804, %v4799
        %v5065 = vpack.c.b16 %v4805, %v4800
        %v5066 = vpack.c.b16 %v4806, %v4801
        %v5067 = vpack.c.b16 %v4807, %v4802
        %v5068 = vpack.c.b16 %v4813, %v4808
        %v5069 = vpack.c.b16 %v4814, %v4809
        %v5070 = vpack.c.b16 %v4815, %v4810
        %v5071 = vpack.c.b16 %v4816, %v4811
        %v5072 = vpack.c.b16 %v4817, %v4812
        %v5073 = vpack.c.b16 %v4823, %v4818
        %v5074 = vpack.c.b16 %v4824, %v4819
        %v5075 = vpack.c.b16 %v4825, %v4820
        %v5076 = vpack.c.b16 %v4826, %v4821
        %v5077 = vpack.c.b16 %v4827, %v4822
        %v5078 = vpack.c.b16 %v4833, %v4828
        %v5079 = vpack.c.b16 %v4834, %v4829
        %v5080 = vpack.c.b16 %v4835, %v4830
        %v5081 = vpack.c.b16 %v4836, %v4831
        %v5082 = vpack.c.b16 %v4837, %v4832
        %v5083 = vpack.c.b16 %v4843, %v4838
        %v5084 = vpack.c.b16 %v4844, %v4839
        %v5085 = vpack.c.b16 %v4845, %v4840
        %v5086 = vpack.c.b16 %v4846, %v4841
        %v5087 = vpack.c.b16 %v4847, %v4842
        %v5088 = vpack.c.b16 %v4853, %v4848
        %v5089 = vpack.c.b16 %v4854, %v4849
        %v5090 = vpack.c.b16 %v4855, %v4850
        %v5091 = vpack.c.b16 %v4856, %v4851
        %v5092 = vpack.c.b16 %v4857, %v4852
        %v5093 = vpack.c.b16 %v4863, %v4858
        %v5094 = vpack.c.b16 %v4864, %v4859
        %v5095 = vpack.c.b16 %v4865, %v4860
        %v5096 = vpack.c.b16 %v4866, %v4861
        %v5097 = vpack.c.b16 %v4867, %v4862
        %v5098 = vpack.c.b16 %v4873, %v4868
        %v5099 = vpack.c.b16 %v4874, %v4869
        %v5100 = vpack.c.b16 %v4875, %v4870
        %v5101 = vpack.c.b16 %v4876, %v4871
        %v5102 = vpack.c.b16 %v4877, %v4872
        %v5103 = vpack.c.b16 %v4883, %v4878
        %v5104 = vpack.c.b16 %v4884, %v4879
        %v5105 = vpack.c.b16 %v4885, %v4880
        %v5106 = vpack.c.b16 %v4886, %v4881
        %v5107 = vpack.c.b16 %v4887, %v4882
        %v5108 = vpack.c.b16 %v4893, %v4888
        %v5109 = vpack.c.b16 %v4894, %v4889
        %v5110 = vpack.c.b16 %v4895, %v4890
        %v5111 = vpack.c.b16 %v4896, %v4891
        %v5112 = vpack.c.b16 %v4897, %v4892
        %v5113 = vpack.c.b16 %v4903, %v4898
        %v5114 = vpack.c.b16 %v4904, %v4899
        %v5115 = vpack.c.b16 %v4905, %v4900
        %v5116 = vpack.c.b16 %v4906, %v4901
        %v5117 = vpack.c.b16 %v4907, %v4902
        %v5118 = vpack.c.b16 %v4913, %v4908
        %v5119 = vpack.c.b16 %v4914, %v4909
        %v5120 = vpack.c.b16 %v4915, %v4910
        %v5121 = vpack.c.b16 %v4916, %v4911
        %v5122 = vpack.c.b16 %v4917, %v4912
        %v5123 = vpack.c.b16 %v4923, %v4918
        %v5124 = vpack.c.b16 %v4924, %v4919
        %v5125 = vpack.c.b16 %v4925, %v4920
        %v5126 = vpack.c.b16 %v4926, %v4921
        %v5127 = vpack.c.b16 %v4927, %v4922
        %v5128 = vpack.c.b16 %v4933, %v4928
        %v5129 = vpack.c.b16 %v4934, %v4929
        %v5130 = vpack.c.b16 %v4935, %v4930
        %v5131 = vpack.c.b16 %v4936, %v4931
        %v5132 = vpack.c.b16 %v4937, %v4932
        %v5133 = vpack.c.b16 %v4943, %v4938
        %v5134 = vpack.c.b16 %v4944, %v4939
        %v5135 = vpack.c.b16 %v4945, %v4940
        %v5136 = vpack.c.b16 %v4946, %v4941
        %v5137 = vpack.c.b16 %v4947, %v4942
        %v5138 = vpack.c.b16 %v4953, %v4948
        %v5139 = vpack.c.b16 %v4954, %v4949
        %v5140 = vpack.c.b16 %v4955, %v4950
        %v5141 = vpack.c.b16 %v4956, %v4951
        %v5142 = vpack.c.b16 %v4957, %v4952
        %v5143 = vpack.c.b16 %v4963, %v4958
        %v5144 = vpack.c.b16 %v4964, %v4959
        %v5145 = vpack.c.b16 %v4965, %v4960
        %v5146 = vpack.c.b16 %v4966, %v4961
        %v5147 = vpack.c.b16 %v4967, %v4962
        %v5148 = vpack.c.b16 %v4973, %v4968
        %v5149 = vpack.c.b16 %v4974, %v4969
        %v5150 = vpack.c.b16 %v4975, %v4970
        %v5151 = vpack.c.b16 %v4976, %v4971
        %v5152 = vpack.c.b16 %v4977, %v4972
        %v5153 = vpack.c.b16 %v4983, %v4978
        %v5154 = vpack.c.b16 %v4984, %v4979
        %v5155 = vpack.c.b16 %v4985, %v4980
        %v5156 = vpack.c.b16 %v4986, %v4981
        %v5157 = vpack.c.b16 %v4987, %v4982
        %v5328 = vsel %vm4105, %v4439, 0
        %5330 = vmatpush.bf16.msra.mxu0 %v5023
        %5331 = vmatpush.bf16.msra.mxu0 %v5018
        %5332 = vmatpush.bf16.msra.mxu0 %v5013
        %5333 = vmatpush.bf16.msra.mxu0 %v5008
        %5334 = vmatpush.bf16.msra.mxu0 %v5003
        %5335 = vmatpush.bf16.msra.mxu0 %v4998
        %5336 = vmatpush.bf16.msra.mxu0 %v4993
        %5337 = vmatpush.bf16.msra.mxu0 %v4988
        %5338 = vmatmul.bf16.gmra.mxu0 %v4435
        %v5339 = vpop.f32.mrf.mxu0
        %v5340 = vadd.f32 %v4170, %v5339
        %v5341 = vpop.f32.mrf.mxu0
        %5342 = vdwg.mxu0
        %5343 = vmatpush.bf16.msra.mxu0 %v5063
        %5344 = vmatpush.bf16.msra.mxu0 %v5058
        %5345 = vmatpush.bf16.msra.mxu0 %v5053
        %5346 = vmatpush.bf16.msra.mxu0 %v5048
        %5347 = vmatpush.bf16.msra.mxu0 %v5043
        %5348 = vmatpush.bf16.msra.mxu0 %v5038
        %5349 = vmatpush.bf16.msra.mxu0 %v5033
        %5350 = vmatpush.bf16.msra.mxu0 %v5028
        %5351 = vmatmul.bf16.gmra.mxu0 %v4436
        %v5352 = vpop.f32.mrf.mxu0
        %v5353 = vadd.f32 %v5340, %v5352
        %v5354 = vpop.f32.mrf.mxu0
        %5355 = vdwg.mxu0
        %5356 = vmatpush.bf16.msra.mxu0 %v5103
        %5357 = vmatpush.bf16.msra.mxu0 %v5098
        %5358 = vmatpush.bf16.msra.mxu0 %v5093
        %5359 = vmatpush.bf16.msra.mxu0 %v5088
        %5360 = vmatpush.bf16.msra.mxu0 %v5083
        %5361 = vmatpush.bf16.msra.mxu0 %v5078
        %5362 = vmatpush.bf16.msra.mxu0 %v5073
        %5363 = vmatpush.bf16.msra.mxu0 %v5068
        %5364 = vmatmul.bf16.gmra.mxu0 %v4437
        %v5365 = vpop.f32.mrf.mxu0
        %v5366 = vadd.f32 %v5353, %v5365
        %v5367 = vpop.f32.mrf.mxu0
        %5368 = vdwg.mxu0
        %5369 = vmatpush.bf16.msra.mxu0 %v5143
        %5370 = vmatpush.bf16.msra.mxu0 %v5138
        %5371 = vmatpush.bf16.msra.mxu0 %v5133
        %5372 = vmatpush.bf16.msra.mxu0 %v5128
        %5373 = vmatpush.bf16.msra.mxu0 %v5123
        %5374 = vmatpush.bf16.msra.mxu0 %v5118
        %5375 = vmatpush.bf16.msra.mxu0 %v5113
        %5376 = vmatpush.bf16.msra.mxu0 %v5108
        %5377 = vmatmul.bf16.gmra.mxu0 %v4438
        %v5378 = vpop.f32.mrf.mxu0
        %v5379 = vadd.f32 %v5366, %v5378
        %v5380 = vpop.f32.mrf.mxu0
        %5381 = vdwg.mxu0
        %5382 = vmatpush.bf16.msra.mxu0 0
        %5383 = vmatpush.bf16.msra.mxu0 0
        %5384 = vmatpush.bf16.msra.mxu0 0
        %5385 = vmatpush.bf16.msra.mxu0 0
        %5386 = vmatpush.bf16.msra.mxu0 0
        %5387 = vmatpush.bf16.msra.mxu0 0
        %5388 = vmatpush.bf16.msra.mxu0 %v5153
        %5389 = vmatpush.bf16.msra.mxu0 %v5148
        %5390 = vmatmul.bf16.gmra.mxu0 %v5328
        %v5391 = vpop.f32.mrf.mxu0
        %v5392 = vadd.f32 %v5379, %v5391
        %v5393 = vpop.f32.mrf.mxu0
        %5394 = vdwg.mxu0
        %5395 = vmatpush.bf16.msra.mxu0 %v5024
        %5396 = vmatpush.bf16.msra.mxu0 %v5019
        %5397 = vmatpush.bf16.msra.mxu0 %v5014
        %5398 = vmatpush.bf16.msra.mxu0 %v5009
        %5399 = vmatpush.bf16.msra.mxu0 %v5004
        %5400 = vmatpush.bf16.msra.mxu0 %v4999
        %5401 = vmatpush.bf16.msra.mxu0 %v4994
        %5402 = vmatpush.bf16.msra.mxu0 %v4989
        %5403 = vmatmul.bf16.gmra.mxu0 %v4435
        %v5404 = vpop.f32.mrf.mxu0
        %v5405 = vadd.f32 %v4235, %v5404
        %v5406 = vpop.f32.mrf.mxu0
        %5407 = vdwg.mxu0
        %5408 = vmatpush.bf16.msra.mxu0 %v5064
        %5409 = vmatpush.bf16.msra.mxu0 %v5059
        %5410 = vmatpush.bf16.msra.mxu0 %v5054
        %5411 = vmatpush.bf16.msra.mxu0 %v5049
        %5412 = vmatpush.bf16.msra.mxu0 %v5044
        %5413 = vmatpush.bf16.msra.mxu0 %v5039
        %5414 = vmatpush.bf16.msra.mxu0 %v5034
        %5415 = vmatpush.bf16.msra.mxu0 %v5029
        %5416 = vmatmul.bf16.gmra.mxu0 %v4436
        %v5417 = vpop.f32.mrf.mxu0
        %v5418 = vadd.f32 %v5405, %v5417
        %v5419 = vpop.f32.mrf.mxu0
        %5420 = vdwg.mxu0
        %5421 = vmatpush.bf16.msra.mxu0 %v5104
        %5422 = vmatpush.bf16.msra.mxu0 %v5099
        %5423 = vmatpush.bf16.msra.mxu0 %v5094
        %5424 = vmatpush.bf16.msra.mxu0 %v5089
        %5425 = vmatpush.bf16.msra.mxu0 %v5084
        %5426 = vmatpush.bf16.msra.mxu0 %v5079
        %5427 = vmatpush.bf16.msra.mxu0 %v5074
        %5428 = vmatpush.bf16.msra.mxu0 %v5069
        %5429 = vmatmul.bf16.gmra.mxu0 %v4437
        %v5430 = vpop.f32.mrf.mxu0
        %v5431 = vadd.f32 %v5418, %v5430
        %v5432 = vpop.f32.mrf.mxu0
        %5433 = vdwg.mxu0
        %5434 = vmatpush.bf16.msra.mxu0 %v5144
        %5435 = vmatpush.bf16.msra.mxu0 %v5139
        %5436 = vmatpush.bf16.msra.mxu0 %v5134
        %5437 = vmatpush.bf16.msra.mxu0 %v5129
        %5438 = vmatpush.bf16.msra.mxu0 %v5124
        %5439 = vmatpush.bf16.msra.mxu0 %v5119
        %5440 = vmatpush.bf16.msra.mxu0 %v5114
        %5441 = vmatpush.bf16.msra.mxu0 %v5109
        %5442 = vmatmul.bf16.gmra.mxu0 %v4438
        %v5443 = vpop.f32.mrf.mxu0
        %v5444 = vadd.f32 %v5431, %v5443
        %v5445 = vpop.f32.mrf.mxu0
        %5446 = vdwg.mxu0
        %5447 = vmatpush.bf16.msra.mxu0 0
        %5448 = vmatpush.bf16.msra.mxu0 0
        %5449 = vmatpush.bf16.msra.mxu0 0
        %5450 = vmatpush.bf16.msra.mxu0 0
        %5451 = vmatpush.bf16.msra.mxu0 0
        %5452 = vmatpush.bf16.msra.mxu0 0
        %5453 = vmatpush.bf16.msra.mxu0 %v5154
        %5454 = vmatpush.bf16.msra.mxu0 %v5149
        %5455 = vmatmul.bf16.gmra.mxu0 %v5328
        %v5456 = vpop.f32.mrf.mxu0
        %v5457 = vadd.f32 %v5444, %v5456
        %v5458 = vpop.f32.mrf.mxu0
        %5459 = vdwg.mxu0
        %5460 = vmatpush.bf16.msra.mxu0 %v5025
        %5461 = vmatpush.bf16.msra.mxu0 %v5020
        %5462 = vmatpush.bf16.msra.mxu0 %v5015
        %5463 = vmatpush.bf16.msra.mxu0 %v5010
        %5464 = vmatpush.bf16.msra.mxu0 %v5005
        %5465 = vmatpush.bf16.msra.mxu0 %v5000
        %5466 = vmatpush.bf16.msra.mxu0 %v4995
        %5467 = vmatpush.bf16.msra.mxu0 %v4990
        %5468 = vmatmul.bf16.gmra.mxu0 %v4435
        %v5469 = vpop.f32.mrf.mxu0
        %v5470 = vadd.f32 %v4300, %v5469
        %v5471 = vpop.f32.mrf.mxu0
        %5472 = vdwg.mxu0
        %5473 = vmatpush.bf16.msra.mxu0 %v5065
        %5474 = vmatpush.bf16.msra.mxu0 %v5060
        %5475 = vmatpush.bf16.msra.mxu0 %v5055
        %5476 = vmatpush.bf16.msra.mxu0 %v5050
        %5477 = vmatpush.bf16.msra.mxu0 %v5045
        %5478 = vmatpush.bf16.msra.mxu0 %v5040
        %5479 = vmatpush.bf16.msra.mxu0 %v5035
        %5480 = vmatpush.bf16.msra.mxu0 %v5030
        %5481 = vmatmul.bf16.gmra.mxu0 %v4436
        %v5482 = vpop.f32.mrf.mxu0
        %v5483 = vadd.f32 %v5470, %v5482
        %v5484 = vpop.f32.mrf.mxu0
        %5485 = vdwg.mxu0
        %5486 = vmatpush.bf16.msra.mxu0 %v5105
        %5487 = vmatpush.bf16.msra.mxu0 %v5100
        %5488 = vmatpush.bf16.msra.mxu0 %v5095
        %5489 = vmatpush.bf16.msra.mxu0 %v5090
        %5490 = vmatpush.bf16.msra.mxu0 %v5085
        %5491 = vmatpush.bf16.msra.mxu0 %v5080
        %5492 = vmatpush.bf16.msra.mxu0 %v5075
        %5493 = vmatpush.bf16.msra.mxu0 %v5070
        %5494 = vmatmul.bf16.gmra.mxu0 %v4437
        %v5495 = vpop.f32.mrf.mxu0
        %v5496 = vadd.f32 %v5483, %v5495
        %v5497 = vpop.f32.mrf.mxu0
        %5498 = vdwg.mxu0
        %5499 = vmatpush.bf16.msra.mxu0 %v5145
        %5500 = vmatpush.bf16.msra.mxu0 %v5140
        %5501 = vmatpush.bf16.msra.mxu0 %v5135
        %5502 = vmatpush.bf16.msra.mxu0 %v5130
        %5503 = vmatpush.bf16.msra.mxu0 %v5125
        %5504 = vmatpush.bf16.msra.mxu0 %v5120
        %5505 = vmatpush.bf16.msra.mxu0 %v5115
        %5506 = vmatpush.bf16.msra.mxu0 %v5110
        %5507 = vmatmul.bf16.gmra.mxu0 %v4438
        %v5508 = vpop.f32.mrf.mxu0
        %v5509 = vadd.f32 %v5496, %v5508
        %v5510 = vpop.f32.mrf.mxu0
        %5511 = vdwg.mxu0
        %5512 = vmatpush.bf16.msra.mxu0 0
        %5513 = vmatpush.bf16.msra.mxu0 0
        %5514 = vmatpush.bf16.msra.mxu0 0
        %5515 = vmatpush.bf16.msra.mxu0 0
        %5516 = vmatpush.bf16.msra.mxu0 0
        %5517 = vmatpush.bf16.msra.mxu0 0
        %5518 = vmatpush.bf16.msra.mxu0 %v5155
        %5519 = vmatpush.bf16.msra.mxu0 %v5150
        %5520 = vmatmul.bf16.gmra.mxu0 %v5328
        %v5521 = vpop.f32.mrf.mxu0
        %v5522 = vadd.f32 %v5509, %v5521
        %v5523 = vpop.f32.mrf.mxu0
        %5524 = vdwg.mxu0
        %5525 = vmatpush.bf16.msra.mxu0 %v5026
        %5526 = vmatpush.bf16.msra.mxu0 %v5021
        %5527 = vmatpush.bf16.msra.mxu0 %v5016
        %5528 = vmatpush.bf16.msra.mxu0 %v5011
        %5529 = vmatpush.bf16.msra.mxu0 %v5006
        %5530 = vmatpush.bf16.msra.mxu0 %v5001
        %5531 = vmatpush.bf16.msra.mxu0 %v4996
        %5532 = vmatpush.bf16.msra.mxu0 %v4991
        %5533 = vmatmul.bf16.gmra.mxu0 %v4435
        %v5534 = vpop.f32.mrf.mxu0
        %v5535 = vadd.f32 %v4365, %v5534
        %v5536 = vpop.f32.mrf.mxu0
        %5537 = vdwg.mxu0
        %5538 = vmatpush.bf16.msra.mxu0 %v5066
        %5539 = vmatpush.bf16.msra.mxu0 %v5061
        %5540 = vmatpush.bf16.msra.mxu0 %v5056
        %5541 = vmatpush.bf16.msra.mxu0 %v5051
        %5542 = vmatpush.bf16.msra.mxu0 %v5046
        %5543 = vmatpush.bf16.msra.mxu0 %v5041
        %5544 = vmatpush.bf16.msra.mxu0 %v5036
        %5545 = vmatpush.bf16.msra.mxu0 %v5031
        %5546 = vmatmul.bf16.gmra.mxu0 %v4436
        %v5547 = vpop.f32.mrf.mxu0
        %v5548 = vadd.f32 %v5535, %v5547
        %v5549 = vpop.f32.mrf.mxu0
        %5550 = vdwg.mxu0
        %5551 = vmatpush.bf16.msra.mxu0 %v5106
        %5552 = vmatpush.bf16.msra.mxu0 %v5101
        %5553 = vmatpush.bf16.msra.mxu0 %v5096
        %5554 = vmatpush.bf16.msra.mxu0 %v5091
        %5555 = vmatpush.bf16.msra.mxu0 %v5086
        %5556 = vmatpush.bf16.msra.mxu0 %v5081
        %5557 = vmatpush.bf16.msra.mxu0 %v5076
        %5558 = vmatpush.bf16.msra.mxu0 %v5071
        %5559 = vmatmul.bf16.gmra.mxu0 %v4437
        %v5560 = vpop.f32.mrf.mxu0
        %v5561 = vadd.f32 %v5548, %v5560
        %v5562 = vpop.f32.mrf.mxu0
        %5563 = vdwg.mxu0
        %5564 = vmatpush.bf16.msra.mxu0 %v5146
        %5565 = vmatpush.bf16.msra.mxu0 %v5141
        %5566 = vmatpush.bf16.msra.mxu0 %v5136
        %5567 = vmatpush.bf16.msra.mxu0 %v5131
        %5568 = vmatpush.bf16.msra.mxu0 %v5126
        %5569 = vmatpush.bf16.msra.mxu0 %v5121
        %5570 = vmatpush.bf16.msra.mxu0 %v5116
        %5571 = vmatpush.bf16.msra.mxu0 %v5111
        %5572 = vmatmul.bf16.gmra.mxu0 %v4438
        %v5573 = vpop.f32.mrf.mxu0
        %v5574 = vadd.f32 %v5561, %v5573
        %v5575 = vpop.f32.mrf.mxu0
        %5576 = vdwg.mxu0
        %5577 = vmatpush.bf16.msra.mxu0 0
        %5578 = vmatpush.bf16.msra.mxu0 0
        %5579 = vmatpush.bf16.msra.mxu0 0
        %5580 = vmatpush.bf16.msra.mxu0 0
        %5581 = vmatpush.bf16.msra.mxu0 0
        %5582 = vmatpush.bf16.msra.mxu0 0
        %5583 = vmatpush.bf16.msra.mxu0 %v5156
        %5584 = vmatpush.bf16.msra.mxu0 %v5151
        %5585 = vmatmul.bf16.gmra.mxu0 %v5328
        %v5586 = vpop.f32.mrf.mxu0
        %v5587 = vadd.f32 %v5574, %v5586
        %v5588 = vpop.f32.mrf.mxu0
        %5589 = vdwg.mxu0
        %5590 = vmatpush.bf16.msra.mxu0 %v5027
        %5591 = vmatpush.bf16.msra.mxu0 %v5022
        %5592 = vmatpush.bf16.msra.mxu0 %v5017
        %5593 = vmatpush.bf16.msra.mxu0 %v5012
        %5594 = vmatpush.bf16.msra.mxu0 %v5007
        %5595 = vmatpush.bf16.msra.mxu0 %v5002
        %5596 = vmatpush.bf16.msra.mxu0 %v4997
        %5597 = vmatpush.bf16.msra.mxu0 %v4992
        %5598 = vmatmul.bf16.gmra.mxu0 %v4435
        %v5599 = vpop.f32.mrf.mxu0
        %v5600 = vadd.f32 %v4430, %v5599
        %v5601 = vpop.f32.mrf.mxu0
        %5602 = vdwg.mxu0
        %5603 = vmatpush.bf16.msra.mxu0 %v5067
        %5604 = vmatpush.bf16.msra.mxu0 %v5062
        %5605 = vmatpush.bf16.msra.mxu0 %v5057
        %5606 = vmatpush.bf16.msra.mxu0 %v5052
        %5607 = vmatpush.bf16.msra.mxu0 %v5047
        %5608 = vmatpush.bf16.msra.mxu0 %v5042
        %5609 = vmatpush.bf16.msra.mxu0 %v5037
        %5610 = vmatpush.bf16.msra.mxu0 %v5032
        %5611 = vmatmul.bf16.gmra.mxu0 %v4436
        %v5612 = vpop.f32.mrf.mxu0
        %v5613 = vadd.f32 %v5600, %v5612
        %v5614 = vpop.f32.mrf.mxu0
        %5615 = vdwg.mxu0
        %5616 = vmatpush.bf16.msra.mxu0 %v5107
        %5617 = vmatpush.bf16.msra.mxu0 %v5102
        %5618 = vmatpush.bf16.msra.mxu0 %v5097
        %5619 = vmatpush.bf16.msra.mxu0 %v5092
        %5620 = vmatpush.bf16.msra.mxu0 %v5087
        %5621 = vmatpush.bf16.msra.mxu0 %v5082
        %5622 = vmatpush.bf16.msra.mxu0 %v5077
        %5623 = vmatpush.bf16.msra.mxu0 %v5072
        %5624 = vmatmul.bf16.gmra.mxu0 %v4437
        %v5625 = vpop.f32.mrf.mxu0
        %v5626 = vadd.f32 %v5613, %v5625
        %v5627 = vpop.f32.mrf.mxu0
        %5628 = vdwg.mxu0
        %5629 = vmatpush.bf16.msra.mxu0 %v5147
        %5630 = vmatpush.bf16.msra.mxu0 %v5142
        %5631 = vmatpush.bf16.msra.mxu0 %v5137
        %5632 = vmatpush.bf16.msra.mxu0 %v5132
        %5633 = vmatpush.bf16.msra.mxu0 %v5127
        %5634 = vmatpush.bf16.msra.mxu0 %v5122
        %5635 = vmatpush.bf16.msra.mxu0 %v5117
        %5636 = vmatpush.bf16.msra.mxu0 %v5112
        %5637 = vmatmul.bf16.gmra.mxu0 %v4438
        %v5638 = vpop.f32.mrf.mxu0
        %v5639 = vadd.f32 %v5626, %v5638
        %v5640 = vpop.f32.mrf.mxu0
        %5641 = vdwg.mxu0
        %5642 = vmatpush.bf16.msra.mxu0 0
        %5643 = vmatpush.bf16.msra.mxu0 0
        %5644 = vmatpush.bf16.msra.mxu0 0
        %5645 = vmatpush.bf16.msra.mxu0 0
        %5646 = vmatpush.bf16.msra.mxu0 0
        %5647 = vmatpush.bf16.msra.mxu0 0
        %5648 = vmatpush.bf16.msra.mxu0 %v5157
        %5649 = vmatpush.bf16.msra.mxu0 %v5152
        %5650 = vmatmul.bf16.gmra.mxu0 %v5328
        %v5651 = vpop.f32.mrf.mxu0
        %v5652 = vadd.f32 %v5639, %v5651
        %v5653 = vpop.f32.mrf.mxu0
        %5654 = vdwg.mxu0
        %v5655 = vld [vmem:[#allocation3] sm:$0xff]
        %v5656 = vld [vmem:[#allocation3 + $0x8] sm:$0x3]
        %v5661 = vrot.slane %v5457, 6
        %v5662 = vrot.slane %v5522, 4
        %v5663 = vrot.slane %v5587, 2
        %vm5664 = vcmask 1041408
        %v5665 = vsel %vm5664, %v5392, %v5661
        %vm5666 = vcmask 1045508
        %v5667 = vsel %vm5666, %v5662, %v5663
        %vm5668 = vcmask 1043456
        %v5669 = vsel %vm5668, %v5665, %v5667
        %v5671 = vadd.f32 %v5655, %v5669
        %v5672 = vadd.f32 %v5656, %v5652
        %5673 = vst [vmem:[#allocation3] sm:$0xff] %v5671
        %vm5674 = vcmask 254976
        %5675 = vst.msk [vmem:[#allocation3 + $0x8] sm:$0x3] %vm5674, %v5672
        %p5676 = scmp.eq.s32.totalorder %s20, 3
        // Predicated region
        $region57: #{mlp_forward.1} parent=51 // pred_check
          %p5677 = pneg %p5676
        $region58: #{mlp_forward.1} parent=51 // pred_check_branch
          %5679 = sbr.rel (%p5677) target = $region60
        $region59: #{mlp_forward.1} parent=51 // pred_region
          %v5680 = vld [vmem:[#allocation3] sm:$0xff]
          %v5681 = vld [vmem:[#allocation3 + $0x8] sm:$0x3]
          %v5682 = vld [vmem:[%s5] sm:$0x1f]
          %v5684 = vperm.slane %v5682, 0
          %v5685 = vperm.slane %v5682, 1
          %v5686 = vperm.slane %v5682, 2
          %v5687 = vperm.slane %v5682, 3
          %v5688 = vperm.slane %v5682, 4
          %v5690 = vrot.slane %v5685, 6
          %v5691 = vrot.slane %v5686, 4
          %v5692 = vrot.slane %v5687, 2
          %v5693 = vsel %vm5664, %v5684, %v5690
          %v5694 = vsel %vm5666, %v5691, %v5692
          %v5695 = vsel %vm5668, %v5693, %v5694
          %v5697 = vadd.f32 %v5680, %v5695
          %v5698 = vadd.f32 %v5681, %v5688
          %v5699 = vmax.f32 %v5697, 0.0
          %v5700 = vmax.f32 %v5698, 0.0
          %5703 = vst [vmem:[#allocation1] ss:$4 sm:$0xff] %v5699
          %s5704 = scalar_lea.vmem [#allocation1], 32
          %5705 = vst [vmem:[%s5704] ss:$4 sm:$0xff] %v5700
          %v5706 = vld.sshfl [vmem:[#allocation1] sm:$0xff pattern:$0x73625140]
          %v5707 = vld.sshfl [vmem:[#allocation1 + $0x8] sm:$0xff pattern:$0x73625140]
          %v5708 = vld.sshfl [vmem:[#allocation1 + $0x10] sm:$0xff pattern:$0x73625140]
          %v5709 = vld.sshfl [vmem:[#allocation1 + $0x18] sm:$0xff pattern:$0x73625140]
          %v5710 = vld.sshfl [vmem:[#allocation1 + $0x20] sm:$0xff pattern:$0x73625140]
          %v5716 = vpack.c.bf16 %v5706, %v5706
          %v5717 = vpack.c.bf16 %v5707, %v5707
          %v5718 = vpack.c.bf16 %v5708, %v5708
          %v5719 = vpack.c.bf16 %v5709, %v5709
          %v5720 = vpack.c.bf16 %v5710, %v5710
          %v5721 = vld [vmem:[%s6] sm:$0xff]
          %v5722 = vld [vmem:[%s6 + $0x8] sm:$0xff]
          %v5723 = vld [vmem:[%s6 + $0x10] sm:$0xff]
          %v5724 = vld [vmem:[%s6 + $0x18] sm:$0xff]
          %v5725 = vld [vmem:[%s6 + $0x20] sm:$0xff]
          %v5726 = vld [vmem:[%s6 + $0x28] sm:$0xff]
          %v5727 = vld [vmem:[%s6 + $0x30] sm:$0xff]
          %v5728 = vld [vmem:[%s6 + $0x38] sm:$0xff]
          %v5729 = vld [vmem:[%s6 + $0x40] sm:$0xff]
          %v5730 = vld [vmem:[%s6 + $0x48] sm:$0xff]
          %v5731 = vld [vmem:[%s6 + $0x50] sm:$0xff]
          %v5732 = vld [vmem:[%s6 + $0x58] sm:$0xff]
          %v5733 = vld [vmem:[%s6 + $0x60] sm:$0xff]
          %v5734 = vld [vmem:[%s6 + $0x68] sm:$0xff]
          %v5735 = vld [vmem:[%s6 + $0x70] sm:$0xff]
          %v5736 = vld [vmem:[%s6 + $0x78] sm:$0xff]
          %v5737 = vld [vmem:[%s6 + $0x80] sm:$0xff]
          %v5738 = vld [vmem:[%s6 + $0x88] sm:$0xff]
          %v5739 = vld [vmem:[%s6 + $0x90] sm:$0xff]
          %v5740 = vld [vmem:[%s6 + $0x98] sm:$0xff]
          %v5741 = vld [vmem:[%s6 + $0xa0] sm:$0xff]
          %v5742 = vld [vmem:[%s6 + $0xa8] sm:$0xff]
          %v5743 = vld [vmem:[%s6 + $0xb0] sm:$0xff]
          %v5744 = vld [vmem:[%s6 + $0xb8] sm:$0xff]
          %v5745 = vld [vmem:[%s6 + $0xc0] sm:$0xff]
          %v5746 = vld [vmem:[%s6 + $0xc8] sm:$0xff]
          %v5747 = vld [vmem:[%s6 + $0xd0] sm:$0xff]
          %v5748 = vld [vmem:[%s6 + $0xd8] sm:$0xff]
          %v5749 = vld [vmem:[%s6 + $0xe0] sm:$0xff]
          %v5750 = vld [vmem:[%s6 + $0xe8] sm:$0xff]
          %v5751 = vld [vmem:[%s6 + $0xf0] sm:$0xff]
          %v5752 = vld [vmem:[%s6 + $0xf8] sm:$0xff]
          %v5753 = vld [vmem:[%s6 + $0x100] sm:$0xff]
          %v5754 = vld [vmem:[%s6 + $0x108] sm:$0xff]
          %v5755 = vld [vmem:[%s6 + $0x110] sm:$0xff]
          %v5756 = vld [vmem:[%s6 + $0x118] sm:$0xff]
          %v5757 = vld [vmem:[%s6 + $0x120] sm:$0xff]
          %v5758 = vld [vmem:[%s6 + $0x128] sm:$0xff]
          %v5759 = vld [vmem:[%s6 + $0x130] sm:$0xff]
          %v5760 = vld [vmem:[%s6 + $0x138] sm:$0xff]
          %v5761 = vld [vmem:[%s6 + $0x140] sm:$0xff]
          %v5762 = vld [vmem:[%s6 + $0x148] sm:$0xff]
          %v5763 = vld [vmem:[%s6 + $0x150] sm:$0xff]
          %v5764 = vld [vmem:[%s6 + $0x158] sm:$0xff]
          %v5765 = vld [vmem:[%s6 + $0x160] sm:$0xff]
          %v5766 = vld [vmem:[%s6 + $0x168] sm:$0xff]
          %v5767 = vld [vmem:[%s6 + $0x170] sm:$0xff]
          %v5768 = vld [vmem:[%s6 + $0x178] sm:$0xff]
          %v5769 = vld [vmem:[%s6 + $0x180] sm:$0xff]
          %v5770 = vld [vmem:[%s6 + $0x188] sm:$0xff]
          %v5771 = vld [vmem:[%s6 + $0x190] sm:$0xff]
          %v5772 = vld [vmem:[%s6 + $0x198] sm:$0xff]
          %v5773 = vld [vmem:[%s6 + $0x1a0] sm:$0xff]
          %v5774 = vld [vmem:[%s6 + $0x1a8] sm:$0xff]
          %v5775 = vld [vmem:[%s6 + $0x1b0] sm:$0xff]
          %v5776 = vld [vmem:[%s6 + $0x1b8] sm:$0xff]
          %v5777 = vld [vmem:[%s6 + $0x1c0] sm:$0xff]
          %v5778 = vld [vmem:[%s6 + $0x1c8] sm:$0xff]
          %v5779 = vld [vmem:[%s6 + $0x1d0] sm:$0xff]
          %v5780 = vld [vmem:[%s6 + $0x1d8] sm:$0xff]
          %v5781 = vld [vmem:[%s6 + $0x1e0] sm:$0xff]
          %v5782 = vld [vmem:[%s6 + $0x1e8] sm:$0xff]
          %v5783 = vld [vmem:[%s6 + $0x1f0] sm:$0xff]
          %v5784 = vld [vmem:[%s6 + $0x1f8] sm:$0xff]
          %v5785 = vld [vmem:[%s6 + $0x200] sm:$0xff]
          %v5786 = vld [vmem:[%s6 + $0x208] sm:$0xff]
          %v5787 = vld [vmem:[%s6 + $0x210] sm:$0xff]
          %v5788 = vld [vmem:[%s6 + $0x218] sm:$0xff]
          %v5789 = vld [vmem:[%s7] sm:$0x3]
          %v5791 = vperm.slane %v5789, 0
          %v5792 = vperm.slane %v5789, 1
          %v5863 = vunpack.c.l.b16 %v5721
          %v5864 = vunpack.c.h.b16 %v5721
          %v5865 = vunpack.c.l.b16 %v5722
          %v5866 = vunpack.c.h.b16 %v5722
          %v5867 = vunpack.c.l.b16 %v5723
          %v5868 = vunpack.c.h.b16 %v5723
          %v5869 = vunpack.c.l.b16 %v5724
          %v5870 = vunpack.c.h.b16 %v5724
          %v5871 = vunpack.c.l.b16 %v5725
          %v5872 = vunpack.c.h.b16 %v5725
          %v5873 = vunpack.c.l.b16 %v5726
          %v5874 = vunpack.c.h.b16 %v5726
          %v5875 = vunpack.c.l.b16 %v5727
          %v5876 = vunpack.c.h.b16 %v5727
          %v5877 = vunpack.c.l.b16 %v5728
          %v5878 = vunpack.c.h.b16 %v5728
          %v5879 = vunpack.c.l.b16 %v5729
          %v5880 = vunpack.c.h.b16 %v5729
          %v5881 = vunpack.c.l.b16 %v5730
          %v5882 = vunpack.c.h.b16 %v5730
          %v5883 = vunpack.c.l.b16 %v5731
          %v5884 = vunpack.c.h.b16 %v5731
          %v5885 = vunpack.c.l.b16 %v5732
          %v5886 = vunpack.c.h.b16 %v5732
          %v5887 = vunpack.c.l.b16 %v5733
          %v5888 = vunpack.c.h.b16 %v5733
          %v5889 = vunpack.c.l.b16 %v5734
          %v5890 = vunpack.c.h.b16 %v5734
          %v5891 = vunpack.c.l.b16 %v5735
          %v5892 = vunpack.c.h.b16 %v5735
          %v5893 = vunpack.c.l.b16 %v5736
          %v5894 = vunpack.c.h.b16 %v5736
          %v5895 = vunpack.c.l.b16 %v5737
          %v5896 = vunpack.c.h.b16 %v5737
          %v5897 = vunpack.c.l.b16 %v5738
          %v5898 = vunpack.c.h.b16 %v5738
          %v5899 = vunpack.c.l.b16 %v5739
          %v5900 = vunpack.c.h.b16 %v5739
          %v5901 = vunpack.c.l.b16 %v5740
          %v5902 = vunpack.c.h.b16 %v5740
          %v5903 = vunpack.c.l.b16 %v5741
          %v5904 = vunpack.c.h.b16 %v5741
          %v5905 = vunpack.c.l.b16 %v5742
          %v5906 = vunpack.c.h.b16 %v5742
          %v5907 = vunpack.c.l.b16 %v5743
          %v5908 = vunpack.c.h.b16 %v5743
          %v5909 = vunpack.c.l.b16 %v5744
          %v5910 = vunpack.c.h.b16 %v5744
          %v5911 = vunpack.c.l.b16 %v5745
          %v5912 = vunpack.c.h.b16 %v5745
          %v5913 = vunpack.c.l.b16 %v5746
          %v5914 = vunpack.c.h.b16 %v5746
          %v5915 = vunpack.c.l.b16 %v5747
          %v5916 = vunpack.c.h.b16 %v5747
          %v5917 = vunpack.c.l.b16 %v5748
          %v5918 = vunpack.c.h.b16 %v5748
          %v5919 = vunpack.c.l.b16 %v5749
          %v5920 = vunpack.c.h.b16 %v5749
          %v5921 = vunpack.c.l.b16 %v5750
          %v5922 = vunpack.c.h.b16 %v5750
          %v5923 = vunpack.c.l.b16 %v5751
          %v5924 = vunpack.c.h.b16 %v5751
          %v5925 = vunpack.c.l.b16 %v5752
          %v5926 = vunpack.c.h.b16 %v5752
          %v5927 = vunpack.c.l.b16 %v5753
          %v5928 = vunpack.c.h.b16 %v5753
          %v5929 = vunpack.c.l.b16 %v5754
          %v5930 = vunpack.c.h.b16 %v5754
          %v5931 = vunpack.c.l.b16 %v5755
          %v5932 = vunpack.c.h.b16 %v5755
          %v5933 = vunpack.c.l.b16 %v5756
          %v5934 = vunpack.c.h.b16 %v5756
          %v5935 = vunpack.c.l.b16 %v5757
          %v5936 = vunpack.c.h.b16 %v5757
          %v5937 = vunpack.c.l.b16 %v5758
          %v5938 = vunpack.c.h.b16 %v5758
          %v5939 = vunpack.c.l.b16 %v5759
          %v5940 = vunpack.c.h.b16 %v5759
          %v5941 = vunpack.c.l.b16 %v5760
          %v5942 = vunpack.c.h.b16 %v5760
          %v5943 = vunpack.c.l.b16 %v5761
          %v5944 = vunpack.c.h.b16 %v5761
          %v5945 = vunpack.c.l.b16 %v5762
          %v5946 = vunpack.c.h.b16 %v5762
          %v5947 = vunpack.c.l.b16 %v5763
          %v5948 = vunpack.c.h.b16 %v5763
          %v5949 = vunpack.c.l.b16 %v5764
          %v5950 = vunpack.c.h.b16 %v5764
          %v5951 = vunpack.c.l.b16 %v5765
          %v5952 = vunpack.c.h.b16 %v5765
          %v5953 = vunpack.c.l.b16 %v5766
          %v5954 = vunpack.c.h.b16 %v5766
          %v5955 = vunpack.c.l.b16 %v5767
          %v5956 = vunpack.c.h.b16 %v5767
          %v5957 = vunpack.c.l.b16 %v5768
          %v5958 = vunpack.c.h.b16 %v5768
          %v5959 = vunpack.c.l.b16 %v5769
          %v5960 = vunpack.c.h.b16 %v5769
          %v5961 = vunpack.c.l.b16 %v5770
          %v5962 = vunpack.c.h.b16 %v5770
          %v5963 = vunpack.c.l.b16 %v5771
          %v5964 = vunpack.c.h.b16 %v5771
          %v5965 = vunpack.c.l.b16 %v5772
          %v5966 = vunpack.c.h.b16 %v5772
          %v5967 = vunpack.c.l.b16 %v5773
          %v5968 = vunpack.c.h.b16 %v5773
          %v5969 = vunpack.c.l.b16 %v5774
          %v5970 = vunpack.c.h.b16 %v5774
          %v5971 = vunpack.c.l.b16 %v5775
          %v5972 = vunpack.c.h.b16 %v5775
          %v5973 = vunpack.c.l.b16 %v5776
          %v5974 = vunpack.c.h.b16 %v5776
          %v5975 = vunpack.c.l.b16 %v5777
          %v5976 = vunpack.c.h.b16 %v5777
          %v5977 = vunpack.c.l.b16 %v5778
          %v5978 = vunpack.c.h.b16 %v5778
          %v5979 = vunpack.c.l.b16 %v5779
          %v5980 = vunpack.c.h.b16 %v5779
          %v5981 = vunpack.c.l.b16 %v5780
          %v5982 = vunpack.c.h.b16 %v5780
          %v5983 = vunpack.c.l.b16 %v5781
          %v5984 = vunpack.c.h.b16 %v5781
          %v5985 = vunpack.c.l.b16 %v5782
          %v5986 = vunpack.c.h.b16 %v5782
          %v5987 = vunpack.c.l.b16 %v5783
          %v5988 = vunpack.c.h.b16 %v5783
          %v5989 = vunpack.c.l.b16 %v5784
          %v5990 = vunpack.c.h.b16 %v5784
          %v5991 = vunpack.c.l.b16 %v5785
          %v5992 = vunpack.c.h.b16 %v5785
          %v5993 = vunpack.c.l.b16 %v5786
          %v5994 = vunpack.c.h.b16 %v5786
          %v5995 = vunpack.c.l.b16 %v5787
          %v5996 = vunpack.c.h.b16 %v5787
          %v5997 = vunpack.c.l.b16 %v5788
          %v5998 = vunpack.c.h.b16 %v5788
          %v5999 = vpack.c.b16 %v5865, %v5863
          %v6000 = vpack.c.b16 %v5866, %v5864
          %v6001 = vpack.c.b16 %v5869, %v5867
          %v6002 = vpack.c.b16 %v5870, %v5868
          %v6003 = vpack.c.b16 %v5873, %v5871
          %v6004 = vpack.c.b16 %v5874, %v5872
          %v6005 = vpack.c.b16 %v5877, %v5875
          %v6006 = vpack.c.b16 %v5878, %v5876
          %v6007 = vpack.c.b16 %v5881, %v5879
          %v6008 = vpack.c.b16 %v5882, %v5880
          %v6009 = vpack.c.b16 %v5885, %v5883
          %v6010 = vpack.c.b16 %v5886, %v5884
          %v6011 = vpack.c.b16 %v5889, %v5887
          %v6012 = vpack.c.b16 %v5890, %v5888
          %v6013 = vpack.c.b16 %v5893, %v5891
          %v6014 = vpack.c.b16 %v5894, %v5892
          %v6015 = vpack.c.b16 %v5897, %v5895
          %v6016 = vpack.c.b16 %v5898, %v5896
          %v6017 = vpack.c.b16 %v5901, %v5899
          %v6018 = vpack.c.b16 %v5902, %v5900
          %v6019 = vpack.c.b16 %v5905, %v5903
          %v6020 = vpack.c.b16 %v5906, %v5904
          %v6021 = vpack.c.b16 %v5909, %v5907
          %v6022 = vpack.c.b16 %v5910, %v5908
          %v6023 = vpack.c.b16 %v5913, %v5911
          %v6024 = vpack.c.b16 %v5914, %v5912
          %v6025 = vpack.c.b16 %v5917, %v5915
          %v6026 = vpack.c.b16 %v5918, %v5916
          %v6027 = vpack.c.b16 %v5921, %v5919
          %v6028 = vpack.c.b16 %v5922, %v5920
          %v6029 = vpack.c.b16 %v5925, %v5923
          %v6030 = vpack.c.b16 %v5926, %v5924
          %v6031 = vpack.c.b16 %v5929, %v5927
          %v6032 = vpack.c.b16 %v5930, %v5928
          %v6033 = vpack.c.b16 %v5933, %v5931
          %v6034 = vpack.c.b16 %v5934, %v5932
          %v6035 = vpack.c.b16 %v5937, %v5935
          %v6036 = vpack.c.b16 %v5938, %v5936
          %v6037 = vpack.c.b16 %v5941, %v5939
          %v6038 = vpack.c.b16 %v5942, %v5940
          %v6039 = vpack.c.b16 %v5945, %v5943
          %v6040 = vpack.c.b16 %v5946, %v5944
          %v6041 = vpack.c.b16 %v5949, %v5947
          %v6042 = vpack.c.b16 %v5950, %v5948
          %v6043 = vpack.c.b16 %v5953, %v5951
          %v6044 = vpack.c.b16 %v5954, %v5952
          %v6045 = vpack.c.b16 %v5957, %v5955
          %v6046 = vpack.c.b16 %v5958, %v5956
          %v6047 = vpack.c.b16 %v5961, %v5959
          %v6048 = vpack.c.b16 %v5962, %v5960
          %v6049 = vpack.c.b16 %v5965, %v5963
          %v6050 = vpack.c.b16 %v5966, %v5964
          %v6051 = vpack.c.b16 %v5969, %v5967
          %v6052 = vpack.c.b16 %v5970, %v5968
          %v6053 = vpack.c.b16 %v5973, %v5971
          %v6054 = vpack.c.b16 %v5974, %v5972
          %v6055 = vpack.c.b16 %v5977, %v5975
          %v6056 = vpack.c.b16 %v5978, %v5976
          %v6057 = vpack.c.b16 %v5981, %v5979
          %v6058 = vpack.c.b16 %v5982, %v5980
          %v6059 = vpack.c.b16 %v5985, %v5983
          %v6060 = vpack.c.b16 %v5986, %v5984
          %v6061 = vpack.c.b16 %v5989, %v5987
          %v6062 = vpack.c.b16 %v5990, %v5988
          %v6063 = vpack.c.b16 %v5993, %v5991
          %v6064 = vpack.c.b16 %v5994, %v5992
          %v6065 = vpack.c.b16 %v5997, %v5995
          %v6066 = vpack.c.b16 %v5998, %v5996
          %v6136 = vsel %vm4105, %v5720, 0
          %6138 = vmatpush.bf16.msra.mxu0 %v6013
          %6139 = vmatpush.bf16.msra.mxu0 %v6011
          %6140 = vmatpush.bf16.msra.mxu0 %v6009
          %6141 = vmatpush.bf16.msra.mxu0 %v6007
          %6142 = vmatpush.bf16.msra.mxu0 %v6005
          %6143 = vmatpush.bf16.msra.mxu0 %v6003
          %6144 = vmatpush.bf16.msra.mxu0 %v6001
          %6145 = vmatpush.bf16.msra.mxu0 %v5999
          %6146 = vmatmul.bf16.gmra.mxu0 %v5716
          %v6147 = vpop.f32.mrf.mxu0
          %v6148 = vadd.f32 %v5791, %v6147
          %v6149 = vpop.f32.mrf.mxu0
          %6150 = vdwg.mxu0
          %6151 = vmatpush.bf16.msra.mxu0 %v6029
          %6152 = vmatpush.bf16.msra.mxu0 %v6027
          %6153 = vmatpush.bf16.msra.mxu0 %v6025
          %6154 = vmatpush.bf16.msra.mxu0 %v6023
          %6155 = vmatpush.bf16.msra.mxu0 %v6021
          %6156 = vmatpush.bf16.msra.mxu0 %v6019
          %6157 = vmatpush.bf16.msra.mxu0 %v6017
          %6158 = vmatpush.bf16.msra.mxu0 %v6015
          %6159 = vmatmul.bf16.gmra.mxu0 %v5717
          %v6160 = vpop.f32.mrf.mxu0
          %v6161 = vadd.f32 %v6148, %v6160
          %v6162 = vpop.f32.mrf.mxu0
          %6163 = vdwg.mxu0
          %6164 = vmatpush.bf16.msra.mxu0 %v6045
          %6165 = vmatpush.bf16.msra.mxu0 %v6043
          %6166 = vmatpush.bf16.msra.mxu0 %v6041
          %6167 = vmatpush.bf16.msra.mxu0 %v6039
          %6168 = vmatpush.bf16.msra.mxu0 %v6037
          %6169 = vmatpush.bf16.msra.mxu0 %v6035
          %6170 = vmatpush.bf16.msra.mxu0 %v6033
          %6171 = vmatpush.bf16.msra.mxu0 %v6031
          %6172 = vmatmul.bf16.gmra.mxu0 %v5718
          %v6173 = vpop.f32.mrf.mxu0
          %v6174 = vadd.f32 %v6161, %v6173
          %v6175 = vpop.f32.mrf.mxu0
          %6176 = vdwg.mxu0
          %6177 = vmatpush.bf16.msra.mxu0 %v6061
          %6178 = vmatpush.bf16.msra.mxu0 %v6059
          %6179 = vmatpush.bf16.msra.mxu0 %v6057
          %6180 = vmatpush.bf16.msra.mxu0 %v6055
          %6181 = vmatpush.bf16.msra.mxu0 %v6053
          %6182 = vmatpush.bf16.msra.mxu0 %v6051
          %6183 = vmatpush.bf16.msra.mxu0 %v6049
          %6184 = vmatpush.bf16.msra.mxu0 %v6047
          %6185 = vmatmul.bf16.gmra.mxu0 %v5719
          %v6186 = vpop.f32.mrf.mxu0
          %v6187 = vadd.f32 %v6174, %v6186
          %v6188 = vpop.f32.mrf.mxu0
          %6189 = vdwg.mxu0
          %6190 = vmatpush.bf16.msra.mxu0 0
          %6191 = vmatpush.bf16.msra.mxu0 0
          %6192 = vmatpush.bf16.msra.mxu0 0
          %6193 = vmatpush.bf16.msra.mxu0 0
          %6194 = vmatpush.bf16.msra.mxu0 0
          %6195 = vmatpush.bf16.msra.mxu0 0
          %6196 = vmatpush.bf16.msra.mxu0 %v6065
          %6197 = vmatpush.bf16.msra.mxu0 %v6063
          %6198 = vmatmul.bf16.gmra.mxu0 %v6136
          %v6199 = vpop.f32.mrf.mxu0
          %v6200 = vadd.f32 %v6187, %v6199
          %v6201 = vpop.f32.mrf.mxu0
          %6202 = vdwg.mxu0
          %6203 = vmatpush.bf16.msra.mxu0 %v6014
          %6204 = vmatpush.bf16.msra.mxu0 %v6012
          %6205 = vmatpush.bf16.msra.mxu0 %v6010
          %6206 = vmatpush.bf16.msra.mxu0 %v6008
          %6207 = vmatpush.bf16.msra.mxu0 %v6006
          %6208 = vmatpush.bf16.msra.mxu0 %v6004
          %6209 = vmatpush.bf16.msra.mxu0 %v6002
          %6210 = vmatpush.bf16.msra.mxu0 %v6000
          %6211 = vmatmul.bf16.gmra.mxu0 %v5716
          %v6212 = vpop.f32.mrf.mxu0
          %v6213 = vadd.f32 %v5792, %v6212
          %v6214 = vpop.f32.mrf.mxu0
          %6215 = vdwg.mxu0
          %6216 = vmatpush.bf16.msra.mxu0 %v6030
          %6217 = vmatpush.bf16.msra.mxu0 %v6028
          %6218 = vmatpush.bf16.msra.mxu0 %v6026
          %6219 = vmatpush.bf16.msra.mxu0 %v6024
          %6220 = vmatpush.bf16.msra.mxu0 %v6022
          %6221 = vmatpush.bf16.msra.mxu0 %v6020
          %6222 = vmatpush.bf16.msra.mxu0 %v6018
          %6223 = vmatpush.bf16.msra.mxu0 %v6016
          %6224 = vmatmul.bf16.gmra.mxu0 %v5717
          %v6225 = vpop.f32.mrf.mxu0
          %v6226 = vadd.f32 %v6213, %v6225
          %v6227 = vpop.f32.mrf.mxu0
          %6228 = vdwg.mxu0
          %6229 = vmatpush.bf16.msra.mxu0 %v6046
          %6230 = vmatpush.bf16.msra.mxu0 %v6044
          %6231 = vmatpush.bf16.msra.mxu0 %v6042
          %6232 = vmatpush.bf16.msra.mxu0 %v6040
          %6233 = vmatpush.bf16.msra.mxu0 %v6038
          %6234 = vmatpush.bf16.msra.mxu0 %v6036
          %6235 = vmatpush.bf16.msra.mxu0 %v6034
          %6236 = vmatpush.bf16.msra.mxu0 %v6032
          %6237 = vmatmul.bf16.gmra.mxu0 %v5718
          %v6238 = vpop.f32.mrf.mxu0
          %v6239 = vadd.f32 %v6226, %v6238
          %v6240 = vpop.f32.mrf.mxu0
          %6241 = vdwg.mxu0
          %6242 = vmatpush.bf16.msra.mxu0 %v6062
          %6243 = vmatpush.bf16.msra.mxu0 %v6060
          %6244 = vmatpush.bf16.msra.mxu0 %v6058
          %6245 = vmatpush.bf16.msra.mxu0 %v6056
          %6246 = vmatpush.bf16.msra.mxu0 %v6054
          %6247 = vmatpush.bf16.msra.mxu0 %v6052
          %6248 = vmatpush.bf16.msra.mxu0 %v6050
          %6249 = vmatpush.bf16.msra.mxu0 %v6048
          %6250 = vmatmul.bf16.gmra.mxu0 %v5719
          %v6251 = vpop.f32.mrf.mxu0
          %v6252 = vadd.f32 %v6239, %v6251
          %v6253 = vpop.f32.mrf.mxu0
          %6254 = vdwg.mxu0
          %6255 = vmatpush.bf16.msra.mxu0 0
          %6256 = vmatpush.bf16.msra.mxu0 0
          %6257 = vmatpush.bf16.msra.mxu0 0
          %6258 = vmatpush.bf16.msra.mxu0 0
          %6259 = vmatpush.bf16.msra.mxu0 0
          %6260 = vmatpush.bf16.msra.mxu0 0
          %6261 = vmatpush.bf16.msra.mxu0 %v6066
          %6262 = vmatpush.bf16.msra.mxu0 %v6064
          %6263 = vmatmul.bf16.gmra.mxu0 %v6136
          %v6264 = vpop.f32.mrf.mxu0
          %v6265 = vadd.f32 %v6252, %v6264
          %v6266 = vpop.f32.mrf.mxu0
          %6267 = vdwg.mxu0
          %v6270 = vrot.slane %v6265, 6
          %v6271 = vsel %vm5664, %v6200, %v6270
          %vm6273 = vcmask 429058
          %vm6274 = vmor %vm6273, %vm5664
          %6275 = vst.msk [vmem:[#allocation4] sm:$0xf] %vm6274, %v6271
        $region60: #{mlp_forward.1} parent=51 // pred_fallthru
          _
        // Predicated region
        $region61: #{mlp_forward.1} parent=51 // pred_check
          %p6276 = pneg %p206
        $region62: #{mlp_forward.1} parent=51 // pred_check_branch
          %6278 = sbr.rel (%p6276) target = $region64
        $region63: #{mlp_forward.1} parent=51 // pred_region
          %6280 = vsyncadd [#allocation5], 0
          %s6282 = sshll.u32 [#allocation4], 4
          %s6283 = int_to_ptr.vmem [resolvable:$true] %s6282
          %s6284 = sshll.u32 %s8, 4
          %s6285 = int_to_ptr.hbm [resolvable:$true] %s6284
          %6287 = dma.vmem_to_hbm [thread:$0]  %s6283, 64, %s6285, [#allocation5]
        $region64: #{mlp_forward.1} parent=51 // pred_fallthru
          _
        // Predicated region
        $region65: #{mlp_forward.1} parent=51 // pred_check
          %p6288 = pneg %p206
        $region66: #{mlp_forward.1} parent=51 // pred_check_branch
          %6290 = sbr.rel (%p6288) target = $region68
        $region67: #{mlp_forward.1} parent=51 // pred_region
          %6292 = dma.done [#allocation5], 64
        $region68: #{mlp_forward.1} parent=51 // pred_fallthru
          _
      $region52: #{mlp_forward.1} parent=5 // pred_fallthru
        _
      %p6293 = scmp.le.s32.totalorder 2, %s15
      // Predicated region
      $region69: #{mlp_forward.1} parent=5 // pred_check
        %p6294 = pneg %p6293
      $region70: #{mlp_forward.1} parent=5 // pred_check_branch
        %6296 = sbr.rel (%p6294) target = $region72
      $region71: #{mlp_forward.1} parent=5 // pred_region
        %s6297 = ssub.s32 %s15, 2
      $region72: #{mlp_forward.1} parent=5 // pred_fallthru
        _
    $region6: #{mlp_forward.1} parent=1 // loop_footer
      %s19 = sadd.s32 1, %s15
    $region7: #{mlp_forward.1} parent=1 // loop_footer_branch
      %14 = sbr.rel target = $region3
    $region8: #{mlp_forward.1} parent=1 // loop_exit
      _
    %6298 = vsyncpa [#allocation5], 1
    %s6299 = scalar_lea.sflag [#allocation5], 1
    %6300 = vsyncpa %s6299, 1

</llo_original>
